<compile_context>
chip_gen: v7x
topology: tpu7x:2x2x1
jax: 0.10.0
libtpu: 0.0.40
codegen_flags: <defaults>
</compile_context>

<pallas_src>
import functools

import jax
import jax.numpy as jnp
from jax.experimental import pallas as pl
from jax.experimental.pallas import tpu as pltpu

_NEG_INF = float(-1e30)
_SQRT_2_OVER_PI = 0.7978845608028654


def _round_up(x, m):
    return (x + m - 1) // m * m


def _pick_tile(dim, candidates=(512, 384, 256, 128)):
    """Largest 128-aligned tile that divides `dim`, else the full dim."""
    for c in candidates:
        if dim % c == 0:
            return c
    return dim


def _gelu_tanh(x):
    # "gelu_pytorch_tanh" — tanh goes to the EUP slot inside the kernel.
    return 0.5 * x * (1.0 + jnp.tanh(_SQRT_2_OVER_PI * (x + 0.044715 * x * x * x)))


# ---------------------------------------------------------------------------
# Kernels
# ---------------------------------------------------------------------------
def _layernorm_kernel(x_ref, g_ref, b_ref, o_ref, *, eps):
    x = x_ref[...].astype(jnp.float32)                 # [tm, E]
    mu = jnp.mean(x, axis=-1, keepdims=True)
    xc = x - mu
    var = jnp.mean(xc * xc, axis=-1, keepdims=True)
    y = xc * jax.lax.rsqrt(var + eps)
    y = y * g_ref[...].astype(jnp.float32) + b_ref[...].astype(jnp.float32)
    o_ref[...] = y.astype(o_ref.dtype)


def _linear_bias_kernel(*refs, activation, has_residual):
    """o = [residual +] activation(x @ w + b), K-tiled with f32 accumulator."""
    if has_residual:
        x_ref, w_ref, b_ref, res_ref, o_ref, acc_ref = refs
    else:
        x_ref, w_ref, b_ref, o_ref, acc_ref = refs
        res_ref = None

    @pl.when(pl.program_id(2) == 0)
    def _init():
        acc_ref[...] = jnp.zeros(acc_ref.shape, acc_ref.dtype)

    acc_ref[...] += jnp.dot(x_ref[...], w_ref[...],
                            preferred_element_type=jnp.float32)

    @pl.when(pl.program_id(2) == pl.num_programs(2) - 1)
    def _finalize():
        r = acc_ref[...] + b_ref[...].astype(jnp.float32)
        if activation is not None:
            r = activation(r)
        if has_residual:
            r = r + res_ref[...].astype(jnp.float32)
        o_ref[...] = r.astype(o_ref.dtype)


def _flash_attn_kernel(q_ref, k_ref, v_ref, o_ref, m_sc, l_sc, acc_sc, *,
                       scale, kv_len, block_kv, need_mask):
    """Online-softmax attention for one (batch, head, q-tile); kv axis is grid dim 3."""
    ki = pl.program_id(3)

    @pl.when(ki == 0)
    def _init():
        m_sc[...] = jnp.full(m_sc.shape, _NEG_INF, m_sc.dtype)
        l_sc[...] = jnp.zeros(l_sc.shape, l_sc.dtype)
        acc_sc[...] = jnp.zeros(acc_sc.shape, acc_sc.dtype)

    # Fold the softmax scale into q (tq x Dp is much smaller than tq x tkv).
    q = q_ref[...] * scale
    # q @ k^T without materialising a transpose; MXU with f32 accumulation.
    s = jax.lax.dot_general(q, k_ref[...],
                            dimension_numbers=(((1,), (1,)), ((), ())),
                            preferred_element_type=jnp.float32)   # [tq, tkv]

    if need_mask:  # mask padded key rows (sequence padded up to the tile size)
        col = jax.lax.broadcasted_iota(jnp.int32, s.shape, 1) + ki * block_kv
        s = jnp.where(col < kv_len, s, _NEG_INF)

    m_prev = m_sc[...]
    m_new = jnp.maximum(m_prev, jnp.max(s, axis=-1, keepdims=True))
    alpha = jnp.exp(m_prev - m_new)
    p = jnp.exp(s - m_new)
    l_sc[...] = alpha * l_sc[...] + jnp.sum(p, axis=-1, keepdims=True)
    acc_sc[...] = alpha * acc_sc[...] + jnp.dot(
        p.astype(v_ref.dtype), v_ref[...], preferred_element_type=jnp.float32)
    m_sc[...] = m_new

    @pl.when(ki == pl.num_programs(3) - 1)
    def _finalize():
        inv_l = pl.reciprocal(l_sc[...], approx=True)   # EUP, essentially free
        o_ref[...] = (acc_sc[...] * inv_l).astype(o_ref.dtype)


# ---------------------------------------------------------------------------
# pallas_call wrappers
# ---------------------------------------------------------------------------
def pallas_layernorm(x, gamma, beta, *, eps, block_rows):
    M, E = x.shape
    return pl.pallas_call(
        functools.partial(_layernorm_kernel, eps=eps),
        out_shape=jax.ShapeDtypeStruct((M, E), x.dtype),
        grid=(M // block_rows,),
        in_specs=[
            pl.BlockSpec((block_rows, E), lambda i: (i, 0)),
            pl.BlockSpec((1, E), lambda i: (0, 0)),
            pl.BlockSpec((1, E), lambda i: (0, 0)),
        ],
        out_specs=pl.BlockSpec((block_rows, E), lambda i: (i, 0)),
        compiler_params=pltpu.CompilerParams(dimension_semantics=("parallel",)),
    )(x, gamma.reshape(1, E), beta.reshape(1, E))


def pallas_linear(x, w, b, *, block_m, residual=None, activation=None):
    """x: [M, K], w: [K, N], b: [N]  ->  [residual +] act(x @ w + b)."""
    M, K = x.shape
    Kw, N = w.shape
    assert K == Kw
    tm = block_m
    tn = _pick_tile(N)
    tk = _pick_tile(K)
    grid = (M // tm, N // tn, K // tk)

    in_specs = [
        pl.BlockSpec((tm, tk), lambda i, j, k: (i, k)),
        pl.BlockSpec((tk, tn), lambda i, j, k: (k, j)),
        pl.BlockSpec((1, tn), lambda i, j, k: (0, j)),
    ]
    args = [x, w, b.reshape(1, N)]
    if residual is not None:
        in_specs.append(pl.BlockSpec((tm, tn), lambda i, j, k: (i, j)))
        args.append(residual)

    kern = functools.partial(_linear_bias_kernel, activation=activation,
                             has_residual=residual is not None)
    return pl.pallas_call(
        kern,
        out_shape=jax.ShapeDtypeStruct((M, N), x.dtype),
        grid=grid,
        in_specs=in_specs,
        out_specs=pl.BlockSpec((tm, tn), lambda i, j, k: (i, j)),
        scratch_shapes=[pltpu.VMEM((tm, tn), jnp.float32)],
        compiler_params=pltpu.CompilerParams(
            dimension_semantics=("parallel", "parallel", "arbitrary")),
    )(*args)


def pallas_flash_attention(qkv, *, B, H, Sp, Dp, ts, scale, kv_len, out_dtype):
    """qkv: [B*Sp, 3*H*Dp] head-padded layout -> [B*Sp, H*Dp] merged heads.

    Head selection (q/k/v and head index) is done entirely by BlockSpec index
    maps on the qkv buffer — no splits/transposes in HBM.
    """
    nq = Sp // ts
    nkv = Sp // ts
    need_mask = kv_len != Sp
    kern = functools.partial(_flash_attn_kernel, scale=scale, kv_len=kv_len,
                             block_kv=ts, need_mask=need_mask)
    return pl.pallas_call(
        kern,
        out_shape=jax.ShapeDtypeStruct((B * Sp, H * Dp), out_dtype),
        grid=(B, H, nq, nkv),
        in_specs=[
            pl.BlockSpec((ts, Dp), lambda b, h, qi, ki: (b * nq + qi, h)),          # q
            pl.BlockSpec((ts, Dp), lambda b, h, qi, ki: (b * nkv + ki, H + h)),     # k
            pl.BlockSpec((ts, Dp), lambda b, h, qi, ki: (b * nkv + ki, 2 * H + h)),  # v
        ],
        out_specs=pl.BlockSpec((ts, Dp), lambda b, h, qi, ki: (b * nq + qi, h)),
        scratch_shapes=[
            pltpu.VMEM((ts, 1), jnp.float32),    # running max m
            pltpu.VMEM((ts, 1), jnp.float32),    # running sum l
            pltpu.VMEM((ts, Dp), jnp.float32),   # output accumulator
        ],
        compiler_params=pltpu.CompilerParams(
            dimension_semantics=("parallel", "parallel", "parallel", "arbitrary")),
    )(qkv, qkv, qkv)


# ---------------------------------------------------------------------------
# Weight prep (head-padded qkv / out_proj layouts) — load-time in a real model.
# ---------------------------------------------------------------------------
def _prepare_layer_params(p, E, H, D, Dp):
    wq, wk, wv = jnp.split(p["w_qkv"], 3, axis=1)
    bq, bk, bv = jnp.split(p["b_qkv"], 3)

    def pad_w(w):   # [E, H*D] -> [E, H*Dp], zero-padded per head
        return jnp.pad(w.reshape(E, H, D), ((0, 0), (0, 0), (0, Dp - D))).reshape(E, H * Dp)

    def pad_b(b):   # [H*D] -> [H*Dp]
        return jnp.pad(b.reshape(H, D), ((0, 0), (0, Dp - D))).reshape(H * Dp)

    out = dict(p)
    out["w_qkv_p"] = jnp.concatenate([pad_w(wq), pad_w(wk), pad_w(wv)], axis=1)
    out["b_qkv_p"] = jnp.concatenate([pad_b(bq), pad_b(bk), pad_b(bv)])
    out["w_out_p"] = jnp.pad(p["w_out"].reshape(H, D, E),
                             ((0, 0), (0, Dp - D), (0, 0))).reshape(H * Dp, E)
    return out


# ---------------------------------------------------------------------------
# Full encoder forward
# ---------------------------------------------------------------------------
@functools.partial(jax.jit, static_argnames=("num_heads", "eps", "block_s"))
def idefics2_encoder_forward(inputs_embeds, layer_params, num_heads, eps,
                             block_s=256):
    B, S, E = inputs_embeds.shape
    H = num_heads
    D = E // H
    assert D * H == E
    Dp = _round_up(D, 128)                       # lane-dense head dim
    ts = min(_round_up(block_s, 8), _round_up(S, 8))   # q/kv tile & row tile
    Sp = _round_up(S, ts)
    scale = float(D) ** -0.5

    # TODO(synk): attention_dropout and tensor-parallel sharding of the
    # QKV/Row/ColumnParallelLinear layers are not modelled (inference, 1 device).

    x = inputs_embeds
    if Sp != S:
        x = jnp.pad(x, ((0, 0), (0, Sp - S), (0, 0)))
    h = x.reshape(B * Sp, E)

    for p in layer_params:
        pp = _prepare_layer_params(p, E, H, D, Dp)

        # --- attention block ---
        y = pallas_layernorm(h, pp["ln1_g"], pp["ln1_b"], eps=eps, block_rows=ts)
        qkv = pallas_linear(y, pp["w_qkv_p"], pp["b_qkv_p"], block_m=ts)
        attn = pallas_flash_attention(qkv, B=B, H=H, Sp=Sp, Dp=Dp, ts=ts,
                                      scale=scale, kv_len=S, out_dtype=h.dtype)
        h = pallas_linear(attn, pp["w_out_p"], pp["b_out"], block_m=ts, residual=h)

        # --- MLP block ---
        y = pallas_layernorm(h, pp["ln2_g"], pp["ln2_b"], eps=eps, block_rows=ts)
        y = pallas_linear(y, pp["w_fc1"], pp["b_fc1"], block_m=ts,
                          activation=_gelu_tanh)
        h = pallas_linear(y, pp["w_fc2"], pp["b_fc2"], block_m=ts, residual=h)

    out = h.reshape(B, Sp, E)
    if Sp != S:
        out = out[:, :S, :]
    return out


# ---------------------------------------------------------------------------
# Plain-JAX reference for correctness check
# ---------------------------------------------------------------------------
def reference_encoder(x, layer_params, num_heads, eps):
    B, S, E = x.shape
    H = num_heads
    D = E // H
    scale = D ** -0.5

    def layer_norm(h, g, b):
        mu = jnp.mean(h, axis=-1, keepdims=True)
        var = jnp.mean(jnp.square(h - mu), axis=-1, keepdims=True)
        return (h - mu) * jax.lax.rsqrt(var + eps) * g + b

    h = x
    for p in layer_params:
        res = h
        y = layer_norm(h, p["ln1_g"], p["ln1_b"])
        qkv = y @ p["w_qkv"] + p["b_qkv"]
        q, k, v = jnp.split(qkv, 3, axis=-1)
        q = q.reshape(B, S, H, D).transpose(0, 2, 1, 3)
        k = k.reshape(B, S, H, D).transpose(0, 2, 1, 3)
        v = v.reshape(B, S, H, D).transpose(0, 2, 1, 3)
        s = jnp.einsum("bhqd,bhkd->bhqk", q, k) * scale
        a = jax.nn.softmax(s, axis=-1)
        o = jnp.einsum("bhqk,bhkd->bhqd", a, v)
        o = o.transpose(0, 2, 1, 3).reshape(B, S, E)
        h = res + (o @ p["w_out"] + p["b_out"])

        res = h
        y = layer_norm(h, p["ln2_g"], p["ln2_b"])
        y = _gelu_tanh(y @ p["w_fc1"] + p["b_fc1"])
        h = res + (y @ p["w_fc2"] + p["b_fc2"])
    return h


# ---------------------------------------------------------------------------
# Main
# ---------------------------------------------------------------------------
if __name__ == "__main__":
    # Small synthetic config consistent with Idefics2VisionConfig semantics.
    B, S = 2, 12                 # S=12 with block_s=8 exercises kv tiling + masking
    embed_dim = 32               # config.hidden_size
    num_heads = 4                # config.num_attention_heads  (head_dim = 8)
    intermediate = 128           # config.intermediate_size
    num_layers = 2               # config.num_hidden_layers
    eps = 1e-6                   # config.layer_norm_eps

    key = jax.random.PRNGKey(0)
    keys = jax.random.split(key, 1 + num_layers)
    x = jax.random.normal(keys[0], (B, S, embed_dim), dtype=jnp.float32)

    layer_params = []
    for li in range(num_layers):
        ks = jax.random.split(keys[1 + li], 12)
        layer_params.append({
            "ln1_g": 1.0 + 0.02 * jax.random.normal(ks[0], (embed_dim,), jnp.float32),
            "ln1_b": 0.02 * jax.random.normal(ks[1], (embed_dim,), jnp.float32),
            "w_qkv": 0.05 * jax.random.normal(ks[2], (embed_dim, 3 * embed_dim), jnp.float32),
            "b_qkv": 0.02 * jax.random.normal(ks[3], (3 * embed_dim,), jnp.float32),
            "w_out": 0.05 * jax.random.normal(ks[4], (embed_dim, embed_dim), jnp.float32),
            "b_out": 0.02 * jax.random.normal(ks[5], (embed_dim,), jnp.float32),
            "ln2_g": 1.0 + 0.02 * jax.random.normal(ks[6], (embed_dim,), jnp.float32),
            "ln2_b": 0.02 * jax.random.normal(ks[7], (embed_dim,), jnp.float32),
            "w_fc1": 0.05 * jax.random.normal(ks[8], (embed_dim, intermediate), jnp.float32),
            "b_fc1": 0.02 * jax.random.normal(ks[9], (intermediate,), jnp.float32),
            "w_fc2": 0.05 * jax.random.normal(ks[10], (intermediate, embed_dim), jnp.float32),
            "b_fc2": 0.02 * jax.random.normal(ks[11], (embed_dim,), jnp.float32),
        })

    out = idefics2_encoder_forward(x, layer_params, num_heads=num_heads,
                                   eps=eps, block_s=8)
    out = jax.block_until_ready(out)

    ref = reference_encoder(x, layer_params, num_heads, eps)
    assert out.shape == (B, S, embed_dim)
    max_err = float(jnp.max(jnp.abs(out - ref)))
    assert jnp.allclose(out, ref, atol=5e-3, rtol=5e-3), f"mismatch: {max_err}"

    print("KERNEL_OK")
</pallas_src>

<mosaic_0001>
module attributes {stable_mosaic.version = 11 : i64} {
  func.func @_linear_bias_kernel(%arg0: i32, %arg1: i32, %arg2: i32, %arg3: memref<8x32xf32, #tpu.memory_space<vmem>>, %arg4: memref<32x512xf32, #tpu.memory_space<vmem>>, %arg5: memref<1x512xf32, #tpu.memory_space<vmem>>, %arg6: memref<8x512xf32, #tpu.memory_space<vmem>>, %arg7: memref<8x512xf32, #tpu.memory_space<vmem>>) attributes {dimension_semantics = [#tpu.dimension_semantics<parallel>, #tpu.dimension_semantics<parallel>, #tpu.dimension_semantics<arbitrary>], iteration_bounds = array<i64: 4, 3, 1>, scalar_prefetch = 0 : i64, scratch_operands = 1 : i64, tpu.core_type = #tpu.core_type<tc>, window_params = [{transform_indices = @transform_0, window_bounds = array<i64: 8, 32>}, {transform_indices = @transform_1, window_bounds = array<i64: 32, 512>}, {transform_indices = @transform_2, window_bounds = array<i64: 1, 512>}, {transform_indices = @transform_3, window_bounds = array<i64: 8, 512>}]} {
    %c0_i32 = arith.constant 0 : i32
    %0 = arith.cmpi eq, %arg2, %c0_i32 : i32
    %1 = arith.extui %0 : i1 to i32
    %c0_i32_0 = arith.constant 0 : i32
    %2 = arith.cmpi ne, %1, %c0_i32_0 : i32
    scf.if %2 {
      %cst_10 = arith.constant 0.000000e+00 : f32
      %12 = vector.broadcast %cst_10 : f32 to vector<8x512xf32>
      %c0_11 = arith.constant 0 : index
      %c0_12 = arith.constant 0 : index
      %13 = vector.load %arg7[%c0_11, %c0_12] : memref<8x512xf32, #tpu.memory_space<vmem>>, vector<8x512xf32>
      tpu.vector_store %arg7[%c0_11, %c0_12], %12 {strides = array<i32>} : memref<8x512xf32, #tpu.memory_space<vmem>>, vector<8x512xf32>,
    } else {
    }
    %c0 = arith.constant 0 : index
    %c0_1 = arith.constant 0 : index
    %3 = vector.load %arg7[%c0, %c0_1] : memref<8x512xf32, #tpu.memory_space<vmem>>, vector<8x512xf32>
    %c0_2 = arith.constant 0 : index
    %c0_3 = arith.constant 0 : index
    %4 = vector.load %arg3[%c0_2, %c0_3] : memref<8x32xf32, #tpu.memory_space<vmem>>, vector<8x32xf32>
    %c0_4 = arith.constant 0 : index
    %c0_5 = arith.constant 0 : index
    %5 = vector.load %arg4[%c0_4, %c0_5] : memref<32x512xf32, #tpu.memory_space<vmem>>, vector<32x512xf32>
    %cst = arith.constant dense<0.000000e+00> : vector<8x512xf32>
    %6 = tpu.matmul %4, %5, %cst {dimension_numbers = #tpu.dot_dimension_numbers<[1], [0], [0], [1], [0, 0, 1, 1], [], []>} : vector<8x32xf32>, vector<32x512xf32>, vector<8x512xf32> -> vector<8x512xf32>
    %7 = arith.addf %3, %6 : vector<8x512xf32>
    %c0_6 = arith.constant 0 : index
    %c0_7 = arith.constant 0 : index
    %8 = vector.load %arg7[%c0_6, %c0_7] : memref<8x512xf32, #tpu.memory_space<vmem>>, vector<8x512xf32>
    tpu.vector_store %arg7[%c0_6, %c0_7], %7 {strides = array<i32>} : memref<8x512xf32, #tpu.memory_space<vmem>>, vector<8x512xf32>,
    %c0_i32_8 = arith.constant 0 : i32
    %9 = arith.cmpi eq, %arg2, %c0_i32_8 : i32
    %10 = arith.extui %9 : i1 to i32
    %c0_i32_9 = arith.constant 0 : i32
    %11 = arith.cmpi ne, %10, %c0_i32_9 : i32
    scf.if %11 {
      %c0_10 = arith.constant 0 : index
      %c0_11 = arith.constant 0 : index
      %12 = vector.load %arg7[%c0_10, %c0_11] : memref<8x512xf32, #tpu.memory_space<vmem>>, vector<8x512xf32>
      %c0_12 = arith.constant 0 : index
      %c0_13 = arith.constant 0 : index
      %13 = vector.load %arg5[%c0_12, %c0_13] : memref<1x512xf32, #tpu.memory_space<vmem>>, vector<1x512xf32>
      %14 = vector.broadcast %13 : vector<1x512xf32> to vector<8x512xf32>
      %15 = arith.addf %12, %14 : vector<8x512xf32>
      %c0_14 = arith.constant 0 : index
      %c0_15 = arith.constant 0 : index
      %16 = vector.load %arg6[%c0_14, %c0_15] : memref<8x512xf32, #tpu.memory_space<vmem>>, vector<8x512xf32>
      tpu.vector_store %arg6[%c0_14, %c0_15], %15 {strides = array<i32>} : memref<8x512xf32, #tpu.memory_space<vmem>>, vector<8x512xf32>,
    } else {
    }
    return
  }
  func.func @transform_0(%arg0: i32, %arg1: i32, %arg2: i32) -> (i32, i32) {
    %c0_i32 = arith.constant 0 : i32
    return %arg0, %arg2 : i32, i32
  }
  func.func @transform_1(%arg0: i32, %arg1: i32, %arg2: i32) -> (i32, i32) {
    %c0_i32 = arith.constant 0 : i32
    return %arg2, %arg1 : i32, i32
  }
  func.func @transform_2(%arg0: i32, %arg1: i32, %arg2: i32) -> (i32, i32) {
    %c0_i32 = arith.constant 0 : i32
    %c0_i32_0 = arith.constant 0 : i32
    return %c0_i32, %arg1 : i32, i32
  }
  func.func @transform_3(%arg0: i32, %arg1: i32, %arg2: i32) -> (i32, i32) {
    %c0_i32 = arith.constant 0 : i32
    return %arg0, %arg1 : i32, i32
  }
}

module attributes {stable_mosaic.version = 11 : i64} {
  func.func @_linear_bias_kernel(%arg0: i32, %arg1: i32, %arg2: i32, %arg3: memref<8x512xf32, #tpu.memory_space<vmem>>, %arg4: memref<512x32xf32, #tpu.memory_space<vmem>>, %arg5: memref<1x32xf32, #tpu.memory_space<vmem>>, %arg6: memref<8x32xf32, #tpu.memory_space<vmem>>, %arg7: memref<8x32xf32, #tpu.memory_space<vmem>>, %arg8: memref<8x32xf32, #tpu.memory_space<vmem>>) attributes {dimension_semantics = [#tpu.dimension_semantics<parallel>, #tpu.dimension_semantics<parallel>, #tpu.dimension_semantics<arbitrary>], iteration_bounds = array<i64: 4, 1, 1>, scalar_prefetch = 0 : i64, scratch_operands = 1 : i64, tpu.core_type = #tpu.core_type<tc>, window_params = [{transform_indices = @transform_0, window_bounds = array<i64: 8, 512>}, {transform_indices = @transform_1, window_bounds = array<i64: 512, 32>}, {transform_indices = @transform_2, window_bounds = array<i64: 1, 32>}, {transform_indices = @transform_3, window_bounds = array<i64: 8, 32>}, {transform_indices = @transform_4, window_bounds = array<i64: 8, 32>}]} {
    %c0_i32 = arith.constant 0 : i32
    %0 = arith.cmpi eq, %arg2, %c0_i32 : i32
    %1 = arith.extui %0 : i1 to i32
    %c0_i32_0 = arith.constant 0 : i32
    %2 = arith.cmpi ne, %1, %c0_i32_0 : i32
    scf.if %2 {
      %cst_10 = arith.constant 0.000000e+00 : f32
      %12 = vector.broadcast %cst_10 : f32 to vector<8x32xf32>
      %c0_11 = arith.constant 0 : index
      %c0_12 = arith.constant 0 : index
      %13 = vector.load %arg8[%c0_11, %c0_12] : memref<8x32xf32, #tpu.memory_space<vmem>>, vector<8x32xf32>
      tpu.vector_store %arg8[%c0_11, %c0_12], %12 {strides = array<i32>} : memref<8x32xf32, #tpu.memory_space<vmem>>, vector<8x32xf32>,
    } else {
    }
    %c0 = arith.constant 0 : index
    %c0_1 = arith.constant 0 : index
    %3 = vector.load %arg8[%c0, %c0_1] : memref<8x32xf32, #tpu.memory_space<vmem>>, vector<8x32xf32>
    %c0_2 = arith.constant 0 : index
    %c0_3 = arith.constant 0 : index
    %4 = vector.load %arg3[%c0_2, %c0_3] : memref<8x512xf32, #tpu.memory_space<vmem>>, vector<8x512xf32>
    %c0_4 = arith.constant 0 : index
    %c0_5 = arith.constant 0 : index
    %5 = vector.load %arg4[%c0_4, %c0_5] : memref<512x32xf32, #tpu.memory_space<vmem>>, vector<512x32xf32>
    %cst = arith.constant dense<0.000000e+00> : vector<8x32xf32>
    %6 = tpu.matmul %4, %5, %cst {dimension_numbers = #tpu.dot_dimension_numbers<[1], [0], [0], [1], [0, 0, 1, 1], [], []>} : vector<8x512xf32>, vector<512x32xf32>, vector<8x32xf32> -> vector<8x32xf32>
    %7 = arith.addf %3, %6 : vector<8x32xf32>
    %c0_6 = arith.constant 0 : index
    %c0_7 = arith.constant 0 : index
    %8 = vector.load %arg8[%c0_6, %c0_7] : memref<8x32xf32, #tpu.memory_space<vmem>>, vector<8x32xf32>
    tpu.vector_store %arg8[%c0_6, %c0_7], %7 {strides = array<i32>} : memref<8x32xf32, #tpu.memory_space<vmem>>, vector<8x32xf32>,
    %c0_i32_8 = arith.constant 0 : i32
    %9 = arith.cmpi eq, %arg2, %c0_i32_8 : i32
    %10 = arith.extui %9 : i1 to i32
    %c0_i32_9 = arith.constant 0 : i32
    %11 = arith.cmpi ne, %10, %c0_i32_9 : i32
    scf.if %11 {
      %c0_10 = arith.constant 0 : index
      %c0_11 = arith.constant 0 : index
      %12 = vector.load %arg8[%c0_10, %c0_11] : memref<8x32xf32, #tpu.memory_space<vmem>>, vector<8x32xf32>
      %c0_12 = arith.constant 0 : index
      %c0_13 = arith.constant 0 : index
      %13 = vector.load %arg5[%c0_12, %c0_13] : memref<1x32xf32, #tpu.memory_space<vmem>>, vector<1x32xf32>
      %14 = vector.broadcast %13 : vector<1x32xf32> to vector<8x32xf32>
      %15 = arith.addf %12, %14 : vector<8x32xf32>
      %c0_14 = arith.constant 0 : index
      %c0_15 = arith.constant 0 : index
      %16 = vector.load %arg6[%c0_14, %c0_15] : memref<8x32xf32, #tpu.memory_space<vmem>>, vector<8x32xf32>
      %17 = arith.addf %15, %16 : vector<8x32xf32>
      %c0_16 = arith.constant 0 : index
      %c0_17 = arith.constant 0 : index
      %18 = vector.load %arg7[%c0_16, %c0_17] : memref<8x32xf32, #tpu.memory_space<vmem>>, vector<8x32xf32>
      tpu.vector_store %arg7[%c0_16, %c0_17], %17 {strides = array<i32>} : memref<8x32xf32, #tpu.memory_space<vmem>>, vector<8x32xf32>,
    } else {
    }
    return
  }
  func.func @transform_0(%arg0: i32, %arg1: i32, %arg2: i32) -> (i32, i32) {
    %c0_i32 = arith.constant 0 : i32
    return %arg0, %arg2 : i32, i32
  }
  func.func @transform_1(%arg0: i32, %arg1: i32, %arg2: i32) -> (i32, i32) {
    %c0_i32 = arith.constant 0 : i32
    return %arg2, %arg1 : i32, i32
  }
  func.func @transform_2(%arg0: i32, %arg1: i32, %arg2: i32) -> (i32, i32) {
    %c0_i32 = arith.constant 0 : i32
    %c0_i32_0 = arith.constant 0 : i32
    return %c0_i32, %arg1 : i32, i32
  }
  func.func @transform_3(%arg0: i32, %arg1: i32, %arg2: i32) -> (i32, i32) {
    %c0_i32 = arith.constant 0 : i32
    return %arg0, %arg1 : i32, i32
  }
  func.func @transform_4(%arg0: i32, %arg1: i32, %arg2: i32) -> (i32, i32) {
    %c0_i32 = arith.constant 0 : i32
    return %arg0, %arg1 : i32, i32
  }
}

module attributes {stable_mosaic.version = 11 : i64} {
  func.func @_layernorm_kernel(%arg0: i32, %arg1: memref<8x32xf32, #tpu.memory_space<vmem>>, %arg2: memref<1x32xf32, #tpu.memory_space<vmem>>, %arg3: memref<1x32xf32, #tpu.memory_space<vmem>>, %arg4: memref<8x32xf32, #tpu.memory_space<vmem>>) attributes {dimension_semantics = [#tpu.dimension_semantics<parallel>], iteration_bounds = array<i64: 4>, scalar_prefetch = 0 : i64, scratch_operands = 0 : i64, tpu.core_type = #tpu.core_type<tc>, window_params = [{transform_indices = @transform_0, window_bounds = array<i64: 8, 32>}, {pipeline_mode = #tpu.pipeline_mode<synchronous>, transform_indices = @transform_1, window_bounds = array<i64: 1, 32>}, {pipeline_mode = #tpu.pipeline_mode<synchronous>, transform_indices = @transform_2, window_bounds = array<i64: 1, 32>}, {transform_indices = @transform_3, window_bounds = array<i64: 8, 32>}]} {
    %c0 = arith.constant 0 : index
    %c0_0 = arith.constant 0 : index
    %0 = vector.load %arg1[%c0, %c0_0] : memref<8x32xf32, #tpu.memory_space<vmem>>, vector<8x32xf32>
    %cst = arith.constant dense<0.000000e+00> : vector<8xf32>
    %1 = vector.multi_reduction <add>, %0, %cst [1] : vector<8x32xf32> to vector<8xf32>
    %2 = vector.shape_cast %1 : vector<8xf32> to vector<8x1xf32>
    %cst_1 = arith.constant 3.200000e+01 : f32
    %3 = vector.broadcast %cst_1 : f32 to vector<8x1xf32>
    %4 = arith.divf %2, %3 : vector<8x1xf32>
    %5 = vector.broadcast %4 : vector<8x1xf32> to vector<8x32xf32>
    %6 = arith.subf %0, %5 : vector<8x32xf32>
    %7 = arith.mulf %6, %6 : vector<8x32xf32>
    %cst_2 = arith.constant dense<0.000000e+00> : vector<8xf32>
    %8 = vector.multi_reduction <add>, %7, %cst_2 [1] : vector<8x32xf32> to vector<8xf32>
    %9 = vector.shape_cast %8 : vector<8xf32> to vector<8x1xf32>
    %cst_3 = arith.constant 3.200000e+01 : f32
    %10 = vector.broadcast %cst_3 : f32 to vector<8x1xf32>
    %11 = arith.divf %9, %10 : vector<8x1xf32>
    %cst_4 = arith.constant 9.99999997E-7 : f32
    %12 = vector.broadcast %cst_4 : f32 to vector<8x1xf32>
    %13 = arith.addf %11, %12 : vector<8x1xf32>
    %14 = math.rsqrt %13 : vector<8x1xf32>
    %15 = vector.broadcast %14 : vector<8x1xf32> to vector<8x32xf32>
    %16 = arith.mulf %6, %15 : vector<8x32xf32>
    %c0_5 = arith.constant 0 : index
    %c0_6 = arith.constant 0 : index
    %17 = vector.load %arg2[%c0_5, %c0_6] : memref<1x32xf32, #tpu.memory_space<vmem>>, vector<1x32xf32>
    %18 = vector.broadcast %17 : vector<1x32xf32> to vector<8x32xf32>
    %19 = arith.mulf %16, %18 : vector<8x32xf32>
    %c0_7 = arith.constant 0 : index
    %c0_8 = arith.constant 0 : index
    %20 = vector.load %arg3[%c0_7, %c0_8] : memref<1x32xf32, #tpu.memory_space<vmem>>, vector<1x32xf32>
    %21 = vector.broadcast %20 : vector<1x32xf32> to vector<8x32xf32>
    %22 = arith.addf %19, %21 : vector<8x32xf32>
    %c0_9 = arith.constant 0 : index
    %c0_10 = arith.constant 0 : index
    %23 = vector.load %arg4[%c0_9, %c0_10] : memref<8x32xf32, #tpu.memory_space<vmem>>, vector<8x32xf32>
    tpu.vector_store %arg4[%c0_9, %c0_10], %22 {strides = array<i32>} : memref<8x32xf32, #tpu.memory_space<vmem>>, vector<8x32xf32>,
    return
  }
  func.func @transform_0(%arg0: i32) -> (i32, i32) {
    %c0_i32 = arith.constant 0 : i32
    %c0_i32_0 = arith.constant 0 : i32
    return %arg0, %c0_i32 : i32, i32
  }
  func.func @transform_1(%arg0: i32) -> (i32, i32) {
    %c0_i32 = arith.constant 0 : i32
    %c0_i32_0 = arith.constant 0 : i32
    %c0_i32_1 = arith.constant 0 : i32
    return %c0_i32, %c0_i32_0 : i32, i32
  }
  func.func @transform_2(%arg0: i32) -> (i32, i32) {
    %c0_i32 = arith.constant 0 : i32
    %c0_i32_0 = arith.constant 0 : i32
    %c0_i32_1 = arith.constant 0 : i32
    return %c0_i32, %c0_i32_0 : i32, i32
  }
  func.func @transform_3(%arg0: i32) -> (i32, i32) {
    %c0_i32 = arith.constant 0 : i32
    %c0_i32_0 = arith.constant 0 : i32
    return %arg0, %c0_i32 : i32, i32
  }
}

module attributes {stable_mosaic.version = 11 : i64} {
  func.func @_flash_attn_kernel(%arg0: i32, %arg1: i32, %arg2: i32, %arg3: i32, %arg4: memref<8x128xf32, #tpu.memory_space<vmem>>, %arg5: memref<8x128xf32, #tpu.memory_space<vmem>>, %arg6: memref<8x128xf32, #tpu.memory_space<vmem>>, %arg7: memref<8x128xf32, #tpu.memory_space<vmem>>, %arg8: memref<8x1xf32, #tpu.memory_space<vmem>>, %arg9: memref<8x1xf32, #tpu.memory_space<vmem>>, %arg10: memref<8x128xf32, #tpu.memory_space<vmem>>) attributes {dimension_semantics = [#tpu.dimension_semantics<parallel>, #tpu.dimension_semantics<parallel>, #tpu.dimension_semantics<parallel>, #tpu.dimension_semantics<arbitrary>], iteration_bounds = array<i64: 2, 4, 2, 2>, scalar_prefetch = 0 : i64, scratch_operands = 3 : i64, tpu.core_type = #tpu.core_type<tc>, window_params = [{transform_indices = @transform_0, window_bounds = array<i64: 8, 128>}, {transform_indices = @transform_1, window_bounds = array<i64: 8, 128>}, {transform_indices = @transform_2, window_bounds = array<i64: 8, 128>}, {transform_indices = @transform_3, window_bounds = array<i64: 8, 128>}]} {
    %c0_i32 = arith.constant 0 : i32
    %0 = arith.cmpi eq, %arg3, %c0_i32 : i32
    %1 = arith.extui %0 : i1 to i32
    %c0_i32_0 = arith.constant 0 : i32
    %2 = arith.cmpi ne, %1, %c0_i32_0 : i32
    scf.if %2 {
      %cst_24 = arith.constant -1.000000e+30 : f32
      %42 = vector.broadcast %cst_24 : f32 to vector<8x1xf32>
      %c0_25 = arith.constant 0 : index
      %c0_26 = arith.constant 0 : index
      %43 = vector.load %arg8[%c0_25, %c0_26] : memref<8x1xf32, #tpu.memory_space<vmem>>, vector<8x1xf32>
      tpu.vector_store %arg8[%c0_25, %c0_26], %42 {strides = array<i32>} : memref<8x1xf32, #tpu.memory_space<vmem>>, vector<8x1xf32>,
      %cst_27 = arith.constant 0.000000e+00 : f32
      %44 = vector.broadcast %cst_27 : f32 to vector<8x1xf32>
      %c0_28 = arith.constant 0 : index
      %c0_29 = arith.constant 0 : index
      %45 = vector.load %arg9[%c0_28, %c0_29] : memref<8x1xf32, #tpu.memory_space<vmem>>, vector<8x1xf32>
      tpu.vector_store %arg9[%c0_28, %c0_29], %44 {strides = array<i32>} : memref<8x1xf32, #tpu.memory_space<vmem>>, vector<8x1xf32>,
      %cst_30 = arith.constant 0.000000e+00 : f32
      %46 = vector.broadcast %cst_30 : f32 to vector<8x128xf32>
      %c0_31 = arith.constant 0 : index
      %c0_32 = arith.constant 0 : index
      %47 = vector.load %arg10[%c0_31, %c0_32] : memref<8x128xf32, #tpu.memory_space<vmem>>, vector<8x128xf32>
      tpu.vector_store %arg10[%c0_31, %c0_32], %46 {strides = array<i32>} : memref<8x128xf32, #tpu.memory_space<vmem>>, vector<8x128xf32>,
    } else {
    }
    %c0 = arith.constant 0 : index
    %c0_1 = arith.constant 0 : index
    %3 = vector.load %arg4[%c0, %c0_1] : memref<8x128xf32, #tpu.memory_space<vmem>>, vector<8x128xf32>
    %cst = arith.constant 0.353553385 : f32
    %4 = vector.broadcast %cst : f32 to vector<8x128xf32>
    %5 = arith.mulf %3, %4 : vector<8x128xf32>
    %c0_2 = arith.constant 0 : index
    %c0_3 = arith.constant 0 : index
    %6 = vector.load %arg5[%c0_2, %c0_3] : memref<8x128xf32, #tpu.memory_space<vmem>>, vector<8x128xf32>
    %cst_4 = arith.constant dense<0.000000e+00> : vector<8x8xf32>
    %7 = tpu.matmul %5, %6, %cst_4 {dimension_numbers = #tpu.dot_dimension_numbers<[1], [1], [0], [0], [0, 0, 1, 0], [], []>} : vector<8x128xf32>, vector<8x128xf32>, vector<8x8xf32> -> vector<8x8xf32>
    %8 = tpu.iota {dimensions = array<i32: 1>} : vector<8x8xi32>
    %c8_i32 = arith.constant 8 : i32
    %9 = arith.muli %arg3, %c8_i32 : i32
    %10 = vector.broadcast %9 : i32 to vector<8x8xi32>
    %11 = arith.addi %8, %10 : vector<8x8xi32>
    %c12_i32 = arith.constant 12 : i32
    %12 = vector.broadcast %c12_i32 : i32 to vector<8x8xi32>
    %13 = arith.cmpi slt, %11, %12 : vector<8x8xi32>
    %cst_5 = arith.constant -1.000000e+30 : f32
    %14 = vector.broadcast %cst_5 : f32 to vector<8x8xf32>
    %15 = arith.select %13, %7, %14 : vector<8x8xi1>, vector<8x8xf32>
    %c0_6 = arith.constant 0 : index
    %c0_7 = arith.constant 0 : index
    %16 = vector.load %arg8[%c0_6, %c0_7] : memref<8x1xf32, #tpu.memory_space<vmem>>, vector<8x1xf32>
    %cst_8 = arith.constant dense<0xFF800000> : vector<8xf32>
    %17 = vector.multi_reduction <maximumf>, %15, %cst_8 [1] : vector<8x8xf32> to vector<8xf32>
    %18 = vector.shape_cast %17 : vector<8xf32> to vector<8x1xf32>
    %19 = arith.maximumf %16, %18 : vector<8x1xf32>
    %20 = arith.subf %16, %19 : vector<8x1xf32>
    %21 = math.exp %20 : vector<8x1xf32>
    %22 = vector.broadcast %19 : vector<8x1xf32> to vector<8x8xf32>
    %23 = arith.subf %15, %22 : vector<8x8xf32>
    %24 = math.exp %23 : vector<8x8xf32>
    %c0_9 = arith.constant 0 : index
    %c0_10 = arith.constant 0 : index
    %25 = vector.load %arg9[%c0_9, %c0_10] : memref<8x1xf32, #tpu.memory_space<vmem>>, vector<8x1xf32>
    %26 = arith.mulf %21, %25 : vector<8x1xf32>
    %cst_11 = arith.constant dense<0.000000e+00> : vector<8xf32>
    %27 = vector.multi_reduction <add>, %24, %cst_11 [1] : vector<8x8xf32> to vector<8xf32>
    %28 = vector.shape_cast %27 : vector<8xf32> to vector<8x1xf32>
    %29 = arith.addf %26, %28 : vector<8x1xf32>
    %c0_12 = arith.constant 0 : index
    %c0_13 = arith.constant 0 : index
    %30 = vector.load %arg9[%c0_12, %c0_13] : memref<8x1xf32, #tpu.memory_space<vmem>>, vector<8x1xf32>
    tpu.vector_store %arg9[%c0_12, %c0_13], %29 {strides = array<i32>} : memref<8x1xf32, #tpu.memory_space<vmem>>, vector<8x1xf32>,
    %c0_14 = arith.constant 0 : index
    %c0_15 = arith.constant 0 : index
    %31 = vector.load %arg10[%c0_14, %c0_15] : memref<8x128xf32, #tpu.memory_space<vmem>>, vector<8x128xf32>
    %32 = vector.broadcast %21 : vector<8x1xf32> to vector<8x128xf32>
    %33 = arith.mulf %32, %31 : vector<8x128xf32>
    %c0_16 = arith.constant 0 : index
    %c0_17 = arith.constant 0 : index
    %34 = vector.load %arg6[%c0_16, %c0_17] : memref<8x128xf32, #tpu.memory_space<vmem>>, vector<8x128xf32>
    %cst_18 = arith.constant dense<0.000000e+00> : vector<8x128xf32>
    %35 = tpu.matmul %24, %34, %cst_18 {dimension_numbers = #tpu.dot_dimension_numbers<[1], [0], [0], [1], [0, 0, 1, 1], [], []>} : vector<8x8xf32>, vector<8x128xf32>, vector<8x128xf32> -> vector<8x128xf32>
    %36 = arith.addf %33, %35 : vector<8x128xf32>
    %c0_19 = arith.constant 0 : index
    %c0_20 = arith.constant 0 : index
    %37 = vector.load %arg10[%c0_19, %c0_20] : memref<8x128xf32, #tpu.memory_space<vmem>>, vector<8x128xf32>
    tpu.vector_store %arg10[%c0_19, %c0_20], %36 {strides = array<i32>} : memref<8x128xf32, #tpu.memory_space<vmem>>, vector<8x128xf32>,
    %c0_21 = arith.constant 0 : index
    %c0_22 = arith.constant 0 : index
    %38 = vector.load %arg8[%c0_21, %c0_22] : memref<8x1xf32, #tpu.memory_space<vmem>>, vector<8x1xf32>
    tpu.vector_store %arg8[%c0_21, %c0_22], %19 {strides = array<i32>} : memref<8x1xf32, #tpu.memory_space<vmem>>, vector<8x1xf32>,
    %c1_i32 = arith.constant 1 : i32
    %39 = arith.cmpi eq, %arg3, %c1_i32 : i32
    %40 = arith.extui %39 : i1 to i32
    %c0_i32_23 = arith.constant 0 : i32
    %41 = arith.cmpi ne, %40, %c0_i32_23 : i32
    scf.if %41 {
      %c0_24 = arith.constant 0 : index
      %c0_25 = arith.constant 0 : index
      %42 = vector.load %arg9[%c0_24, %c0_25] : memref<8x1xf32, #tpu.memory_space<vmem>>, vector<8x1xf32>
      %43 = tpu.reciprocal %42 {approx = true} : vector<8x1xf32> -> vector<8x1xf32>
      %c0_26 = arith.constant 0 : index
      %c0_27 = arith.constant 0 : index
      %44 = vector.load %arg10[%c0_26, %c0_27] : memref<8x128xf32, #tpu.memory_space<vmem>>, vector<8x128xf32>
      %45 = vector.broadcast %43 : vector<8x1xf32> to vector<8x128xf32>
      %46 = arith.mulf %44, %45 : vector<8x128xf32>
      %c0_28 = arith.constant 0 : index
      %c0_29 = arith.constant 0 : index
      %47 = vector.load %arg7[%c0_28, %c0_29] : memref<8x128xf32, #tpu.memory_space<vmem>>, vector<8x128xf32>
      tpu.vector_store %arg7[%c0_28, %c0_29], %46 {strides = array<i32>} : memref<8x128xf32, #tpu.memory_space<vmem>>, vector<8x128xf32>,
    } else {
    }
    return
  }
  func.func @transform_0(%arg0: i32, %arg1: i32, %arg2: i32, %arg3: i32) -> (i32, i32) {
    %c2_i32 = arith.constant 2 : i32
    %0 = arith.muli %arg0, %c2_i32 : i32
    %1 = arith.addi %0, %arg2 : i32
    %c0_i32 = arith.constant 0 : i32
    return %1, %arg1 : i32, i32
  }
  func.func @transform_1(%arg0: i32, %arg1: i32, %arg2: i32, %arg3: i32) -> (i32, i32) {
    %c2_i32 = arith.constant 2 : i32
    %0 = arith.muli %arg0, %c2_i32 : i32
    %1 = arith.addi %0, %arg3 : i32
    %c4_i32 = arith.constant 4 : i32
    %2 = arith.addi %c4_i32, %arg1 : i32
    %c0_i32 = arith.constant 0 : i32
    return %1, %2 : i32, i32
  }
  func.func @transform_2(%arg0: i32, %arg1: i32, %arg2: i32, %arg3: i32) -> (i32, i32) {
    %c2_i32 = arith.constant 2 : i32
    %0 = arith.muli %arg0, %c2_i32 : i32
    %1 = arith.addi %0, %arg3 : i32
    %c8_i32 = arith.constant 8 : i32
    %2 = arith.addi %c8_i32, %arg1 : i32
    %c0_i32 = arith.constant 0 : i32
    return %1, %2 : i32, i32
  }
  func.func @transform_3(%arg0: i32, %arg1: i32, %arg2: i32, %arg3: i32) -> (i32, i32) {
    %c2_i32 = arith.constant 2 : i32
    %0 = arith.muli %arg0, %c2_i32 : i32
    %1 = arith.addi %0, %arg2 : i32
    %c0_i32 = arith.constant 0 : i32
    return %1, %arg1 : i32, i32
  }
}

module attributes {stable_mosaic.version = 11 : i64} {
  func.func @_linear_bias_kernel(%arg0: i32, %arg1: i32, %arg2: i32, %arg3: memref<8x32xf32, #tpu.memory_space<vmem>>, %arg4: memref<32x128xf32, #tpu.memory_space<vmem>>, %arg5: memref<1x128xf32, #tpu.memory_space<vmem>>, %arg6: memref<8x128xf32, #tpu.memory_space<vmem>>, %arg7: memref<8x128xf32, #tpu.memory_space<vmem>>) attributes {dimension_semantics = [#tpu.dimension_semantics<parallel>, #tpu.dimension_semantics<parallel>, #tpu.dimension_semantics<arbitrary>], iteration_bounds = array<i64: 4, 1, 1>, scalar_prefetch = 0 : i64, scratch_operands = 1 : i64, tpu.core_type = #tpu.core_type<tc>, window_params = [{transform_indices = @transform_0, window_bounds = array<i64: 8, 32>}, {transform_indices = @transform_1, window_bounds = array<i64: 32, 128>}, {transform_indices = @transform_2, window_bounds = array<i64: 1, 128>}, {transform_indices = @transform_3, window_bounds = array<i64: 8, 128>}]} {
    %c0_i32 = arith.constant 0 : i32
    %0 = arith.cmpi eq, %arg2, %c0_i32 : i32
    %1 = arith.extui %0 : i1 to i32
    %c0_i32_0 = arith.constant 0 : i32
    %2 = arith.cmpi ne, %1, %c0_i32_0 : i32
    scf.if %2 {
      %cst_10 = arith.constant 0.000000e+00 : f32
      %12 = vector.broadcast %cst_10 : f32 to vector<8x128xf32>
      %c0_11 = arith.constant 0 : index
      %c0_12 = arith.constant 0 : index
      %13 = vector.load %arg7[%c0_11, %c0_12] : memref<8x128xf32, #tpu.memory_space<vmem>>, vector<8x128xf32>
      tpu.vector_store %arg7[%c0_11, %c0_12], %12 {strides = array<i32>} : memref<8x128xf32, #tpu.memory_space<vmem>>, vector<8x128xf32>,
    } else {
    }
    %c0 = arith.constant 0 : index
    %c0_1 = arith.constant 0 : index
    %3 = vector.load %arg7[%c0, %c0_1] : memref<8x128xf32, #tpu.memory_space<vmem>>, vector<8x128xf32>
    %c0_2 = arith.constant 0 : index
    %c0_3 = arith.constant 0 : index
    %4 = vector.load %arg3[%c0_2, %c0_3] : memref<8x32xf32, #tpu.memory_space<vmem>>, vector<8x32xf32>
    %c0_4 = arith.constant 0 : index
    %c0_5 = arith.constant 0 : index
    %5 = vector.load %arg4[%c0_4, %c0_5] : memref<32x128xf32, #tpu.memory_space<vmem>>, vector<32x128xf32>
    %cst = arith.constant dense<0.000000e+00> : vector<8x128xf32>
    %6 = tpu.matmul %4, %5, %cst {dimension_numbers = #tpu.dot_dimension_numbers<[1], [0], [0], [1], [0, 0, 1, 1], [], []>} : vector<8x32xf32>, vector<32x128xf32>, vector<8x128xf32> -> vector<8x128xf32>
    %7 = arith.addf %3, %6 : vector<8x128xf32>
    %c0_6 = arith.constant 0 : index
    %c0_7 = arith.constant 0 : index
    %8 = vector.load %arg7[%c0_6, %c0_7] : memref<8x128xf32, #tpu.memory_space<vmem>>, vector<8x128xf32>
    tpu.vector_store %arg7[%c0_6, %c0_7], %7 {strides = array<i32>} : memref<8x128xf32, #tpu.memory_space<vmem>>, vector<8x128xf32>,
    %c0_i32_8 = arith.constant 0 : i32
    %9 = arith.cmpi eq, %arg2, %c0_i32_8 : i32
    %10 = arith.extui %9 : i1 to i32
    %c0_i32_9 = arith.constant 0 : i32
    %11 = arith.cmpi ne, %10, %c0_i32_9 : i32
    scf.if %11 {
      %c0_10 = arith.constant 0 : index
      %c0_11 = arith.constant 0 : index
      %12 = vector.load %arg7[%c0_10, %c0_11] : memref<8x128xf32, #tpu.memory_space<vmem>>, vector<8x128xf32>
      %c0_12 = arith.constant 0 : index
      %c0_13 = arith.constant 0 : index
      %13 = vector.load %arg5[%c0_12, %c0_13] : memref<1x128xf32, #tpu.memory_space<vmem>>, vector<1x128xf32>
      %14 = vector.broadcast %13 : vector<1x128xf32> to vector<8x128xf32>
      %15 = arith.addf %12, %14 : vector<8x128xf32>
      %cst_14 = arith.constant 5.000000e-01 : f32
      %16 = vector.broadcast %cst_14 : f32 to vector<8x128xf32>
      %17 = arith.mulf %16, %15 : vector<8x128xf32>
      %cst_15 = arith.constant 4.471500e-02 : f32
      %18 = vector.broadcast %cst_15 : f32 to vector<8x128xf32>
      %19 = arith.mulf %18, %15 : vector<8x128xf32>
      %20 = arith.mulf %19, %15 : vector<8x128xf32>
      %21 = arith.mulf %20, %15 : vector<8x128xf32>
      %22 = arith.addf %15, %21 : vector<8x128xf32>
      %cst_16 = arith.constant 0.797884583 : f32
      %23 = vector.broadcast %cst_16 : f32 to vector<8x128xf32>
      %24 = arith.mulf %23, %22 : vector<8x128xf32>
      %25 = math.tanh %24 : vector<8x128xf32>
      %cst_17 = arith.constant 1.000000e+00 : f32
      %26 = vector.broadcast %cst_17 : f32 to vector<8x128xf32>
      %27 = arith.addf %26, %25 : vector<8x128xf32>
      %28 = arith.mulf %17, %27 : vector<8x128xf32>
      %c0_18 = arith.constant 0 : index
      %c0_19 = arith.constant 0 : index
      %29 = vector.load %arg6[%c0_18, %c0_19] : memref<8x128xf32, #tpu.memory_space<vmem>>, vector<8x128xf32>
      tpu.vector_store %arg6[%c0_18, %c0_19], %28 {strides = array<i32>} : memref<8x128xf32, #tpu.memory_space<vmem>>, vector<8x128xf32>,
    } else {
    }
    return
  }
  func.func @transform_0(%arg0: i32, %arg1: i32, %arg2: i32) -> (i32, i32) {
    %c0_i32 = arith.constant 0 : i32
    return %arg0, %arg2 : i32, i32
  }
  func.func @transform_1(%arg0: i32, %arg1: i32, %arg2: i32) -> (i32, i32) {
    %c0_i32 = arith.constant 0 : i32
    return %arg2, %arg1 : i32, i32
  }
  func.func @transform_2(%arg0: i32, %arg1: i32, %arg2: i32) -> (i32, i32) {
    %c0_i32 = arith.constant 0 : i32
    %c0_i32_0 = arith.constant 0 : i32
    return %c0_i32, %arg1 : i32, i32
  }
  func.func @transform_3(%arg0: i32, %arg1: i32, %arg2: i32) -> (i32, i32) {
    %c0_i32 = arith.constant 0 : i32
    return %arg0, %arg1 : i32, i32
  }
}

module attributes {stable_mosaic.version = 11 : i64} {
  func.func @_linear_bias_kernel(%arg0: i32, %arg1: i32, %arg2: i32, %arg3: memref<8x128xf32, #tpu.memory_space<vmem>>, %arg4: memref<128x32xf32, #tpu.memory_space<vmem>>, %arg5: memref<1x32xf32, #tpu.memory_space<vmem>>, %arg6: memref<8x32xf32, #tpu.memory_space<vmem>>, %arg7: memref<8x32xf32, #tpu.memory_space<vmem>>, %arg8: memref<8x32xf32, #tpu.memory_space<vmem>>) attributes {dimension_semantics = [#tpu.dimension_semantics<parallel>, #tpu.dimension_semantics<parallel>, #tpu.dimension_semantics<arbitrary>], iteration_bounds = array<i64: 4, 1, 1>, scalar_prefetch = 0 : i64, scratch_operands = 1 : i64, tpu.core_type = #tpu.core_type<tc>, window_params = [{transform_indices = @transform_0, window_bounds = array<i64: 8, 128>}, {transform_indices = @transform_1, window_bounds = array<i64: 128, 32>}, {transform_indices = @transform_2, window_bounds = array<i64: 1, 32>}, {transform_indices = @transform_3, window_bounds = array<i64: 8, 32>}, {transform_indices = @transform_4, window_bounds = array<i64: 8, 32>}]} {
    %c0_i32 = arith.constant 0 : i32
    %0 = arith.cmpi eq, %arg2, %c0_i32 : i32
    %1 = arith.extui %0 : i1 to i32
    %c0_i32_0 = arith.constant 0 : i32
    %2 = arith.cmpi ne, %1, %c0_i32_0 : i32
    scf.if %2 {
      %cst_10 = arith.constant 0.000000e+00 : f32
      %12 = vector.broadcast %cst_10 : f32 to vector<8x32xf32>
      %c0_11 = arith.constant 0 : index
      %c0_12 = arith.constant 0 : index
      %13 = vector.load %arg8[%c0_11, %c0_12] : memref<8x32xf32, #tpu.memory_space<vmem>>, vector<8x32xf32>
      tpu.vector_store %arg8[%c0_11, %c0_12], %12 {strides = array<i32>} : memref<8x32xf32, #tpu.memory_space<vmem>>, vector<8x32xf32>,
    } else {
    }
    %c0 = arith.constant 0 : index
    %c0_1 = arith.constant 0 : index
    %3 = vector.load %arg8[%c0, %c0_1] : memref<8x32xf32, #tpu.memory_space<vmem>>, vector<8x32xf32>
    %c0_2 = arith.constant 0 : index
    %c0_3 = arith.constant 0 : index
    %4 = vector.load %arg3[%c0_2, %c0_3] : memref<8x128xf32, #tpu.memory_space<vmem>>, vector<8x128xf32>
    %c0_4 = arith.constant 0 : index
    %c0_5 = arith.constant 0 : index
    %5 = vector.load %arg4[%c0_4, %c0_5] : memref<128x32xf32, #tpu.memory_space<vmem>>, vector<128x32xf32>
    %cst = arith.constant dense<0.000000e+00> : vector<8x32xf32>
    %6 = tpu.matmul %4, %5, %cst {dimension_numbers = #tpu.dot_dimension_numbers<[1], [0], [0], [1], [0, 0, 1, 1], [], []>} : vector<8x128xf32>, vector<128x32xf32>, vector<8x32xf32> -> vector<8x32xf32>
    %7 = arith.addf %3, %6 : vector<8x32xf32>
    %c0_6 = arith.constant 0 : index
    %c0_7 = arith.constant 0 : index
    %8 = vector.load %arg8[%c0_6, %c0_7] : memref<8x32xf32, #tpu.memory_space<vmem>>, vector<8x32xf32>
    tpu.vector_store %arg8[%c0_6, %c0_7], %7 {strides = array<i32>} : memref<8x32xf32, #tpu.memory_space<vmem>>, vector<8x32xf32>,
    %c0_i32_8 = arith.constant 0 : i32
    %9 = arith.cmpi eq, %arg2, %c0_i32_8 : i32
    %10 = arith.extui %9 : i1 to i32
    %c0_i32_9 = arith.constant 0 : i32
    %11 = arith.cmpi ne, %10, %c0_i32_9 : i32
    scf.if %11 {
      %c0_10 = arith.constant 0 : index
      %c0_11 = arith.constant 0 : index
      %12 = vector.load %arg8[%c0_10, %c0_11] : memref<8x32xf32, #tpu.memory_space<vmem>>, vector<8x32xf32>
      %c0_12 = arith.constant 0 : index
      %c0_13 = arith.constant 0 : index
      %13 = vector.load %arg5[%c0_12, %c0_13] : memref<1x32xf32, #tpu.memory_space<vmem>>, vector<1x32xf32>
      %14 = vector.broadcast %13 : vector<1x32xf32> to vector<8x32xf32>
      %15 = arith.addf %12, %14 : vector<8x32xf32>
      %c0_14 = arith.constant 0 : index
      %c0_15 = arith.constant 0 : index
      %16 = vector.load %arg6[%c0_14, %c0_15] : memref<8x32xf32, #tpu.memory_space<vmem>>, vector<8x32xf32>
      %17 = arith.addf %15, %16 : vector<8x32xf32>
      %c0_16 = arith.constant 0 : index
      %c0_17 = arith.constant 0 : index
      %18 = vector.load %arg7[%c0_16, %c0_17] : memref<8x32xf32, #tpu.memory_space<vmem>>, vector<8x32xf32>
      tpu.vector_store %arg7[%c0_16, %c0_17], %17 {strides = array<i32>} : memref<8x32xf32, #tpu.memory_space<vmem>>, vector<8x32xf32>,
    } else {
    }
    return
  }
  func.func @transform_0(%arg0: i32, %arg1: i32, %arg2: i32) -> (i32, i32) {
    %c0_i32 = arith.constant 0 : i32
    return %arg0, %arg2 : i32, i32
  }
  func.func @transform_1(%arg0: i32, %arg1: i32, %arg2: i32) -> (i32, i32) {
    %c0_i32 = arith.constant 0 : i32
    return %arg2, %arg1 : i32, i32
  }
  func.func @transform_2(%arg0: i32, %arg1: i32, %arg2: i32) -> (i32, i32) {
    %c0_i32 = arith.constant 0 : i32
    %c0_i32_0 = arith.constant 0 : i32
    return %c0_i32, %arg1 : i32, i32
  }
  func.func @transform_3(%arg0: i32, %arg1: i32, %arg2: i32) -> (i32, i32) {
    %c0_i32 = arith.constant 0 : i32
    return %arg0, %arg1 : i32, i32
  }
  func.func @transform_4(%arg0: i32, %arg1: i32, %arg2: i32) -> (i32, i32) {
    %c0_i32 = arith.constant 0 : i32
    return %arg0, %arg1 : i32, i32
  }
}

</mosaic_0001>

<llo_original>
// kernel: idefics2_encoder_forward.14
$region0: #{idefics2_encoder_forward.14}
  #allocation0 [shape = 'u32[]', space=smem, size = 0x4, offset = 0x4, fixed_abs, tag = 'smem constant byte address 0x4 - core index']
  #allocation1 [shape = 'u32[144,128]{1,0:T(1,128)}', space=vmem, size = 0x12000, scoped, tag = 'internal scratch']
  %s0 = inlined_call_operand.vmem [shape: f32[32,32], index: 0, kind: input, shape index: {}]
  %s1 = inlined_call_operand.vmem [shape: f32[1,32], index: 1, kind: input, shape index: {}]
  %s2 = inlined_call_operand.vmem [shape: f32[1,32], index: 2, kind: input, shape index: {}]
  %s3 = inlined_call_operand.vmem [shape: f32[32,32], index: 3, kind: output, shape index: {}]
  %s4 = sld [smem:[#allocation0]]
  $region45: #{idefics2_encoder_forward.14} parent=0
    _
  %s6 = ssub.s32 1, %s4
  %s7 = scalar_select 0, %s6, %s4
  loop: start=0, step=1, limit=6
  $region2: #{idefics2_encoder_forward.14} parent=0 // loop_pre_header
    _
  $region3: #{idefics2_encoder_forward.14} parent=0 // loop_header
    %s9 = sphi 0, %s13
    %p10 = scmp.ge.s32.totalorder %s9, 6
    %s19 = sphi 0, %s21
    %s22 = sphi 0, %s19
    %s23 = sphi 0, %s22
    %s39 = sphi 0, %s23
    %s43 = sphi 0, %s43
    %s45 = sphi 0, %s43
    %s46 = sphi 0, %s45
    %s60 = sphi 0, %s46
    %s64 = sphi 0, %s64
    %s66 = sphi 0, %s64
    %s67 = sphi 0, %s66
    %s81 = sphi 0, %s67
    %s87 = sphi 0, %s89
    %s90 = sphi 0, %s87
    %s91 = sphi 0, %s90
    %s107 = sphi 0, %s91
  $region4: #{idefics2_encoder_forward.14} parent=0 // loop_header_branch
    %12 = sbr.rel (%p10) target = $region8
  $region5: #{idefics2_encoder_forward.14} parent=0 // loop_body
    %s14 = ssub.s32 %s9, 1
    %s15 = ssub.s32 %s9, 2
    %s16 = sadd.s32 %s9, 1
    %s17 = ssub.s32 %s9, %s16
    %p18 = scmp.eq.s32.totalorder %s17, 0
    %s20 = sadd.s32 %s19, 1
    %s21 = scalar_select %p18, %s19, %s20
    %p24 = pneg %p18
    %p25 = scmp.eq.s32.totalorder %s9, 3
    %p26 = por %p24, %p25
    %p27 = scmp.ne.s32.totalorder %s19, %s22
    %p28 = scmp.eq.s32.totalorder %s9, 0
    %p29 = por %p27, %p28
    %p30 = scmp.ne.s32.totalorder %s19, %s22
    %p31 = scmp.eq.s32.totalorder %s14, 3
    %p32 = por %p30, %p31
    %p33 = scmp.ne.s32.totalorder %s22, %s23
    %p34 = scmp.eq.s32.totalorder %s14, 0
    %p35 = por %p33, %p34
    %p36 = scmp.ne.s32.totalorder %s22, %s23
    %p37 = scmp.eq.s32.totalorder %s15, 3
    %p38 = por %p36, %p37
    %p40 = scmp.ne.s32.totalorder %s23, %s39
    %p41 = scmp.eq.s32.totalorder %s15, 0
    %p42 = por %p40, %p41
    %s44 = sadd.s32 %s43, 1
    %p47 = scmp.eq.s32.totalorder %s9, 3
    %p48 = scmp.ne.s32.totalorder %s43, %s45
    %p49 = scmp.eq.s32.totalorder %s9, 0
    %p50 = por %p48, %p49
    %p51 = scmp.ne.s32.totalorder %s43, %s45
    %p52 = scmp.eq.s32.totalorder %s14, 3
    %p53 = por %p51, %p52
    %p54 = scmp.ne.s32.totalorder %s45, %s46
    %p55 = scmp.eq.s32.totalorder %s14, 0
    %p56 = por %p54, %p55
    %p57 = scmp.ne.s32.totalorder %s45, %s46
    %p58 = scmp.eq.s32.totalorder %s15, 3
    %p59 = por %p57, %p58
    %p61 = scmp.ne.s32.totalorder %s46, %s60
    %p62 = scmp.eq.s32.totalorder %s15, 0
    %p63 = por %p61, %p62
    %s65 = sadd.s32 %s64, 1
    %p68 = scmp.eq.s32.totalorder %s9, 3
    %p69 = scmp.ne.s32.totalorder %s64, %s66
    %p70 = scmp.eq.s32.totalorder %s9, 0
    %p71 = por %p69, %p70
    %p72 = scmp.ne.s32.totalorder %s64, %s66
    %p73 = scmp.eq.s32.totalorder %s14, 3
    %p74 = por %p72, %p73
    %p75 = scmp.ne.s32.totalorder %s66, %s67
    %p76 = scmp.eq.s32.totalorder %s14, 0
    %p77 = por %p75, %p76
    %p78 = scmp.ne.s32.totalorder %s66, %s67
    %p79 = scmp.eq.s32.totalorder %s15, 3
    %p80 = por %p78, %p79
    %p82 = scmp.ne.s32.totalorder %s67, %s81
    %p83 = scmp.eq.s32.totalorder %s15, 0
    %p84 = por %p82, %p83
    %s85 = ssub.s32 %s9, %s16
    %p86 = scmp.eq.s32.totalorder %s85, 0
    %s88 = sadd.s32 %s87, 1
    %s89 = scalar_select %p86, %s87, %s88
    %p92 = pneg %p86
    %p93 = scmp.eq.s32.totalorder %s9, 3
    %p94 = por %p92, %p93
    %p95 = scmp.ne.s32.totalorder %s87, %s90
    %p96 = scmp.eq.s32.totalorder %s9, 0
    %p97 = por %p95, %p96
    %p98 = scmp.ne.s32.totalorder %s87, %s90
    %p99 = scmp.eq.s32.totalorder %s14, 3
    %p100 = por %p98, %p99
    %p101 = scmp.ne.s32.totalorder %s90, %s91
    %p102 = scmp.eq.s32.totalorder %s14, 0
    %p103 = por %p101, %p102
    %p104 = scmp.ne.s32.totalorder %s90, %s91
    %p105 = scmp.eq.s32.totalorder %s15, 3
    %p106 = por %p104, %p105
    %p108 = scmp.ne.s32.totalorder %s91, %s107
    %p109 = scmp.eq.s32.totalorder %s15, 0
    %p110 = por %p108, %p109
    %p111 = scmp.le.s32.totalorder 1, %s9
    %p112 = scmp.lt.s32.totalorder %s9, 5
    %p113 = pnand %p111, %p112
    %p114 = pneg %p113
    // Predicated region
    $region9: #{idefics2_encoder_forward.14} parent=5 // pred_check
      _
    $region10: #{idefics2_encoder_forward.14} parent=5 // pred_check_branch
      %116 = sbr.rel (%p113) target = $region12
    $region11: #{idefics2_encoder_forward.14} parent=5 // pred_region
      %s117 = ssub.s32 %s9, 1
      // Predicated region
      $region13: #{idefics2_encoder_forward.14} parent=11 // pred_check
        %p118 = pneg %p56
      $region14: #{idefics2_encoder_forward.14} parent=11 // pred_check_branch
        %120 = sbr.rel (%p118) target = $region16
      $region15: #{idefics2_encoder_forward.14} parent=11 // pred_region
        _
      $region16: #{idefics2_encoder_forward.14} parent=11 // pred_fallthru
        _
      // Predicated region
      $region17: #{idefics2_encoder_forward.14} parent=11 // pred_check
        %p121 = pneg %p77
      $region18: #{idefics2_encoder_forward.14} parent=11 // pred_check_branch
        %123 = sbr.rel (%p121) target = $region20
      $region19: #{idefics2_encoder_forward.14} parent=11 // pred_region
        _
      $region20: #{idefics2_encoder_forward.14} parent=11 // pred_fallthru
        _
    $region12: #{idefics2_encoder_forward.14} parent=5 // pred_fallthru
      _
    %p124 = scmp.lt.s32.totalorder %s9, 4
    // Predicated region
    $region21: #{idefics2_encoder_forward.14} parent=5 // pred_check
      %p125 = pneg %p124
    $region22: #{idefics2_encoder_forward.14} parent=5 // pred_check_branch
      %127 = sbr.rel (%p125) target = $region24
    $region23: #{idefics2_encoder_forward.14} parent=5 // pred_region
      // Predicated region
      $region25: #{idefics2_encoder_forward.14} parent=23 // pred_check
        %p128 = pneg %p29
      $region26: #{idefics2_encoder_forward.14} parent=23 // pred_check_branch
        %130 = sbr.rel (%p128) target = $region28
      $region27: #{idefics2_encoder_forward.14} parent=23 // pred_region
        %p131 = scmp.lt.s32.totalorder %s9, 3
        %s132 = scalar_select %p131, %s9, 3
        %s133 = smul.addr %s132, 8
        %s134 = scalar_lea.vmem %s0, %s133
      $region28: #{idefics2_encoder_forward.14} parent=23 // pred_fallthru
        _
    $region24: #{idefics2_encoder_forward.14} parent=5 // pred_fallthru
      _
    %p135 = scmp.le.s32.totalorder 1, %s9
    %p136 = scmp.lt.s32.totalorder %s9, 5
    %p137 = pnand %p135, %p136
    %p138 = pneg %p137
    // Predicated region
    $region29: #{idefics2_encoder_forward.14} parent=5 // pred_check
      _
    $region30: #{idefics2_encoder_forward.14} parent=5 // pred_check_branch
      %140 = sbr.rel (%p137) target = $region32
    $region31: #{idefics2_encoder_forward.14} parent=5 // pred_region
      %s141 = ssub.s32 %s9, 1
      %p142 = scmp.lt.s32.totalorder %s14, 3
      %s143 = scalar_select %p142, %s14, 3
      %s144 = smul.addr %s143, 8
      %s145 = scalar_lea.vmem %s0, %s144
      %p146 = pneg %p35
      %p147 = pneg %p32
      %p148 = pneg %p56
      %p149 = pneg %p53
      %p150 = pneg %p77
      %p151 = pneg %p74
      %p152 = pneg %p103
      %p153 = pneg %p100
      %p154 = scmp.lt.s32.totalorder %s14, 3
      %s155 = scalar_select %p154, %s14, 3
      %s156 = smul.addr %s155, 8
      %s157 = scalar_lea.vmem %s3, %s156
      %p158 = scmp.lt.s32.totalorder %s14, 3
      %s159 = scalar_select %p158, %s14, 3
      %s160 = smul.addr %s159, 8
      %s161 = scalar_lea.vmem %s0, %s160
      %p162 = scmp.lt.s32.totalorder %s14, 3
      %s163 = scalar_select %p162, %s14, 3
      %s164 = smul.addr %s163, 8
      %s165 = scalar_lea.vmem %s3, %s164
      %v166 = vld [vmem:[%s161] sm:$0xff]
      %vm167 = vcmask 261120
      %v168 = vsel %vm167, %v166, 0.0
      %169 = vadd.xlane.f32.xlu0 %v168
      %v170 = vpop.xlane.xlu0 %169
      %v171 = vrcp.pop 32.0
      %v172 = vmul.f32 %v170, %v171
      %v173 = vsub.f32 %v166, %v172
      %v174 = vmul.f32 %v173, %v173
      %v175 = vsel %vm167, %v174, 0.0
      %176 = vadd.xlane.f32.xlu0 %v175
      %v177 = vpop.xlane.xlu0 %176
      %v178 = vmul.f32 %v177, %v171
      %v179 = vadd.f32 %v178, 1e-06
      %v180 = vrsqrt.pop %v179
      %v181 = vmul.f32 %v173, %v180
      %v182 = vld [vmem:[%s1] sm:$0x1]
      %v184 = vlaneseq
      %v185 = vshrl.u32 %v184, 7
      %v186 = vsub.s32 0, %v185
      %v187 = vrot.slane %v182, %v186
      %v189 = vmul.f32 %v181, %v187
      %v190 = vld [vmem:[%s2] sm:$0x1]
      %v192 = vlaneseq
      %v193 = vshrl.u32 %v192, 7
      %v194 = vsub.s32 0, %v193
      %v195 = vrot.slane %v190, %v194
      %v197 = vadd.f32 %v189, %v195
      %198 = vst.msk [vmem:[%s165] sm:$0xff] %vm167, %v197
      %p199 = scmp.lt.s32.totalorder %s14, 3
      %s200 = scalar_select %p199, %s14, 3
      %s201 = smul.addr %s200, 8
      %s202 = scalar_lea.vmem %s3, %s201
      // Predicated region
      $region33: #{idefics2_encoder_forward.14} parent=31 // pred_check
        %p203 = pneg %p100
      $region34: #{idefics2_encoder_forward.14} parent=31 // pred_check_branch
        %205 = sbr.rel (%p203) target = $region36
      $region35: #{idefics2_encoder_forward.14} parent=31 // pred_region
        _
      $region36: #{idefics2_encoder_forward.14} parent=31 // pred_fallthru
        _
    $region32: #{idefics2_encoder_forward.14} parent=5 // pred_fallthru
      _
    %p206 = scmp.le.s32.totalorder 2, %s9
    // Predicated region
    $region37: #{idefics2_encoder_forward.14} parent=5 // pred_check
      %p207 = pneg %p206
    $region38: #{idefics2_encoder_forward.14} parent=5 // pred_check_branch
      %209 = sbr.rel (%p207) target = $region40
    $region39: #{idefics2_encoder_forward.14} parent=5 // pred_region
      %s210 = ssub.s32 %s9, 2
      // Predicated region
      $region41: #{idefics2_encoder_forward.14} parent=39 // pred_check
        %p211 = pneg %p106
      $region42: #{idefics2_encoder_forward.14} parent=39 // pred_check_branch
        %213 = sbr.rel (%p211) target = $region44
      $region43: #{idefics2_encoder_forward.14} parent=39 // pred_region
        %p214 = scmp.lt.s32.totalorder %s15, 3
        %s215 = scalar_select %p214, %s15, 3
        %s216 = smul.addr %s215, 8
        %s217 = scalar_lea.vmem %s3, %s216
      $region44: #{idefics2_encoder_forward.14} parent=39 // pred_fallthru
        _
    $region40: #{idefics2_encoder_forward.14} parent=5 // pred_fallthru
      _
  $region6: #{idefics2_encoder_forward.14} parent=0 // loop_footer
    %s13 = sadd.s32 1, %s9
  $region7: #{idefics2_encoder_forward.14} parent=0 // loop_footer_branch
    %8 = sbr.rel target = $region3
  $region8: #{idefics2_encoder_forward.14} parent=0 // loop_exit
    _

// kernel: idefics2_encoder_forward.15
$region0: #{idefics2_encoder_forward.15}
  #allocation0 [shape = 'u32[]', space=smem, size = 0x4, offset = 0x4, fixed_abs, tag = 'smem constant byte address 0x4 - core index']
  #allocation1 [shape = 'u32[144,128]{1,0:T(1,128)}', space=vmem, size = 0x12000, scoped, tag = 'internal scratch']
  #allocation2 [shape = 'f32[8,512]{1,0:T(8,128)}', space=vmem, size = 0x4000, scoped, tag = 'scratch operand']
  %s0 = inlined_call_operand.vmem [shape: f32[32,32], index: 0, kind: input, shape index: {}]
  %s1 = inlined_call_operand.vmem [shape: f32[32,1536], index: 1, kind: input, shape index: {}]
  %s2 = inlined_call_operand.vmem [shape: f32[1,1536], index: 2, kind: input, shape index: {}]
  %s3 = inlined_call_operand.vmem [shape: f32[32,1536], index: 3, kind: output, shape index: {}]
  %s4 = sld [smem:[#allocation0]]
  $region76: #{idefics2_encoder_forward.15} parent=0
    _
  %s6 = ssub.s32 1, %s4
  %s7 = scalar_select 0, %s6, %s4
  $region1: #{idefics2_encoder_forward.15} parent=0
    #allocation3 [shape = 'u8[131072]{0}', space=vmem, size = 0x20000, scoped, tag = 'input window, operand 1']
    loop: start=0, step=1, limit=14
    $region2: #{idefics2_encoder_forward.15} parent=1 // loop_pre_header
      _
    $region3: #{idefics2_encoder_forward.15} parent=1 // loop_header
      %s9 = sphi 0, %s13
      %p10 = scmp.ge.s32.totalorder %s9, 14
      %s16 = sphi 0, %s35
      %s17 = sphi 0, %s31
      %s18 = sphi 0, %s27
      %s19 = sphi 0, %s16
      %s20 = sphi 0, %s17
      %s21 = sphi 0, %s18
      %s22 = sphi 0, %s19
      %s23 = sphi 0, %s20
      %s24 = sphi 0, %s21
      %s40 = sphi 0, %s42
      %s43 = sphi 0, %s40
      %s44 = sphi 0, %s43
      %s60 = sphi 0, %s44
      %s68 = sphi 0, %s70
      %s71 = sphi 0, %s68
      %s72 = sphi 0, %s71
      %s88 = sphi 0, %s72
      %s94 = sphi 0, %s96
      %s97 = sphi 0, %s94
      %s98 = sphi 0, %s97
      %s114 = sphi 0, %s98
      %s122 = sphi 0, %s124
      %s125 = sphi 0, %s122
      %s126 = sphi 0, %s125
      %s142 = sphi 0, %s126
    $region4: #{idefics2_encoder_forward.15} parent=1 // loop_header_branch
      %12 = sbr.rel (%p10) target = $region8
    $region5: #{idefics2_encoder_forward.15} parent=1 // loop_body
      %s14 = ssub.s32 %s9, 1
      %s15 = ssub.s32 %s9, 2
      %s25 = sadd.s32 1, %s18
      %p26 = scmp.ge.s32.totalorder %s25, 1
      %s27 = scalar_select %p26, 0, %s25
      %s28 = sadd.s32 1, %s17
      %s29 = scalar_select %p26, %s28, %s17
      %p30 = scmp.ge.s32.totalorder %s29, 3
      %s31 = scalar_select %p30, 0, %s29
      %s32 = sadd.s32 1, %s16
      %s33 = scalar_select %p30, %s32, %s16
      %p34 = scmp.ge.s32.totalorder %s33, 4
      %s35 = scalar_select %p34, 0, %s33
      %s36 = ssub.s32 %s16, %s35
      %s37 = ssub.s32 %s18, %s27
      %s38 = sor.u32 %s36, %s37
      %p39 = scmp.eq.s32.totalorder %s38, 0
      %s41 = sadd.s32 %s40, 1
      %s42 = scalar_select %p39, %s40, %s41
      %p45 = pneg %p39
      %p46 = scmp.eq.s32.totalorder %s9, 11
      %p47 = por %p45, %p46
      %p48 = scmp.ne.s32.totalorder %s40, %s43
      %p49 = scmp.eq.s32.totalorder %s9, 0
      %p50 = por %p48, %p49
      %p51 = scmp.ne.s32.totalorder %s40, %s43
      %p52 = scmp.eq.s32.totalorder %s14, 11
      %p53 = por %p51, %p52
      %p54 = scmp.ne.s32.totalorder %s43, %s44
      %p55 = scmp.eq.s32.totalorder %s14, 0
      %p56 = por %p54, %p55
      %p57 = scmp.ne.s32.totalorder %s43, %s44
      %p58 = scmp.eq.s32.totalorder %s15, 11
      %p59 = por %p57, %p58
      %p61 = scmp.ne.s32.totalorder %s44, %s60
      %p62 = scmp.eq.s32.totalorder %s15, 0
      %p63 = por %p61, %p62
      %s64 = ssub.s32 %s18, %s27
      %s65 = ssub.s32 %s17, %s31
      %s66 = sor.u32 %s64, %s65
      %p67 = scmp.eq.s32.totalorder %s66, 0
      %s69 = sadd.s32 %s68, 1
      %s70 = scalar_select %p67, %s68, %s69
      %p73 = pneg %p67
      %p74 = scmp.eq.s32.totalorder %s9, 11
      %p75 = por %p73, %p74
      %p76 = scmp.ne.s32.totalorder %s68, %s71
      %p77 = scmp.eq.s32.totalorder %s9, 0
      %p78 = por %p76, %p77
      %p79 = scmp.ne.s32.totalorder %s68, %s71
      %p80 = scmp.eq.s32.totalorder %s14, 11
      %p81 = por %p79, %p80
      %p82 = scmp.ne.s32.totalorder %s71, %s72
      %p83 = scmp.eq.s32.totalorder %s14, 0
      %p84 = por %p82, %p83
      %p85 = scmp.ne.s32.totalorder %s71, %s72
      %p86 = scmp.eq.s32.totalorder %s15, 11
      %p87 = por %p85, %p86
      %p89 = scmp.ne.s32.totalorder %s72, %s88
      %p90 = scmp.eq.s32.totalorder %s15, 0
      %p91 = por %p89, %p90
      %s92 = ssub.s32 %s17, %s31
      %p93 = scmp.eq.s32.totalorder %s92, 0
      %s95 = sadd.s32 %s94, 1
      %s96 = scalar_select %p93, %s94, %s95
      %p99 = pneg %p93
      %p100 = scmp.eq.s32.totalorder %s9, 11
      %p101 = por %p99, %p100
      %p102 = scmp.ne.s32.totalorder %s94, %s97
      %p103 = scmp.eq.s32.totalorder %s9, 0
      %p104 = por %p102, %p103
      %p105 = scmp.ne.s32.totalorder %s94, %s97
      %p106 = scmp.eq.s32.totalorder %s14, 11
      %p107 = por %p105, %p106
      %p108 = scmp.ne.s32.totalorder %s97, %s98
      %p109 = scmp.eq.s32.totalorder %s14, 0
      %p110 = por %p108, %p109
      %p111 = scmp.ne.s32.totalorder %s97, %s98
      %p112 = scmp.eq.s32.totalorder %s15, 11
      %p113 = por %p111, %p112
      %p115 = scmp.ne.s32.totalorder %s98, %s114
      %p116 = scmp.eq.s32.totalorder %s15, 0
      %p117 = por %p115, %p116
      %s118 = ssub.s32 %s16, %s35
      %s119 = ssub.s32 %s17, %s31
      %s120 = sor.u32 %s118, %s119
      %p121 = scmp.eq.s32.totalorder %s120, 0
      %s123 = sadd.s32 %s122, 1
      %s124 = scalar_select %p121, %s122, %s123
      %p127 = pneg %p121
      %p128 = scmp.eq.s32.totalorder %s9, 11
      %p129 = por %p127, %p128
      %p130 = scmp.ne.s32.totalorder %s122, %s125
      %p131 = scmp.eq.s32.totalorder %s9, 0
      %p132 = por %p130, %p131
      %p133 = scmp.ne.s32.totalorder %s122, %s125
      %p134 = scmp.eq.s32.totalorder %s14, 11
      %p135 = por %p133, %p134
      %p136 = scmp.ne.s32.totalorder %s125, %s126
      %p137 = scmp.eq.s32.totalorder %s14, 0
      %p138 = por %p136, %p137
      %p139 = scmp.ne.s32.totalorder %s125, %s126
      %p140 = scmp.eq.s32.totalorder %s15, 11
      %p141 = por %p139, %p140
      %p143 = scmp.ne.s32.totalorder %s126, %s142
      %p144 = scmp.eq.s32.totalorder %s15, 0
      %p145 = por %p143, %p144
      %p146 = scmp.le.s32.totalorder 1, %s9
      %p147 = scmp.lt.s32.totalorder %s9, 13
      %p148 = pnand %p146, %p147
      %p149 = pneg %p148
      // Predicated region
      $region9: #{idefics2_encoder_forward.15} parent=5 // pred_check
        _
      $region10: #{idefics2_encoder_forward.15} parent=5 // pred_check_branch
        %151 = sbr.rel (%p148) target = $region12
      $region11: #{idefics2_encoder_forward.15} parent=5 // pred_region
        %s152 = ssub.s32 %s9, 1
      $region12: #{idefics2_encoder_forward.15} parent=5 // pred_fallthru
        _
      %p153 = scmp.lt.s32.totalorder %s9, 12
      // Predicated region
      $region13: #{idefics2_encoder_forward.15} parent=5 // pred_check
        %p154 = pneg %p153
      $region14: #{idefics2_encoder_forward.15} parent=5 // pred_check_branch
        %156 = sbr.rel (%p154) target = $region16
      $region15: #{idefics2_encoder_forward.15} parent=5 // pred_region
        // Predicated region
        $region17: #{idefics2_encoder_forward.15} parent=15 // pred_check
          %p157 = pneg %p50
        $region18: #{idefics2_encoder_forward.15} parent=15 // pred_check_branch
          %159 = sbr.rel (%p157) target = $region20
        $region19: #{idefics2_encoder_forward.15} parent=15 // pred_region
          %p160 = scmp.lt.s32.totalorder %s16, 3
          %s161 = scalar_select %p160, %s16, 3
          %p162 = scmp.lt.s32.totalorder %s18, 0
          %s163 = scalar_select %p162, %s18, 0
          %s164 = sadd.s32 %s163, %s161
          %s165 = smul.addr %s164, 8
          %s166 = scalar_lea.vmem %s0, %s165
        $region20: #{idefics2_encoder_forward.15} parent=15 // pred_fallthru
          _
        // Predicated region
        $region21: #{idefics2_encoder_forward.15} parent=15 // pred_check
          %p167 = pneg %p78
        $region22: #{idefics2_encoder_forward.15} parent=15 // pred_check_branch
          %169 = sbr.rel (%p167) target = $region24
        $region23: #{idefics2_encoder_forward.15} parent=15 // pred_region
          %s170 = sand.u32 %s68, 1
          %s171 = sand.u32 %s68, 1
          %s172 = smul.addr %s171, 128
          %s173 = scalar_lea.vmem [#allocation3], %s172
          %s174 = smul.u32 4, %s18
          %s175 = smul.u32 4, %s17
          %s176 = smul.addr %s174, 12
          %s177 = sadd.s32 %s175, %s176
          %s178 = smul.addr %s177, 8
          %s179 = scalar_lea.vmem %s1, %s178
          // Predicated region
          $region25: #{idefics2_encoder_forward.15} parent=23 // pred_check
            _
          $region26: #{idefics2_encoder_forward.15} parent=23 // pred_check_branch
            %181 = sbr.rel (0) target = $region28
          $region27: #{idefics2_encoder_forward.15} parent=23 // pred_region
            // Predicated region
            $region29: #{idefics2_encoder_forward.15} parent=27 // pred_check
              _
            $region30: #{idefics2_encoder_forward.15} parent=27 // pred_check_branch
              %183 = sbr.rel (0) target = $region32
            $region31: #{idefics2_encoder_forward.15} parent=27 // pred_region
              loop: start=0, step=1, limit=1
              $region33: #{idefics2_encoder_forward.15} parent=31 // loop_pre_header
                _
              $region34: #{idefics2_encoder_forward.15} parent=31 // loop_header
                %s185 = sphi 0, %s189
                %p186 = scmp.ge.s32.totalorder %s185, 1
                %s190 = sphi %s179, %s179
                %s191 = sphi %s173, %s173
              $region35: #{idefics2_encoder_forward.15} parent=31 // loop_header_branch
                %188 = sbr.rel (%p186) target = $region39
              $region36: #{idefics2_encoder_forward.15} parent=31 // loop_body
                %v192 = vld [vmem:[%s190] sm:$0xff]
                %193 = vst [vmem:[%s191] sm:$0xff] %v192
                %v194 = vld [vmem:[%s190 + $0x8] sm:$0xff]
                %195 = vst [vmem:[%s191 + $0x8] sm:$0xff] %v194
                %v196 = vld [vmem:[%s190 + $0x10] sm:$0xff]
                %197 = vst [vmem:[%s191 + $0x10] sm:$0xff] %v196
                %v198 = vld [vmem:[%s190 + $0x18] sm:$0xff]
                %199 = vst [vmem:[%s191 + $0x18] sm:$0xff] %v198
                %v200 = vld [vmem:[%s190 + $0x60] sm:$0xff]
                %201 = vst [vmem:[%s191 + $0x20] sm:$0xff] %v200
                %v202 = vld [vmem:[%s190 + $0x68] sm:$0xff]
                %203 = vst [vmem:[%s191 + $0x28] sm:$0xff] %v202
                %v204 = vld [vmem:[%s190 + $0x70] sm:$0xff]
                %205 = vst [vmem:[%s191 + $0x30] sm:$0xff] %v204
                %v206 = vld [vmem:[%s190 + $0x78] sm:$0xff]
                %207 = vst [vmem:[%s191 + $0x38] sm:$0xff] %v206
                %v208 = vld [vmem:[%s190 + $0xc0] sm:$0xff]
                %209 = vst [vmem:[%s191 + $0x40] sm:$0xff] %v208
                %v210 = vld [vmem:[%s190 + $0xc8] sm:$0xff]
                %211 = vst [vmem:[%s191 + $0x48] sm:$0xff] %v210
                %v212 = vld [vmem:[%s190 + $0xd0] sm:$0xff]
                %213 = vst [vmem:[%s191 + $0x50] sm:$0xff] %v212
                %v214 = vld [vmem:[%s190 + $0xd8] sm:$0xff]
                %215 = vst [vmem:[%s191 + $0x58] sm:$0xff] %v214
                %v216 = vld [vmem:[%s190 + $0x120] sm:$0xff]
                %217 = vst [vmem:[%s191 + $0x60] sm:$0xff] %v216
                %v218 = vld [vmem:[%s190 + $0x128] sm:$0xff]
                %219 = vst [vmem:[%s191 + $0x68] sm:$0xff] %v218
                %v220 = vld [vmem:[%s190 + $0x130] sm:$0xff]
                %221 = vst [vmem:[%s191 + $0x70] sm:$0xff] %v220
                %v222 = vld [vmem:[%s190 + $0x138] sm:$0xff]
                %223 = vst [vmem:[%s191 + $0x78] sm:$0xff] %v222
              $region37: #{idefics2_encoder_forward.15} parent=31 // loop_footer
                %s189 = sadd.s32 1, %s185
              $region38: #{idefics2_encoder_forward.15} parent=31 // loop_footer_branch
                %184 = sbr.rel target = $region34
              $region39: #{idefics2_encoder_forward.15} parent=31 // loop_exit
                _
            $region32: #{idefics2_encoder_forward.15} parent=27 // pred_fallthru
              _
            // Predicated region
            $region40: #{idefics2_encoder_forward.15} parent=27 // pred_check
              _
            $region41: #{idefics2_encoder_forward.15} parent=27 // pred_check_branch
              %225 = sbr.rel target = $region43
            $region42: #{idefics2_encoder_forward.15} parent=27 // pred_region
              _
            $region43: #{idefics2_encoder_forward.15} parent=27 // pred_fallthru
              _
          $region28: #{idefics2_encoder_forward.15} parent=23 // pred_fallthru
            _
          %226 = vnop
        $region24: #{idefics2_encoder_forward.15} parent=15 // pred_fallthru
          _
        // Predicated region
        $region44: #{idefics2_encoder_forward.15} parent=15 // pred_check
          %p227 = pneg %p104
        $region45: #{idefics2_encoder_forward.15} parent=15 // pred_check_branch
          %229 = sbr.rel (%p227) target = $region47
        $region46: #{idefics2_encoder_forward.15} parent=15 // pred_region
          %s230 = smul.u32 4, %s17
          %p231 = scmp.lt.s32.totalorder %s230, 11
          %s232 = scalar_select %p231, %s230, 11
          %s233 = scalar_lea.vmem %s2, %s232
          %s234 = smul.u32 4, %s17
        $region47: #{idefics2_encoder_forward.15} parent=15 // pred_fallthru
          _
      $region16: #{idefics2_encoder_forward.15} parent=5 // pred_fallthru
        _
      %p235 = scmp.le.s32.totalorder 1, %s9
      %p236 = scmp.lt.s32.totalorder %s9, 13
      %p237 = pnand %p235, %p236
      %p238 = pneg %p237
      // Predicated region
      $region48: #{idefics2_encoder_forward.15} parent=5 // pred_check
        _
      $region49: #{idefics2_encoder_forward.15} parent=5 // pred_check_branch
        %240 = sbr.rel (%p237) target = $region51
      $region50: #{idefics2_encoder_forward.15} parent=5 // pred_region
        %s241 = ssub.s32 %s9, 1
        %s242 = sand.u32 %s71, 1
        %s243 = sand.u32 %s71, 1
        %s244 = smul.addr %s243, 128
        %s245 = scalar_lea.vmem [#allocation3], %s244
        // Predicated region
        $region52: #{idefics2_encoder_forward.15} parent=50 // pred_check
          %p246 = pneg %p84
        $region53: #{idefics2_encoder_forward.15} parent=50 // pred_check_branch
          %248 = sbr.rel (%p246) target = $region55
        $region54: #{idefics2_encoder_forward.15} parent=50 // pred_region
          _
        $region55: #{idefics2_encoder_forward.15} parent=50 // pred_fallthru
          _
        %p249 = scmp.lt.s32.totalorder %s19, 3
        %s250 = scalar_select %p249, %s19, 3
        %p251 = scmp.lt.s32.totalorder %s21, 0
        %s252 = scalar_select %p251, %s21, 0
        %s253 = sadd.s32 %s252, %s250
        %s254 = smul.addr %s253, 8
        %s255 = scalar_lea.vmem %s0, %s254
        %p256 = pneg %p56
        %p257 = pneg %p53
        %s258 = sand.u32 %s71, 1
        %s259 = sand.u32 %s71, 1
        %s260 = smul.addr %s259, 128
        %s261 = scalar_lea.vmem [#allocation3], %s260
        %p262 = pneg %p84
        %p263 = pneg %p81
        %s264 = smul.u32 4, %s20
        %p265 = scmp.lt.s32.totalorder %s264, 11
        %s266 = scalar_select %p265, %s264, 11
        %s267 = scalar_lea.vmem %s2, %s266
        %p268 = pneg %p110
        %p269 = pneg %p107
        %p270 = pneg %p138
        %p271 = pneg %p135
        %s272 = smul.u32 4, %s20
        %p273 = scmp.lt.s32.totalorder %s19, 3
        %s274 = scalar_select %p273, %s19, 3
        %p275 = scmp.lt.s32.totalorder %s272, 11
        %s276 = scalar_select %p275, %s272, 11
        %s277 = smul.addr %s274, 12
        %s278 = sadd.s32 %s276, %s277
        %s279 = smul.addr %s278, 8
        %s280 = scalar_lea.vmem %s3, %s279
        %p281 = scmp.lt.s32.totalorder %s19, 3
        %s282 = scalar_select %p281, %s19, 3
        %p283 = scmp.lt.s32.totalorder %s21, 0
        %s284 = scalar_select %p283, %s21, 0
        %s285 = sadd.s32 %s284, %s282
        %s286 = smul.addr %s285, 8
        %s287 = scalar_lea.vmem %s0, %s286
        %s288 = smul.u32 4, %s21
        %s289 = smul.u32 4, %s20
        %s290 = smul.u32 4, %s20
        %p291 = scmp.lt.s32.totalorder %s290, 11
        %s292 = scalar_select %p291, %s290, 11
        %s293 = scalar_lea.vmem %s2, %s292
        %s294 = smul.u32 4, %s20
        %s295 = smul.u32 4, %s20
        %p296 = scmp.lt.s32.totalorder %s19, 3
        %s297 = scalar_select %p296, %s19, 3
        %p298 = scmp.lt.s32.totalorder %s295, 11
        %s299 = scalar_select %p298, %s295, 11
        %s300 = smul.addr %s297, 12
        %s301 = sadd.s32 %s299, %s300
        %s302 = smul.addr %s301, 8
        %s303 = scalar_lea.vmem %s3, %s302
        %s304 = smul.u32 4, %s20
        %p305 = scmp.eq.s32.totalorder %s21, 0
        // Predicated region
        $region56: #{idefics2_encoder_forward.15} parent=50 // pred_check
          %p306 = pneg %p305
        $region57: #{idefics2_encoder_forward.15} parent=50 // pred_check_branch
          %308 = sbr.rel (%p306) target = $region59
        $region58: #{idefics2_encoder_forward.15} parent=50 // pred_region
          %309 = vst [vmem:[#allocation2] sm:$0xff] 0.0
          %310 = vst [vmem:[#allocation2 + $0x8] sm:$0xff] 0.0
          %311 = vst [vmem:[#allocation2 + $0x10] sm:$0xff] 0.0
          %312 = vst [vmem:[#allocation2 + $0x18] sm:$0xff] 0.0
        $region59: #{idefics2_encoder_forward.15} parent=50 // pred_fallthru
          _
        %v313 = vld [vmem:[#allocation2] sm:$0xff]
        %v314 = vld [vmem:[#allocation2 + $0x8] sm:$0xff]
        %v315 = vld [vmem:[#allocation2 + $0x10] sm:$0xff]
        %v316 = vld [vmem:[#allocation2 + $0x18] sm:$0xff]
        %v317 = vld [vmem:[%s287] sm:$0xff]
        %v318 = vld [vmem:[%s245] sm:$0xff]
        %v319 = vld [vmem:[%s245 + $0x8] sm:$0xff]
        %v320 = vld [vmem:[%s245 + $0x10] sm:$0xff]
        %v321 = vld [vmem:[%s245 + $0x18] sm:$0xff]
        %v322 = vld [vmem:[%s245 + $0x20] sm:$0xff]
        %v323 = vld [vmem:[%s245 + $0x28] sm:$0xff]
        %v324 = vld [vmem:[%s245 + $0x30] sm:$0xff]
        %v325 = vld [vmem:[%s245 + $0x38] sm:$0xff]
        %v326 = vld [vmem:[%s245 + $0x40] sm:$0xff]
        %v327 = vld [vmem:[%s245 + $0x48] sm:$0xff]
        %v328 = vld [vmem:[%s245 + $0x50] sm:$0xff]
        %v329 = vld [vmem:[%s245 + $0x58] sm:$0xff]
        %v330 = vld [vmem:[%s245 + $0x60] sm:$0xff]
        %v331 = vld [vmem:[%s245 + $0x68] sm:$0xff]
        %v332 = vld [vmem:[%s245 + $0x70] sm:$0xff]
        %v333 = vld [vmem:[%s245 + $0x78] sm:$0xff]
        %vm334 = vcmask 261120
        %v336 = vsel %vm334, %v317, 0
        %338 = vmatprep.subr.mxu0 %v319
        %339 = vmatpush1.msra.mxu0 %v318
        %340 = vmatprep.subr.mxu0 %v323
        %341 = vmatpush1.msra.mxu0 %v322
        %342 = vmatprep.subr.mxu0 %v327
        %343 = vmatpush1.msra.mxu0 %v326
        %344 = vmatprep.subr.mxu0 %v331
        %345 = vmatpush1.msra.mxu0 %v330
        %346 = vmatprep.subr.mxu0 0.0
        %347 = vmatpush1.msra.mxu0 0.0
        %348 = vmatprep.subr.mxu0 0.0
        %349 = vmatpush1.msra.mxu0 0.0
        %350 = vmatprep.subr.mxu0 0.0
        %351 = vmatpush1.msra.mxu0 0.0
        %352 = vmatprep.subr.mxu0 0.0
        %353 = vmatpush1.msra.mxu0 0.0
        %354 = vmatprep.subr.mxu0 0.0
        %355 = vmatpush1.msra.mxu0 0.0
        %356 = vmatprep.subr.mxu0 0.0
        %357 = vmatpush1.msra.mxu0 0.0
        %358 = vmatprep.subr.mxu0 0.0
        %359 = vmatpush1.msra.mxu0 0.0
        %360 = vmatprep.subr.mxu0 0.0
        %361 = vmatpush1.msra.mxu0 0.0
        %362 = vmatprep.subr.mxu0 0.0
        %363 = vmatpush1.msra.mxu0 0.0
        %364 = vmatprep.subr.mxu0 0.0
        %365 = vmatpush1.msra.mxu0 0.0
        %366 = vmatprep.subr.mxu0 0.0
        %367 = vmatpush1.msra.mxu0 0.0
        %368 = vmatprep.subr.mxu0 0.0
        %369 = vmatpush1.msra.mxu0 0.0
        %370 = vmatprep.subr.mxu0 0.0
        %371 = vmatpush1.msra.mxu0 0.0
        %372 = vmatprep.subr.mxu0 0.0
        %373 = vmatpush1.msra.mxu0 0.0
        %374 = vmatprep.subr.mxu0 0.0
        %375 = vmatpush1.msra.mxu0 0.0
        %376 = vmatprep.subr.mxu0 0.0
        %377 = vmatpush1.msra.mxu0 0.0
        %378 = vmatprep.subr.mxu0 0.0
        %379 = vmatpush1.msra.mxu0 0.0
        %380 = vmatprep.subr.mxu0 0.0
        %381 = vmatpush1.msra.mxu0 0.0
        %382 = vmatprep.subr.mxu0 0.0
        %383 = vmatpush1.msra.mxu0 0.0
        %384 = vmatprep.subr.mxu0 0.0
        %385 = vmatpush1.msra.mxu0 0.0
        %386 = vmatprep.subr.mxu0 0.0
        %387 = vmatpush1.msra.mxu0 0.0
        %388 = vmatprep.subr.mxu0 0.0
        %389 = vmatpush1.msra.mxu0 0.0
        %390 = vmatprep.subr.mxu0 0.0
        %391 = vmatpush1.msra.mxu0 0.0
        %392 = vmatprep.subr.mxu0 0.0
        %393 = vmatpush1.msra.mxu0 0.0
        %394 = vmatprep.subr.mxu0 0.0
        %395 = vmatpush1.msra.mxu0 0.0
        %396 = vmatprep.subr.mxu0 0.0
        %397 = vmatpush1.msra.mxu0 0.0
        %398 = vmatprep.subr.mxu0 0.0
        %399 = vmatpush1.msra.mxu0 0.0
        %400 = vmatprep.subr.mxu0 0.0
        %401 = vmatpush1.msra.mxu0 0.0
        %402 = vmatprep.mubr.f32.mxu0 0.0
        %403 = vmatmul.mubr.f32.gmra.mrb[0].mxu0 %v336
        %v404 = vpop.f32.mrb[0].mxu0
        %v405 = vadd.f32 0.0, %v404
        %v406 = vpop.f32.mrb[0].mxu0
        %v407 = vadd.f32 0.0, %v406
        %408 = vdwg.mxu0
        %409 = vmatprep.subr.mxu0 %v321
        %410 = vmatpush1.msra.mxu0 %v320
        %411 = vmatprep.subr.mxu0 %v325
        %412 = vmatpush1.msra.mxu0 %v324
        %413 = vmatprep.subr.mxu0 %v329
        %414 = vmatpush1.msra.mxu0 %v328
        %415 = vmatprep.subr.mxu0 %v333
        %416 = vmatpush1.msra.mxu0 %v332
        %417 = vmatprep.subr.mxu0 0.0
        %418 = vmatpush1.msra.mxu0 0.0
        %419 = vmatprep.subr.mxu0 0.0
        %420 = vmatpush1.msra.mxu0 0.0
        %421 = vmatprep.subr.mxu0 0.0
        %422 = vmatpush1.msra.mxu0 0.0
        %423 = vmatprep.subr.mxu0 0.0
        %424 = vmatpush1.msra.mxu0 0.0
        %425 = vmatprep.subr.mxu0 0.0
        %426 = vmatpush1.msra.mxu0 0.0
        %427 = vmatprep.subr.mxu0 0.0
        %428 = vmatpush1.msra.mxu0 0.0
        %429 = vmatprep.subr.mxu0 0.0
        %430 = vmatpush1.msra.mxu0 0.0
        %431 = vmatprep.subr.mxu0 0.0
        %432 = vmatpush1.msra.mxu0 0.0
        %433 = vmatprep.subr.mxu0 0.0
        %434 = vmatpush1.msra.mxu0 0.0
        %435 = vmatprep.subr.mxu0 0.0
        %436 = vmatpush1.msra.mxu0 0.0
        %437 = vmatprep.subr.mxu0 0.0
        %438 = vmatpush1.msra.mxu0 0.0
        %439 = vmatprep.subr.mxu0 0.0
        %440 = vmatpush1.msra.mxu0 0.0
        %441 = vmatprep.subr.mxu0 0.0
        %442 = vmatpush1.msra.mxu0 0.0
        %443 = vmatprep.subr.mxu0 0.0
        %444 = vmatpush1.msra.mxu0 0.0
        %445 = vmatprep.subr.mxu0 0.0
        %446 = vmatpush1.msra.mxu0 0.0
        %447 = vmatprep.subr.mxu0 0.0
        %448 = vmatpush1.msra.mxu0 0.0
        %449 = vmatprep.subr.mxu0 0.0
        %450 = vmatpush1.msra.mxu0 0.0
        %451 = vmatprep.subr.mxu0 0.0
        %452 = vmatpush1.msra.mxu0 0.0
        %453 = vmatprep.subr.mxu0 0.0
        %454 = vmatpush1.msra.mxu0 0.0
        %455 = vmatprep.subr.mxu0 0.0
        %456 = vmatpush1.msra.mxu0 0.0
        %457 = vmatprep.subr.mxu0 0.0
        %458 = vmatpush1.msra.mxu0 0.0
        %459 = vmatprep.subr.mxu0 0.0
        %460 = vmatpush1.msra.mxu0 0.0
        %461 = vmatprep.subr.mxu0 0.0
        %462 = vmatpush1.msra.mxu0 0.0
        %463 = vmatprep.subr.mxu0 0.0
        %464 = vmatpush1.msra.mxu0 0.0
        %465 = vmatprep.subr.mxu0 0.0
        %466 = vmatpush1.msra.mxu0 0.0
        %467 = vmatprep.subr.mxu0 0.0
        %468 = vmatpush1.msra.mxu0 0.0
        %469 = vmatprep.subr.mxu0 0.0
        %470 = vmatpush1.msra.mxu0 0.0
        %471 = vmatprep.subr.mxu0 0.0
        %472 = vmatpush1.msra.mxu0 0.0
        %473 = vmatprep.mubr.f32.mxu0 0.0
        %474 = vmatmul.mubr.f32.gmra.mrb[0].mxu0 %v336
        %v475 = vpop.f32.mrb[0].mxu0
        %v476 = vadd.f32 0.0, %v475
        %v477 = vpop.f32.mrb[0].mxu0
        %v478 = vadd.f32 0.0, %v477
        %479 = vdwg.mxu0
        %v480 = vadd.f32 %v313, %v405
        %v481 = vadd.f32 %v314, %v407
        %v482 = vadd.f32 %v315, %v476
        %v483 = vadd.f32 %v316, %v478
        %484 = vst [vmem:[#allocation2] sm:$0xff] %v480
        %485 = vst [vmem:[#allocation2 + $0x8] sm:$0xff] %v481
        %486 = vst [vmem:[#allocation2 + $0x10] sm:$0xff] %v482
        %487 = vst [vmem:[#allocation2 + $0x18] sm:$0xff] %v483
        // Predicated region
        $region60: #{idefics2_encoder_forward.15} parent=50 // pred_check
          %p488 = pneg %p305
        $region61: #{idefics2_encoder_forward.15} parent=50 // pred_check_branch
          %490 = sbr.rel (%p488) target = $region63
        $region62: #{idefics2_encoder_forward.15} parent=50 // pred_region
          %v491 = vld [vmem:[#allocation2] sm:$0xff]
          %v492 = vld [vmem:[#allocation2 + $0x8] sm:$0xff]
          %v493 = vld [vmem:[#allocation2 + $0x10] sm:$0xff]
          %v494 = vld [vmem:[#allocation2 + $0x18] sm:$0xff]
          %v495 = vld [vmem:[%s293] sm:$0xf]
          %v497 = vlaneseq
          %v498 = vshrl.u32 %v497, 7
          %v499 = vsub.s32 0, %v498
          %v500 = vrot.slane %v495, %v499
          %v501 = vlaneseq
          %v502 = vshrl.u32 %v501, 7
          %v503 = vsub.s32 1, %v502
          %v504 = vrot.slane %v495, %v503
          %v505 = vlaneseq
          %v506 = vshrl.u32 %v505, 7
          %v507 = vsub.s32 2, %v506
          %v508 = vrot.slane %v495, %v507
          %v509 = vlaneseq
          %v510 = vshrl.u32 %v509, 7
          %v511 = vsub.s32 3, %v510
          %v512 = vrot.slane %v495, %v511
          %v517 = vadd.f32 %v491, %v500
          %v518 = vadd.f32 %v492, %v504
          %v519 = vadd.f32 %v493, %v508
          %v520 = vadd.f32 %v494, %v512
          %521 = vst [vmem:[%s303] sm:$0xff] %v517
          %522 = vst [vmem:[%s303 + $0x8] sm:$0xff] %v518
          %523 = vst [vmem:[%s303 + $0x10] sm:$0xff] %v519
          %524 = vst [vmem:[%s303 + $0x18] sm:$0xff] %v520
        $region63: #{idefics2_encoder_forward.15} parent=50 // pred_fallthru
          _
        %s525 = smul.u32 4, %s20
        %p526 = scmp.lt.s32.totalorder %s19, 3
        %s527 = scalar_select %p526, %s19, 3
        %p528 = scmp.lt.s32.totalorder %s525, 11
        %s529 = scalar_select %p528, %s525, 11
        %s530 = smul.addr %s527, 12
        %s531 = sadd.s32 %s529, %s530
        %s532 = smul.addr %s531, 8
        %s533 = scalar_lea.vmem %s3, %s532
        // Predicated region
        $region64: #{idefics2_encoder_forward.15} parent=50 // pred_check
          %p534 = pneg %p135
        $region65: #{idefics2_encoder_forward.15} parent=50 // pred_check_branch
          %536 = sbr.rel (%p534) target = $region67
        $region66: #{idefics2_encoder_forward.15} parent=50 // pred_region
          %s537 = smul.u32 4, %s20
        $region67: #{idefics2_encoder_forward.15} parent=50 // pred_fallthru
          _
      $region51: #{idefics2_encoder_forward.15} parent=5 // pred_fallthru
        _
      %p538 = scmp.le.s32.totalorder 2, %s9
      // Predicated region
      $region68: #{idefics2_encoder_forward.15} parent=5 // pred_check
        %p539 = pneg %p538
      $region69: #{idefics2_encoder_forward.15} parent=5 // pred_check_branch
        %541 = sbr.rel (%p539) target = $region71
      $region70: #{idefics2_encoder_forward.15} parent=5 // pred_region
        %s542 = ssub.s32 %s9, 2
        // Predicated region
        $region72: #{idefics2_encoder_forward.15} parent=70 // pred_check
          %p543 = pneg %p141
        $region73: #{idefics2_encoder_forward.15} parent=70 // pred_check_branch
          %545 = sbr.rel (%p543) target = $region75
        $region74: #{idefics2_encoder_forward.15} parent=70 // pred_region
          %s546 = smul.u32 4, %s23
          %p547 = scmp.lt.s32.totalorder %s22, 3
          %s548 = scalar_select %p547, %s22, 3
          %p549 = scmp.lt.s32.totalorder %s546, 11
          %s550 = scalar_select %p549, %s546, 11
          %s551 = smul.addr %s548, 12
          %s552 = sadd.s32 %s550, %s551
          %s553 = smul.addr %s552, 8
          %s554 = scalar_lea.vmem %s3, %s553
        $region75: #{idefics2_encoder_forward.15} parent=70 // pred_fallthru
          _
      $region71: #{idefics2_encoder_forward.15} parent=5 // pred_fallthru
        _
    $region6: #{idefics2_encoder_forward.15} parent=1 // loop_footer
      %s13 = sadd.s32 1, %s9
    $region7: #{idefics2_encoder_forward.15} parent=1 // loop_footer_branch
      %8 = sbr.rel target = $region3
    $region8: #{idefics2_encoder_forward.15} parent=1 // loop_exit
      _

// kernel: idefics2_encoder_forward.17
$region0: #{idefics2_encoder_forward.17}
  #allocation0 [shape = 'u32[]', space=smem, size = 0x4, offset = 0x4, fixed_abs, tag = 'smem constant byte address 0x4 - core index']
  #allocation1 [shape = 'u32[144,128]{1,0:T(1,128)}', space=vmem, size = 0x12000, scoped, tag = 'internal scratch']
  #allocation2 [shape = 'f32[8,32]{1,0:T(8,128)}', space=vmem, size = 0x1000, scoped, tag = 'scratch operand']
  %s0 = inlined_call_operand.vmem [shape: f32[32,512], index: 0, kind: input, shape index: {}]
  %s1 = inlined_call_operand.vmem [shape: f32[512,32], index: 1, kind: input, shape index: {}]
  %s2 = inlined_call_operand.vmem [shape: f32[1,32], index: 2, kind: input, shape index: {}]
  %s3 = inlined_call_operand.vmem [shape: f32[32,32], index: 3, kind: input, shape index: {}]
  %s4 = inlined_call_operand.vmem [shape: f32[32,32], index: 4, kind: output, shape index: {}]
  %s5 = sld [smem:[#allocation0]]
  $region57: #{idefics2_encoder_forward.17} parent=0
    _
  %s7 = ssub.s32 1, %s5
  %s8 = scalar_select 0, %s7, %s5
  loop: start=0, step=1, limit=6
  $region2: #{idefics2_encoder_forward.17} parent=0 // loop_pre_header
    _
  $region3: #{idefics2_encoder_forward.17} parent=0 // loop_header
    %s10 = sphi 0, %s14
    %p11 = scmp.ge.s32.totalorder %s10, 6
    %s17 = sphi 0, %s36
    %s18 = sphi 0, %s32
    %s19 = sphi 0, %s28
    %s20 = sphi 0, %s17
    %s21 = sphi 0, %s18
    %s22 = sphi 0, %s19
    %s23 = sphi 0, %s20
    %s24 = sphi 0, %s21
    %s25 = sphi 0, %s22
    %s41 = sphi 0, %s43
    %s44 = sphi 0, %s41
    %s45 = sphi 0, %s44
    %s61 = sphi 0, %s45
    %s69 = sphi 0, %s71
    %s72 = sphi 0, %s69
    %s73 = sphi 0, %s72
    %s89 = sphi 0, %s73
    %s95 = sphi 0, %s97
    %s98 = sphi 0, %s95
    %s99 = sphi 0, %s98
    %s115 = sphi 0, %s99
    %s123 = sphi 0, %s125
    %s126 = sphi 0, %s123
    %s127 = sphi 0, %s126
    %s143 = sphi 0, %s127
    %s151 = sphi 0, %s153
    %s154 = sphi 0, %s151
    %s155 = sphi 0, %s154
    %s171 = sphi 0, %s155
  $region4: #{idefics2_encoder_forward.17} parent=0 // loop_header_branch
    %13 = sbr.rel (%p11) target = $region8
  $region5: #{idefics2_encoder_forward.17} parent=0 // loop_body
    %s15 = ssub.s32 %s10, 1
    %s16 = ssub.s32 %s10, 2
    %s26 = sadd.s32 1, %s19
    %p27 = scmp.ge.s32.totalorder %s26, 1
    %s28 = scalar_select %p27, 0, %s26
    %s29 = sadd.s32 1, %s18
    %s30 = scalar_select %p27, %s29, %s18
    %p31 = scmp.ge.s32.totalorder %s30, 1
    %s32 = scalar_select %p31, 0, %s30
    %s33 = sadd.s32 1, %s17
    %s34 = scalar_select %p31, %s33, %s17
    %p35 = scmp.ge.s32.totalorder %s34, 4
    %s36 = scalar_select %p35, 0, %s34
    %s37 = ssub.s32 %s17, %s36
    %s38 = ssub.s32 %s19, %s28
    %s39 = sor.u32 %s37, %s38
    %p40 = scmp.eq.s32.totalorder %s39, 0
    %s42 = sadd.s32 %s41, 1
    %s43 = scalar_select %p40, %s41, %s42
    %p46 = pneg %p40
    %p47 = scmp.eq.s32.totalorder %s10, 3
    %p48 = por %p46, %p47
    %p49 = scmp.ne.s32.totalorder %s41, %s44
    %p50 = scmp.eq.s32.totalorder %s10, 0
    %p51 = por %p49, %p50
    %p52 = scmp.ne.s32.totalorder %s41, %s44
    %p53 = scmp.eq.s32.totalorder %s15, 3
    %p54 = por %p52, %p53
    %p55 = scmp.ne.s32.totalorder %s44, %s45
    %p56 = scmp.eq.s32.totalorder %s15, 0
    %p57 = por %p55, %p56
    %p58 = scmp.ne.s32.totalorder %s44, %s45
    %p59 = scmp.eq.s32.totalorder %s16, 3
    %p60 = por %p58, %p59
    %p62 = scmp.ne.s32.totalorder %s45, %s61
    %p63 = scmp.eq.s32.totalorder %s16, 0
    %p64 = por %p62, %p63
    %s65 = ssub.s32 %s19, %s28
    %s66 = ssub.s32 %s18, %s32
    %s67 = sor.u32 %s65, %s66
    %p68 = scmp.eq.s32.totalorder %s67, 0
    %s70 = sadd.s32 %s69, 1
    %s71 = scalar_select %p68, %s69, %s70
    %p74 = pneg %p68
    %p75 = scmp.eq.s32.totalorder %s10, 3
    %p76 = por %p74, %p75
    %p77 = scmp.ne.s32.totalorder %s69, %s72
    %p78 = scmp.eq.s32.totalorder %s10, 0
    %p79 = por %p77, %p78
    %p80 = scmp.ne.s32.totalorder %s69, %s72
    %p81 = scmp.eq.s32.totalorder %s15, 3
    %p82 = por %p80, %p81
    %p83 = scmp.ne.s32.totalorder %s72, %s73
    %p84 = scmp.eq.s32.totalorder %s15, 0
    %p85 = por %p83, %p84
    %p86 = scmp.ne.s32.totalorder %s72, %s73
    %p87 = scmp.eq.s32.totalorder %s16, 3
    %p88 = por %p86, %p87
    %p90 = scmp.ne.s32.totalorder %s73, %s89
    %p91 = scmp.eq.s32.totalorder %s16, 0
    %p92 = por %p90, %p91
    %s93 = ssub.s32 %s18, %s32
    %p94 = scmp.eq.s32.totalorder %s93, 0
    %s96 = sadd.s32 %s95, 1
    %s97 = scalar_select %p94, %s95, %s96
    %p100 = pneg %p94
    %p101 = scmp.eq.s32.totalorder %s10, 3
    %p102 = por %p100, %p101
    %p103 = scmp.ne.s32.totalorder %s95, %s98
    %p104 = scmp.eq.s32.totalorder %s10, 0
    %p105 = por %p103, %p104
    %p106 = scmp.ne.s32.totalorder %s95, %s98
    %p107 = scmp.eq.s32.totalorder %s15, 3
    %p108 = por %p106, %p107
    %p109 = scmp.ne.s32.totalorder %s98, %s99
    %p110 = scmp.eq.s32.totalorder %s15, 0
    %p111 = por %p109, %p110
    %p112 = scmp.ne.s32.totalorder %s98, %s99
    %p113 = scmp.eq.s32.totalorder %s16, 3
    %p114 = por %p112, %p113
    %p116 = scmp.ne.s32.totalorder %s99, %s115
    %p117 = scmp.eq.s32.totalorder %s16, 0
    %p118 = por %p116, %p117
    %s119 = ssub.s32 %s17, %s36
    %s120 = ssub.s32 %s18, %s32
    %s121 = sor.u32 %s119, %s120
    %p122 = scmp.eq.s32.totalorder %s121, 0
    %s124 = sadd.s32 %s123, 1
    %s125 = scalar_select %p122, %s123, %s124
    %p128 = pneg %p122
    %p129 = scmp.eq.s32.totalorder %s10, 3
    %p130 = por %p128, %p129
    %p131 = scmp.ne.s32.totalorder %s123, %s126
    %p132 = scmp.eq.s32.totalorder %s10, 0
    %p133 = por %p131, %p132
    %p134 = scmp.ne.s32.totalorder %s123, %s126
    %p135 = scmp.eq.s32.totalorder %s15, 3
    %p136 = por %p134, %p135
    %p137 = scmp.ne.s32.totalorder %s126, %s127
    %p138 = scmp.eq.s32.totalorder %s15, 0
    %p139 = por %p137, %p138
    %p140 = scmp.ne.s32.totalorder %s126, %s127
    %p141 = scmp.eq.s32.totalorder %s16, 3
    %p142 = por %p140, %p141
    %p144 = scmp.ne.s32.totalorder %s127, %s143
    %p145 = scmp.eq.s32.totalorder %s16, 0
    %p146 = por %p144, %p145
    %s147 = ssub.s32 %s17, %s36
    %s148 = ssub.s32 %s18, %s32
    %s149 = sor.u32 %s147, %s148
    %p150 = scmp.eq.s32.totalorder %s149, 0
    %s152 = sadd.s32 %s151, 1
    %s153 = scalar_select %p150, %s151, %s152
    %p156 = pneg %p150
    %p157 = scmp.eq.s32.totalorder %s10, 3
    %p158 = por %p156, %p157
    %p159 = scmp.ne.s32.totalorder %s151, %s154
    %p160 = scmp.eq.s32.totalorder %s10, 0
    %p161 = por %p159, %p160
    %p162 = scmp.ne.s32.totalorder %s151, %s154
    %p163 = scmp.eq.s32.totalorder %s15, 3
    %p164 = por %p162, %p163
    %p165 = scmp.ne.s32.totalorder %s154, %s155
    %p166 = scmp.eq.s32.totalorder %s15, 0
    %p167 = por %p165, %p166
    %p168 = scmp.ne.s32.totalorder %s154, %s155
    %p169 = scmp.eq.s32.totalorder %s16, 3
    %p170 = por %p168, %p169
    %p172 = scmp.ne.s32.totalorder %s155, %s171
    %p173 = scmp.eq.s32.totalorder %s16, 0
    %p174 = por %p172, %p173
    %p175 = scmp.le.s32.totalorder 1, %s10
    %p176 = scmp.lt.s32.totalorder %s10, 5
    %p177 = pnand %p175, %p176
    %p178 = pneg %p177
    // Predicated region
    $region9: #{idefics2_encoder_forward.17} parent=5 // pred_check
      _
    $region10: #{idefics2_encoder_forward.17} parent=5 // pred_check_branch
      %180 = sbr.rel (%p177) target = $region12
    $region11: #{idefics2_encoder_forward.17} parent=5 // pred_region
      %s181 = ssub.s32 %s10, 1
      // Predicated region
      $region13: #{idefics2_encoder_forward.17} parent=11 // pred_check
        %p182 = pneg %p85
      $region14: #{idefics2_encoder_forward.17} parent=11 // pred_check_branch
        %184 = sbr.rel (%p182) target = $region16
      $region15: #{idefics2_encoder_forward.17} parent=11 // pred_region
        %s185 = smul.u32 64, %s22
        %p186 = scmp.lt.s32.totalorder %s185, 63
        %s187 = scalar_select %p186, %s185, 63
        %p188 = scmp.lt.s32.totalorder %s21, 0
        %s189 = scalar_select %p188, %s21, 0
        %s190 = sadd.s32 %s189, %s187
        %s191 = smul.addr %s190, 8
        %s192 = scalar_lea.vmem %s1, %s191
        %s193 = smul.u32 64, %s22
      $region16: #{idefics2_encoder_forward.17} parent=11 // pred_fallthru
        _
      // Predicated region
      $region17: #{idefics2_encoder_forward.17} parent=11 // pred_check
        %p194 = pneg %p111
      $region18: #{idefics2_encoder_forward.17} parent=11 // pred_check_branch
        %196 = sbr.rel (%p194) target = $region20
      $region19: #{idefics2_encoder_forward.17} parent=11 // pred_region
        %p197 = scmp.lt.s32.totalorder %s21, 0
        %s198 = scalar_select %p197, %s21, 0
        %s199 = scalar_lea.vmem %s2, %s198
      $region20: #{idefics2_encoder_forward.17} parent=11 // pred_fallthru
        _
    $region12: #{idefics2_encoder_forward.17} parent=5 // pred_fallthru
      _
    %p200 = scmp.lt.s32.totalorder %s10, 4
    // Predicated region
    $region21: #{idefics2_encoder_forward.17} parent=5 // pred_check
      %p201 = pneg %p200
    $region22: #{idefics2_encoder_forward.17} parent=5 // pred_check_branch
      %203 = sbr.rel (%p201) target = $region24
    $region23: #{idefics2_encoder_forward.17} parent=5 // pred_region
      // Predicated region
      $region25: #{idefics2_encoder_forward.17} parent=23 // pred_check
        %p204 = pneg %p51
      $region26: #{idefics2_encoder_forward.17} parent=23 // pred_check_branch
        %206 = sbr.rel (%p204) target = $region28
      $region27: #{idefics2_encoder_forward.17} parent=23 // pred_region
        %s207 = smul.u32 4, %s19
        %p208 = scmp.lt.s32.totalorder %s17, 3
        %s209 = scalar_select %p208, %s17, 3
        %p210 = scmp.lt.s32.totalorder %s207, 3
        %s211 = scalar_select %p210, %s207, 3
        %s212 = smul.addr %s209, 4
        %s213 = sadd.s32 %s211, %s212
        %s214 = smul.addr %s213, 8
        %s215 = scalar_lea.vmem %s0, %s214
        %s216 = smul.u32 4, %s19
      $region28: #{idefics2_encoder_forward.17} parent=23 // pred_fallthru
        _
      // Predicated region
      $region29: #{idefics2_encoder_forward.17} parent=23 // pred_check
        %p217 = pneg %p133
      $region30: #{idefics2_encoder_forward.17} parent=23 // pred_check_branch
        %219 = sbr.rel (%p217) target = $region32
      $region31: #{idefics2_encoder_forward.17} parent=23 // pred_region
        %p220 = scmp.lt.s32.totalorder %s17, 3
        %s221 = scalar_select %p220, %s17, 3
        %p222 = scmp.lt.s32.totalorder %s18, 0
        %s223 = scalar_select %p222, %s18, 0
        %s224 = sadd.s32 %s223, %s221
        %s225 = smul.addr %s224, 8
        %s226 = scalar_lea.vmem %s3, %s225
      $region32: #{idefics2_encoder_forward.17} parent=23 // pred_fallthru
        _
    $region24: #{idefics2_encoder_forward.17} parent=5 // pred_fallthru
      _
    %p227 = scmp.le.s32.totalorder 1, %s10
    %p228 = scmp.lt.s32.totalorder %s10, 5
    %p229 = pnand %p227, %p228
    %p230 = pneg %p229
    // Predicated region
    $region33: #{idefics2_encoder_forward.17} parent=5 // pred_check
      _
    $region34: #{idefics2_encoder_forward.17} parent=5 // pred_check_branch
      %232 = sbr.rel (%p229) target = $region36
    $region35: #{idefics2_encoder_forward.17} parent=5 // pred_region
      %s233 = ssub.s32 %s10, 1
      %s234 = smul.u32 4, %s22
      %p235 = scmp.lt.s32.totalorder %s20, 3
      %s236 = scalar_select %p235, %s20, 3
      %p237 = scmp.lt.s32.totalorder %s234, 3
      %s238 = scalar_select %p237, %s234, 3
      %s239 = smul.addr %s236, 4
      %s240 = sadd.s32 %s238, %s239
      %s241 = smul.addr %s240, 8
      %s242 = scalar_lea.vmem %s0, %s241
      %p243 = pneg %p57
      %p244 = pneg %p54
      %s245 = smul.u32 64, %s22
      %p246 = scmp.lt.s32.totalorder %s245, 63
      %s247 = scalar_select %p246, %s245, 63
      %p248 = scmp.lt.s32.totalorder %s21, 0
      %s249 = scalar_select %p248, %s21, 0
      %s250 = sadd.s32 %s249, %s247
      %s251 = smul.addr %s250, 8
      %s252 = scalar_lea.vmem %s1, %s251
      %p253 = pneg %p85
      %p254 = pneg %p82
      %p255 = scmp.lt.s32.totalorder %s21, 0
      %s256 = scalar_select %p255, %s21, 0
      %s257 = scalar_lea.vmem %s2, %s256
      %p258 = pneg %p111
      %p259 = pneg %p108
      %p260 = scmp.lt.s32.totalorder %s20, 3
      %s261 = scalar_select %p260, %s20, 3
      %p262 = scmp.lt.s32.totalorder %s21, 0
      %s263 = scalar_select %p262, %s21, 0
      %s264 = sadd.s32 %s263, %s261
      %s265 = smul.addr %s264, 8
      %s266 = scalar_lea.vmem %s3, %s265
      %p267 = pneg %p139
      %p268 = pneg %p136
      %p269 = pneg %p167
      %p270 = pneg %p164
      %p271 = scmp.lt.s32.totalorder %s20, 3
      %s272 = scalar_select %p271, %s20, 3
      %p273 = scmp.lt.s32.totalorder %s21, 0
      %s274 = scalar_select %p273, %s21, 0
      %s275 = sadd.s32 %s274, %s272
      %s276 = smul.addr %s275, 8
      %s277 = scalar_lea.vmem %s4, %s276
      %s278 = smul.u32 4, %s22
      %p279 = scmp.lt.s32.totalorder %s20, 3
      %s280 = scalar_select %p279, %s20, 3
      %p281 = scmp.lt.s32.totalorder %s278, 3
      %s282 = scalar_select %p281, %s278, 3
      %s283 = smul.addr %s280, 4
      %s284 = sadd.s32 %s282, %s283
      %s285 = smul.addr %s284, 8
      %s286 = scalar_lea.vmem %s0, %s285
      %s287 = smul.u32 4, %s22
      %s288 = smul.u32 64, %s22
      %p289 = scmp.lt.s32.totalorder %s288, 63
      %s290 = scalar_select %p289, %s288, 63
      %p291 = scmp.lt.s32.totalorder %s21, 0
      %s292 = scalar_select %p291, %s21, 0
      %s293 = sadd.s32 %s292, %s290
      %s294 = smul.addr %s293, 8
      %s295 = scalar_lea.vmem %s1, %s294
      %s296 = smul.u32 64, %s22
      %p297 = scmp.lt.s32.totalorder %s21, 0
      %s298 = scalar_select %p297, %s21, 0
      %s299 = scalar_lea.vmem %s2, %s298
      %p300 = scmp.lt.s32.totalorder %s20, 3
      %s301 = scalar_select %p300, %s20, 3
      %p302 = scmp.lt.s32.totalorder %s21, 0
      %s303 = scalar_select %p302, %s21, 0
      %s304 = sadd.s32 %s303, %s301
      %s305 = smul.addr %s304, 8
      %s306 = scalar_lea.vmem %s3, %s305
      %p307 = scmp.lt.s32.totalorder %s20, 3
      %s308 = scalar_select %p307, %s20, 3
      %p309 = scmp.lt.s32.totalorder %s21, 0
      %s310 = scalar_select %p309, %s21, 0
      %s311 = sadd.s32 %s310, %s308
      %s312 = smul.addr %s311, 8
      %s313 = scalar_lea.vmem %s4, %s312
      %p314 = scmp.eq.s32.totalorder %s22, 0
      // Predicated region
      $region37: #{idefics2_encoder_forward.17} parent=35 // pred_check
        %p315 = pneg %p314
      $region38: #{idefics2_encoder_forward.17} parent=35 // pred_check_branch
        %317 = sbr.rel (%p315) target = $region40
      $region39: #{idefics2_encoder_forward.17} parent=35 // pred_region
        %vm318 = vcmask 261120
        %319 = vst.msk [vmem:[#allocation2] sm:$0xff] %vm318, 0.0
      $region40: #{idefics2_encoder_forward.17} parent=35 // pred_fallthru
        _
      %v320 = vld [vmem:[#allocation2] sm:$0xff]
      %v321 = vld [vmem:[%s286] sm:$0xff]
      %v322 = vld [vmem:[%s286 + $0x8] sm:$0xff]
      %v323 = vld [vmem:[%s286 + $0x10] sm:$0xff]
      %v324 = vld [vmem:[%s286 + $0x18] sm:$0xff]
      %v325 = vld [vmem:[%s295] sm:$0xff]
      %v326 = vld [vmem:[%s295 + $0x8] sm:$0xff]
      %v327 = vld [vmem:[%s295 + $0x10] sm:$0xff]
      %v328 = vld [vmem:[%s295 + $0x18] sm:$0xff]
      %v329 = vld [vmem:[%s295 + $0x20] sm:$0xff]
      %v330 = vld [vmem:[%s295 + $0x28] sm:$0xff]
      %v331 = vld [vmem:[%s295 + $0x30] sm:$0xff]
      %v332 = vld [vmem:[%s295 + $0x38] sm:$0xff]
      %v333 = vld [vmem:[%s295 + $0x40] sm:$0xff]
      %v334 = vld [vmem:[%s295 + $0x48] sm:$0xff]
      %v335 = vld [vmem:[%s295 + $0x50] sm:$0xff]
      %v336 = vld [vmem:[%s295 + $0x58] sm:$0xff]
      %v337 = vld [vmem:[%s295 + $0x60] sm:$0xff]
      %v338 = vld [vmem:[%s295 + $0x68] sm:$0xff]
      %v339 = vld [vmem:[%s295 + $0x70] sm:$0xff]
      %v340 = vld [vmem:[%s295 + $0x78] sm:$0xff]
      %v341 = vld [vmem:[%s295 + $0x80] sm:$0xff]
      %v342 = vld [vmem:[%s295 + $0x88] sm:$0xff]
      %v343 = vld [vmem:[%s295 + $0x90] sm:$0xff]
      %v344 = vld [vmem:[%s295 + $0x98] sm:$0xff]
      %v345 = vld [vmem:[%s295 + $0xa0] sm:$0xff]
      %v346 = vld [vmem:[%s295 + $0xa8] sm:$0xff]
      %v347 = vld [vmem:[%s295 + $0xb0] sm:$0xff]
      %v348 = vld [vmem:[%s295 + $0xb8] sm:$0xff]
      %v349 = vld [vmem:[%s295 + $0xc0] sm:$0xff]
      %v350 = vld [vmem:[%s295 + $0xc8] sm:$0xff]
      %v351 = vld [vmem:[%s295 + $0xd0] sm:$0xff]
      %v352 = vld [vmem:[%s295 + $0xd8] sm:$0xff]
      %v353 = vld [vmem:[%s295 + $0xe0] sm:$0xff]
      %v354 = vld [vmem:[%s295 + $0xe8] sm:$0xff]
      %v355 = vld [vmem:[%s295 + $0xf0] sm:$0xff]
      %v356 = vld [vmem:[%s295 + $0xf8] sm:$0xff]
      %v357 = vld [vmem:[%s295 + $0x100] sm:$0xff]
      %v358 = vld [vmem:[%s295 + $0x108] sm:$0xff]
      %v359 = vld [vmem:[%s295 + $0x110] sm:$0xff]
      %v360 = vld [vmem:[%s295 + $0x118] sm:$0xff]
      %v361 = vld [vmem:[%s295 + $0x120] sm:$0xff]
      %v362 = vld [vmem:[%s295 + $0x128] sm:$0xff]
      %v363 = vld [vmem:[%s295 + $0x130] sm:$0xff]
      %v364 = vld [vmem:[%s295 + $0x138] sm:$0xff]
      %v365 = vld [vmem:[%s295 + $0x140] sm:$0xff]
      %v366 = vld [vmem:[%s295 + $0x148] sm:$0xff]
      %v367 = vld [vmem:[%s295 + $0x150] sm:$0xff]
      %v368 = vld [vmem:[%s295 + $0x158] sm:$0xff]
      %v369 = vld [vmem:[%s295 + $0x160] sm:$0xff]
      %v370 = vld [vmem:[%s295 + $0x168] sm:$0xff]
      %v371 = vld [vmem:[%s295 + $0x170] sm:$0xff]
      %v372 = vld [vmem:[%s295 + $0x178] sm:$0xff]
      %v373 = vld [vmem:[%s295 + $0x180] sm:$0xff]
      %v374 = vld [vmem:[%s295 + $0x188] sm:$0xff]
      %v375 = vld [vmem:[%s295 + $0x190] sm:$0xff]
      %v376 = vld [vmem:[%s295 + $0x198] sm:$0xff]
      %v377 = vld [vmem:[%s295 + $0x1a0] sm:$0xff]
      %v378 = vld [vmem:[%s295 + $0x1a8] sm:$0xff]
      %v379 = vld [vmem:[%s295 + $0x1b0] sm:$0xff]
      %v380 = vld [vmem:[%s295 + $0x1b8] sm:$0xff]
      %v381 = vld [vmem:[%s295 + $0x1c0] sm:$0xff]
      %v382 = vld [vmem:[%s295 + $0x1c8] sm:$0xff]
      %v383 = vld [vmem:[%s295 + $0x1d0] sm:$0xff]
      %v384 = vld [vmem:[%s295 + $0x1d8] sm:$0xff]
      %v385 = vld [vmem:[%s295 + $0x1e0] sm:$0xff]
      %v386 = vld [vmem:[%s295 + $0x1e8] sm:$0xff]
      %v387 = vld [vmem:[%s295 + $0x1f0] sm:$0xff]
      %v388 = vld [vmem:[%s295 + $0x1f8] sm:$0xff]
      %389 = vmatprep.subr.mxu0 0.0
      %390 = vmatpush1.msra.mxu0 %v325
      %391 = vmatprep.subr.mxu0 0.0
      %392 = vmatpush1.msra.mxu0 %v326
      %393 = vmatprep.subr.mxu0 0.0
      %394 = vmatpush1.msra.mxu0 %v327
      %395 = vmatprep.subr.mxu0 0.0
      %396 = vmatpush1.msra.mxu0 %v328
      %397 = vmatprep.subr.mxu0 0.0
      %398 = vmatpush1.msra.mxu0 %v329
      %399 = vmatprep.subr.mxu0 0.0
      %400 = vmatpush1.msra.mxu0 %v330
      %401 = vmatprep.subr.mxu0 0.0
      %402 = vmatpush1.msra.mxu0 %v331
      %403 = vmatprep.subr.mxu0 0.0
      %404 = vmatpush1.msra.mxu0 %v332
      %405 = vmatprep.subr.mxu0 0.0
      %406 = vmatpush1.msra.mxu0 %v333
      %407 = vmatprep.subr.mxu0 0.0
      %408 = vmatpush1.msra.mxu0 %v334
      %409 = vmatprep.subr.mxu0 0.0
      %410 = vmatpush1.msra.mxu0 %v335
      %411 = vmatprep.subr.mxu0 0.0
      %412 = vmatpush1.msra.mxu0 %v336
      %413 = vmatprep.subr.mxu0 0.0
      %414 = vmatpush1.msra.mxu0 %v337
      %415 = vmatprep.subr.mxu0 0.0
      %416 = vmatpush1.msra.mxu0 %v338
      %417 = vmatprep.subr.mxu0 0.0
      %418 = vmatpush1.msra.mxu0 %v339
      %419 = vmatprep.subr.mxu0 0.0
      %420 = vmatpush1.msra.mxu0 %v340
      %421 = vmatprep.subr.mxu0 0.0
      %422 = vmatpush1.msra.mxu0 %v341
      %423 = vmatprep.subr.mxu0 0.0
      %424 = vmatpush1.msra.mxu0 %v342
      %425 = vmatprep.subr.mxu0 0.0
      %426 = vmatpush1.msra.mxu0 %v343
      %427 = vmatprep.subr.mxu0 0.0
      %428 = vmatpush1.msra.mxu0 %v344
      %429 = vmatprep.subr.mxu0 0.0
      %430 = vmatpush1.msra.mxu0 %v345
      %431 = vmatprep.subr.mxu0 0.0
      %432 = vmatpush1.msra.mxu0 %v346
      %433 = vmatprep.subr.mxu0 0.0
      %434 = vmatpush1.msra.mxu0 %v347
      %435 = vmatprep.subr.mxu0 0.0
      %436 = vmatpush1.msra.mxu0 %v348
      %437 = vmatprep.subr.mxu0 0.0
      %438 = vmatpush1.msra.mxu0 %v349
      %439 = vmatprep.subr.mxu0 0.0
      %440 = vmatpush1.msra.mxu0 %v350
      %441 = vmatprep.subr.mxu0 0.0
      %442 = vmatpush1.msra.mxu0 %v351
      %443 = vmatprep.subr.mxu0 0.0
      %444 = vmatpush1.msra.mxu0 %v352
      %445 = vmatprep.subr.mxu0 0.0
      %446 = vmatpush1.msra.mxu0 %v353
      %447 = vmatprep.subr.mxu0 0.0
      %448 = vmatpush1.msra.mxu0 %v354
      %449 = vmatprep.subr.mxu0 0.0
      %450 = vmatpush1.msra.mxu0 %v355
      %451 = vmatprep.subr.mxu0 0.0
      %452 = vmatpush1.msra.mxu0 %v356
      %453 = vmatprep.mubr.f32.mxu0 %v322
      %454 = vmatmul.mubr.f32.gmra.mrb[0].mxu0 %v321
      %v455 = vpop.f32.mrb[0].mxu0
      %v456 = vadd.f32 0.0, %v455
      %v457 = vpop.f32.mrb[0].mxu0
      %458 = vdwg.mxu0
      %459 = vmatprep.subr.mxu0 0.0
      %460 = vmatpush1.msra.mxu0 %v357
      %461 = vmatprep.subr.mxu0 0.0
      %462 = vmatpush1.msra.mxu0 %v358
      %463 = vmatprep.subr.mxu0 0.0
      %464 = vmatpush1.msra.mxu0 %v359
      %465 = vmatprep.subr.mxu0 0.0
      %466 = vmatpush1.msra.mxu0 %v360
      %467 = vmatprep.subr.mxu0 0.0
      %468 = vmatpush1.msra.mxu0 %v361
      %469 = vmatprep.subr.mxu0 0.0
      %470 = vmatpush1.msra.mxu0 %v362
      %471 = vmatprep.subr.mxu0 0.0
      %472 = vmatpush1.msra.mxu0 %v363
      %473 = vmatprep.subr.mxu0 0.0
      %474 = vmatpush1.msra.mxu0 %v364
      %475 = vmatprep.subr.mxu0 0.0
      %476 = vmatpush1.msra.mxu0 %v365
      %477 = vmatprep.subr.mxu0 0.0
      %478 = vmatpush1.msra.mxu0 %v366
      %479 = vmatprep.subr.mxu0 0.0
      %480 = vmatpush1.msra.mxu0 %v367
      %481 = vmatprep.subr.mxu0 0.0
      %482 = vmatpush1.msra.mxu0 %v368
      %483 = vmatprep.subr.mxu0 0.0
      %484 = vmatpush1.msra.mxu0 %v369
      %485 = vmatprep.subr.mxu0 0.0
      %486 = vmatpush1.msra.mxu0 %v370
      %487 = vmatprep.subr.mxu0 0.0
      %488 = vmatpush1.msra.mxu0 %v371
      %489 = vmatprep.subr.mxu0 0.0
      %490 = vmatpush1.msra.mxu0 %v372
      %491 = vmatprep.subr.mxu0 0.0
      %492 = vmatpush1.msra.mxu0 %v373
      %493 = vmatprep.subr.mxu0 0.0
      %494 = vmatpush1.msra.mxu0 %v374
      %495 = vmatprep.subr.mxu0 0.0
      %496 = vmatpush1.msra.mxu0 %v375
      %497 = vmatprep.subr.mxu0 0.0
      %498 = vmatpush1.msra.mxu0 %v376
      %499 = vmatprep.subr.mxu0 0.0
      %500 = vmatpush1.msra.mxu0 %v377
      %501 = vmatprep.subr.mxu0 0.0
      %502 = vmatpush1.msra.mxu0 %v378
      %503 = vmatprep.subr.mxu0 0.0
      %504 = vmatpush1.msra.mxu0 %v379
      %505 = vmatprep.subr.mxu0 0.0
      %506 = vmatpush1.msra.mxu0 %v380
      %507 = vmatprep.subr.mxu0 0.0
      %508 = vmatpush1.msra.mxu0 %v381
      %509 = vmatprep.subr.mxu0 0.0
      %510 = vmatpush1.msra.mxu0 %v382
      %511 = vmatprep.subr.mxu0 0.0
      %512 = vmatpush1.msra.mxu0 %v383
      %513 = vmatprep.subr.mxu0 0.0
      %514 = vmatpush1.msra.mxu0 %v384
      %515 = vmatprep.subr.mxu0 0.0
      %516 = vmatpush1.msra.mxu0 %v385
      %517 = vmatprep.subr.mxu0 0.0
      %518 = vmatpush1.msra.mxu0 %v386
      %519 = vmatprep.subr.mxu0 0.0
      %520 = vmatpush1.msra.mxu0 %v387
      %521 = vmatprep.subr.mxu0 0.0
      %522 = vmatpush1.msra.mxu0 %v388
      %523 = vmatprep.mubr.f32.mxu0 %v324
      %524 = vmatmul.mubr.f32.gmra.mrb[0].mxu0 %v323
      %v525 = vpop.f32.mrb[0].mxu0
      %v526 = vadd.f32 %v456, %v525
      %v527 = vpop.f32.mrb[0].mxu0
      %528 = vdwg.mxu0
      %v529 = vadd.f32 %v320, %v526
      %vm530 = vcmask 261120
      %531 = vst.msk [vmem:[#allocation2] sm:$0xff] %vm530, %v529
      // Predicated region
      $region41: #{idefics2_encoder_forward.17} parent=35 // pred_check
        %p532 = pneg %p314
      $region42: #{idefics2_encoder_forward.17} parent=35 // pred_check_branch
        %534 = sbr.rel (%p532) target = $region44
      $region43: #{idefics2_encoder_forward.17} parent=35 // pred_region
        %v535 = vld [vmem:[#allocation2] sm:$0xff]
        %v536 = vld [vmem:[%s299] sm:$0x1]
        %v538 = vlaneseq
        %v539 = vshrl.u32 %v538, 7
        %v540 = vsub.s32 0, %v539
        %v541 = vrot.slane %v536, %v540
        %v543 = vadd.f32 %v535, %v541
        %v544 = vld [vmem:[%s306] sm:$0xff]
        %v545 = vadd.f32 %v543, %v544
        %546 = vst.msk [vmem:[%s313] sm:$0xff] %vm530, %v545
      $region44: #{idefics2_encoder_forward.17} parent=35 // pred_fallthru
        _
      %p547 = scmp.lt.s32.totalorder %s20, 3
      %s548 = scalar_select %p547, %s20, 3
      %p549 = scmp.lt.s32.totalorder %s21, 0
      %s550 = scalar_select %p549, %s21, 0
      %s551 = sadd.s32 %s550, %s548
      %s552 = smul.addr %s551, 8
      %s553 = scalar_lea.vmem %s4, %s552
      // Predicated region
      $region45: #{idefics2_encoder_forward.17} parent=35 // pred_check
        %p554 = pneg %p164
      $region46: #{idefics2_encoder_forward.17} parent=35 // pred_check_branch
        %556 = sbr.rel (%p554) target = $region48
      $region47: #{idefics2_encoder_forward.17} parent=35 // pred_region
        _
      $region48: #{idefics2_encoder_forward.17} parent=35 // pred_fallthru
        _
    $region36: #{idefics2_encoder_forward.17} parent=5 // pred_fallthru
      _
    %p557 = scmp.le.s32.totalorder 2, %s10
    // Predicated region
    $region49: #{idefics2_encoder_forward.17} parent=5 // pred_check
      %p558 = pneg %p557
    $region50: #{idefics2_encoder_forward.17} parent=5 // pred_check_branch
      %560 = sbr.rel (%p558) target = $region52
    $region51: #{idefics2_encoder_forward.17} parent=5 // pred_region
      %s561 = ssub.s32 %s10, 2
      // Predicated region
      $region53: #{idefics2_encoder_forward.17} parent=51 // pred_check
        %p562 = pneg %p170
      $region54: #{idefics2_encoder_forward.17} parent=51 // pred_check_branch
        %564 = sbr.rel (%p562) target = $region56
      $region55: #{idefics2_encoder_forward.17} parent=51 // pred_region
        %p565 = scmp.lt.s32.totalorder %s23, 3
        %s566 = scalar_select %p565, %s23, 3
        %p567 = scmp.lt.s32.totalorder %s24, 0
        %s568 = scalar_select %p567, %s24, 0
        %s569 = sadd.s32 %s568, %s566
        %s570 = smul.addr %s569, 8
        %s571 = scalar_lea.vmem %s4, %s570
      $region56: #{idefics2_encoder_forward.17} parent=51 // pred_fallthru
        _
    $region52: #{idefics2_encoder_forward.17} parent=5 // pred_fallthru
      _
  $region6: #{idefics2_encoder_forward.17} parent=0 // loop_footer
    %s14 = sadd.s32 1, %s10
  $region7: #{idefics2_encoder_forward.17} parent=0 // loop_footer_branch
    %9 = sbr.rel target = $region3
  $region8: #{idefics2_encoder_forward.17} parent=0 // loop_exit
    _

// kernel: idefics2_encoder_forward.16
$region0: #{idefics2_encoder_forward.16}
  #allocation0 [shape = 'u32[]', space=smem, size = 0x4, offset = 0x4, fixed_abs, tag = 'smem constant byte address 0x4 - core index']
  #allocation1 [shape = 'u32[144,128]{1,0:T(1,128)}', space=vmem, size = 0x12000, scoped, tag = 'internal scratch']
  #allocation2 [shape = 'f32[8,1]{1,0:T(8,128)}', space=vmem, size = 0x1000, scoped, tag = 'scratch operand']
  #allocation3 [shape = 'f32[8,1]{1,0:T(8,128)}', space=vmem, size = 0x1000, scoped, tag = 'scratch operand']
  #allocation4 [shape = 'f32[8,128]{1,0:T(8,128)}', space=vmem, size = 0x1000, scoped, tag = 'scratch operand']
  %s0 = inlined_call_operand.vmem [shape: f32[32,1536], index: 0, kind: input, shape index: {}, may-alias: {0,1,2}]
  %s1 = inlined_call_operand.vmem [shape: f32[32,1536], index: 1, kind: input, shape index: {}, may-alias: {0,1,2}]
  %s2 = inlined_call_operand.vmem [shape: f32[32,1536], index: 2, kind: input, shape index: {}, may-alias: {0,1,2}]
  %s3 = inlined_call_operand.vmem [shape: f32[32,512], index: 3, kind: output, shape index: {}]
  %s4 = sld [smem:[#allocation0]]
  $region53: #{idefics2_encoder_forward.16} parent=0
    _
  %s6 = ssub.s32 1, %s4
  %s7 = scalar_select 0, %s6, %s4
  loop: start=0, step=1, limit=34
  $region2: #{idefics2_encoder_forward.16} parent=0 // loop_pre_header
    _
  $region3: #{idefics2_encoder_forward.16} parent=0 // loop_header
    %s9 = sphi 0, %s13
    %p10 = scmp.ge.s32.totalorder %s9, 34
    %s16 = sphi 0, %s42
    %s17 = sphi 0, %s38
    %s18 = sphi 0, %s34
    %s19 = sphi 0, %s30
    %s20 = sphi 0, %s16
    %s21 = sphi 0, %s17
    %s22 = sphi 0, %s18
    %s23 = sphi 0, %s19
    %s24 = sphi 0, %s20
    %s25 = sphi 0, %s21
    %s26 = sphi 0, %s22
    %s27 = sphi 0, %s23
    %s51 = sphi 0, %s53
    %s54 = sphi 0, %s51
    %s55 = sphi 0, %s54
    %s71 = sphi 0, %s55
    %s85 = sphi 0, %s87
    %s88 = sphi 0, %s85
    %s89 = sphi 0, %s88
    %s105 = sphi 0, %s89
    %s119 = sphi 0, %s121
    %s122 = sphi 0, %s119
    %s123 = sphi 0, %s122
    %s139 = sphi 0, %s123
    %s151 = sphi 0, %s153
    %s154 = sphi 0, %s151
    %s155 = sphi 0, %s154
    %s171 = sphi 0, %s155
  $region4: #{idefics2_encoder_forward.16} parent=0 // loop_header_branch
    %12 = sbr.rel (%p10) target = $region8
  $region5: #{idefics2_encoder_forward.16} parent=0 // loop_body
    %s14 = ssub.s32 %s9, 1
    %s15 = ssub.s32 %s9, 2
    %s28 = sadd.s32 1, %s19
    %p29 = scmp.ge.s32.totalorder %s28, 2
    %s30 = scalar_select %p29, 0, %s28
    %s31 = sadd.s32 1, %s18
    %s32 = scalar_select %p29, %s31, %s18
    %p33 = scmp.ge.s32.totalorder %s32, 2
    %s34 = scalar_select %p33, 0, %s32
    %s35 = sadd.s32 1, %s17
    %s36 = scalar_select %p33, %s35, %s17
    %p37 = scmp.ge.s32.totalorder %s36, 4
    %s38 = scalar_select %p37, 0, %s36
    %s39 = sadd.s32 1, %s16
    %s40 = scalar_select %p37, %s39, %s16
    %p41 = scmp.ge.s32.totalorder %s40, 2
    %s42 = scalar_select %p41, 0, %s40
    %s43 = smul.u32 %s16, 2
    %s44 = sadd.s32 %s43, %s18
    %s45 = smul.u32 %s42, 2
    %s46 = sadd.s32 %s45, %s34
    %s47 = ssub.s32 %s44, %s46
    %s48 = ssub.s32 %s17, %s38
    %s49 = sor.u32 %s47, %s48
    %p50 = scmp.eq.s32.totalorder %s49, 0
    %s52 = sadd.s32 %s51, 1
    %s53 = scalar_select %p50, %s51, %s52
    %p56 = pneg %p50
    %p57 = scmp.eq.s32.totalorder %s9, 31
    %p58 = por %p56, %p57
    %p59 = scmp.ne.s32.totalorder %s51, %s54
    %p60 = scmp.eq.s32.totalorder %s9, 0
    %p61 = por %p59, %p60
    %p62 = scmp.ne.s32.totalorder %s51, %s54
    %p63 = scmp.eq.s32.totalorder %s14, 31
    %p64 = por %p62, %p63
    %p65 = scmp.ne.s32.totalorder %s54, %s55
    %p66 = scmp.eq.s32.totalorder %s14, 0
    %p67 = por %p65, %p66
    %p68 = scmp.ne.s32.totalorder %s54, %s55
    %p69 = scmp.eq.s32.totalorder %s15, 31
    %p70 = por %p68, %p69
    %p72 = scmp.ne.s32.totalorder %s55, %s71
    %p73 = scmp.eq.s32.totalorder %s15, 0
    %p74 = por %p72, %p73
    %s75 = smul.u32 %s16, 2
    %s76 = sadd.s32 %s75, %s19
    %s77 = sadd.s32 %s17, 4
    %s78 = smul.u32 %s42, 2
    %s79 = sadd.s32 %s78, %s30
    %s80 = sadd.s32 %s38, 4
    %s81 = ssub.s32 %s76, %s79
    %s82 = ssub.s32 %s77, %s80
    %s83 = sor.u32 %s81, %s82
    %p84 = scmp.eq.s32.totalorder %s83, 0
    %s86 = sadd.s32 %s85, 1
    %s87 = scalar_select %p84, %s85, %s86
    %p90 = pneg %p84
    %p91 = scmp.eq.s32.totalorder %s9, 31
    %p92 = por %p90, %p91
    %p93 = scmp.ne.s32.totalorder %s85, %s88
    %p94 = scmp.eq.s32.totalorder %s9, 0
    %p95 = por %p93, %p94
    %p96 = scmp.ne.s32.totalorder %s85, %s88
    %p97 = scmp.eq.s32.totalorder %s14, 31
    %p98 = por %p96, %p97
    %p99 = scmp.ne.s32.totalorder %s88, %s89
    %p100 = scmp.eq.s32.totalorder %s14, 0
    %p101 = por %p99, %p100
    %p102 = scmp.ne.s32.totalorder %s88, %s89
    %p103 = scmp.eq.s32.totalorder %s15, 31
    %p104 = por %p102, %p103
    %p106 = scmp.ne.s32.totalorder %s89, %s105
    %p107 = scmp.eq.s32.totalorder %s15, 0
    %p108 = por %p106, %p107
    %s109 = smul.u32 %s16, 2
    %s110 = sadd.s32 %s109, %s19
    %s111 = sadd.s32 %s17, 8
    %s112 = smul.u32 %s42, 2
    %s113 = sadd.s32 %s112, %s30
    %s114 = sadd.s32 %s38, 8
    %s115 = ssub.s32 %s110, %s113
    %s116 = ssub.s32 %s111, %s114
    %s117 = sor.u32 %s115, %s116
    %p118 = scmp.eq.s32.totalorder %s117, 0
    %s120 = sadd.s32 %s119, 1
    %s121 = scalar_select %p118, %s119, %s120
    %p124 = pneg %p118
    %p125 = scmp.eq.s32.totalorder %s9, 31
    %p126 = por %p124, %p125
    %p127 = scmp.ne.s32.totalorder %s119, %s122
    %p128 = scmp.eq.s32.totalorder %s9, 0
    %p129 = por %p127, %p128
    %p130 = scmp.ne.s32.totalorder %s119, %s122
    %p131 = scmp.eq.s32.totalorder %s14, 31
    %p132 = por %p130, %p131
    %p133 = scmp.ne.s32.totalorder %s122, %s123
    %p134 = scmp.eq.s32.totalorder %s14, 0
    %p135 = por %p133, %p134
    %p136 = scmp.ne.s32.totalorder %s122, %s123
    %p137 = scmp.eq.s32.totalorder %s15, 31
    %p138 = por %p136, %p137
    %p140 = scmp.ne.s32.totalorder %s123, %s139
    %p141 = scmp.eq.s32.totalorder %s15, 0
    %p142 = por %p140, %p141
    %s143 = smul.u32 %s16, 2
    %s144 = sadd.s32 %s143, %s18
    %s145 = smul.u32 %s42, 2
    %s146 = sadd.s32 %s145, %s34
    %s147 = ssub.s32 %s144, %s146
    %s148 = ssub.s32 %s17, %s38
    %s149 = sor.u32 %s147, %s148
    %p150 = scmp.eq.s32.totalorder %s149, 0
    %s152 = sadd.s32 %s151, 1
    %s153 = scalar_select %p150, %s151, %s152
    %p156 = pneg %p150
    %p157 = scmp.eq.s32.totalorder %s9, 31
    %p158 = por %p156, %p157
    %p159 = scmp.ne.s32.totalorder %s151, %s154
    %p160 = scmp.eq.s32.totalorder %s9, 0
    %p161 = por %p159, %p160
    %p162 = scmp.ne.s32.totalorder %s151, %s154
    %p163 = scmp.eq.s32.totalorder %s14, 31
    %p164 = por %p162, %p163
    %p165 = scmp.ne.s32.totalorder %s154, %s155
    %p166 = scmp.eq.s32.totalorder %s14, 0
    %p167 = por %p165, %p166
    %p168 = scmp.ne.s32.totalorder %s154, %s155
    %p169 = scmp.eq.s32.totalorder %s15, 31
    %p170 = por %p168, %p169
    %p172 = scmp.ne.s32.totalorder %s155, %s171
    %p173 = scmp.eq.s32.totalorder %s15, 0
    %p174 = por %p172, %p173
    %p175 = scmp.le.s32.totalorder 1, %s9
    %p176 = scmp.lt.s32.totalorder %s9, 33
    %p177 = pnand %p175, %p176
    %p178 = pneg %p177
    // Predicated region
    $region9: #{idefics2_encoder_forward.16} parent=5 // pred_check
      _
    $region10: #{idefics2_encoder_forward.16} parent=5 // pred_check_branch
      %180 = sbr.rel (%p177) target = $region12
    $region11: #{idefics2_encoder_forward.16} parent=5 // pred_region
      %s181 = ssub.s32 %s9, 1
    $region12: #{idefics2_encoder_forward.16} parent=5 // pred_fallthru
      _
    %p182 = scmp.lt.s32.totalorder %s9, 32
    // Predicated region
    $region13: #{idefics2_encoder_forward.16} parent=5 // pred_check
      %p183 = pneg %p182
    $region14: #{idefics2_encoder_forward.16} parent=5 // pred_check_branch
      %185 = sbr.rel (%p183) target = $region16
    $region15: #{idefics2_encoder_forward.16} parent=5 // pred_region
      // Predicated region
      $region17: #{idefics2_encoder_forward.16} parent=15 // pred_check
        %p186 = pneg %p61
      $region18: #{idefics2_encoder_forward.16} parent=15 // pred_check_branch
        %188 = sbr.rel (%p186) target = $region20
      $region19: #{idefics2_encoder_forward.16} parent=15 // pred_region
        %s189 = smul.u32 %s16, 2
        %s190 = sadd.s32 %s189, %s18
        %p191 = scmp.lt.s32.totalorder %s190, 3
        %s192 = scalar_select %p191, %s190, 3
        %p193 = scmp.lt.s32.totalorder %s17, 11
        %s194 = scalar_select %p193, %s17, 11
        %s195 = smul.addr %s192, 12
        %s196 = sadd.s32 %s194, %s195
        %s197 = smul.addr %s196, 8
        %s198 = scalar_lea.vmem %s0, %s197
        %s199 = smul.u32 %s16, 2
        %s200 = sadd.s32 %s199, %s18
      $region20: #{idefics2_encoder_forward.16} parent=15 // pred_fallthru
        _
      // Predicated region
      $region21: #{idefics2_encoder_forward.16} parent=15 // pred_check
        %p201 = pneg %p95
      $region22: #{idefics2_encoder_forward.16} parent=15 // pred_check_branch
        %203 = sbr.rel (%p201) target = $region24
      $region23: #{idefics2_encoder_forward.16} parent=15 // pred_region
        %s204 = smul.u32 %s16, 2
        %s205 = sadd.s32 %s204, %s19
        %s206 = sadd.s32 %s17, 4
        %p207 = scmp.lt.s32.totalorder %s205, 3
        %s208 = scalar_select %p207, %s205, 3
        %p209 = scmp.lt.s32.totalorder %s206, 11
        %s210 = scalar_select %p209, %s206, 11
        %s211 = smul.addr %s208, 12
        %s212 = sadd.s32 %s210, %s211
        %s213 = smul.addr %s212, 8
        %s214 = scalar_lea.vmem %s1, %s213
        %s215 = smul.u32 %s16, 2
        %s216 = sadd.s32 %s215, %s19
        %s217 = sadd.s32 %s17, 4
      $region24: #{idefics2_encoder_forward.16} parent=15 // pred_fallthru
        _
      // Predicated region
      $region25: #{idefics2_encoder_forward.16} parent=15 // pred_check
        %p218 = pneg %p129
      $region26: #{idefics2_encoder_forward.16} parent=15 // pred_check_branch
        %220 = sbr.rel (%p218) target = $region28
      $region27: #{idefics2_encoder_forward.16} parent=15 // pred_region
        %s221 = smul.u32 %s16, 2
        %s222 = sadd.s32 %s221, %s19
        %s223 = sadd.s32 %s17, 8
        %p224 = scmp.lt.s32.totalorder %s222, 3
        %s225 = scalar_select %p224, %s222, 3
        %p226 = scmp.lt.s32.totalorder %s223, 11
        %s227 = scalar_select %p226, %s223, 11
        %s228 = smul.addr %s225, 12
        %s229 = sadd.s32 %s227, %s228
        %s230 = smul.addr %s229, 8
        %s231 = scalar_lea.vmem %s2, %s230
        %s232 = smul.u32 %s16, 2
        %s233 = sadd.s32 %s232, %s19
        %s234 = sadd.s32 %s17, 8
      $region28: #{idefics2_encoder_forward.16} parent=15 // pred_fallthru
        _
    $region16: #{idefics2_encoder_forward.16} parent=5 // pred_fallthru
      _
    %p235 = scmp.le.s32.totalorder 1, %s9
    %p236 = scmp.lt.s32.totalorder %s9, 33
    %p237 = pnand %p235, %p236
    %p238 = pneg %p237
    // Predicated region
    $region29: #{idefics2_encoder_forward.16} parent=5 // pred_check
      _
    $region30: #{idefics2_encoder_forward.16} parent=5 // pred_check_branch
      %240 = sbr.rel (%p237) target = $region32
    $region31: #{idefics2_encoder_forward.16} parent=5 // pred_region
      %s241 = ssub.s32 %s9, 1
      %s242 = smul.u32 %s20, 2
      %s243 = sadd.s32 %s242, %s22
      %p244 = scmp.lt.s32.totalorder %s243, 3
      %s245 = scalar_select %p244, %s243, 3
      %p246 = scmp.lt.s32.totalorder %s21, 11
      %s247 = scalar_select %p246, %s21, 11
      %s248 = smul.addr %s245, 12
      %s249 = sadd.s32 %s247, %s248
      %s250 = smul.addr %s249, 8
      %s251 = scalar_lea.vmem %s0, %s250
      %p252 = pneg %p67
      %p253 = pneg %p64
      %s254 = smul.u32 %s20, 2
      %s255 = sadd.s32 %s254, %s23
      %s256 = sadd.s32 %s21, 4
      %p257 = scmp.lt.s32.totalorder %s255, 3
      %s258 = scalar_select %p257, %s255, 3
      %p259 = scmp.lt.s32.totalorder %s256, 11
      %s260 = scalar_select %p259, %s256, 11
      %s261 = smul.addr %s258, 12
      %s262 = sadd.s32 %s260, %s261
      %s263 = smul.addr %s262, 8
      %s264 = scalar_lea.vmem %s1, %s263
      %p265 = pneg %p101
      %p266 = pneg %p98
      %s267 = smul.u32 %s20, 2
      %s268 = sadd.s32 %s267, %s23
      %s269 = sadd.s32 %s21, 8
      %p270 = scmp.lt.s32.totalorder %s268, 3
      %s271 = scalar_select %p270, %s268, 3
      %p272 = scmp.lt.s32.totalorder %s269, 11
      %s273 = scalar_select %p272, %s269, 11
      %s274 = smul.addr %s271, 12
      %s275 = sadd.s32 %s273, %s274
      %s276 = smul.addr %s275, 8
      %s277 = scalar_lea.vmem %s2, %s276
      %p278 = pneg %p135
      %p279 = pneg %p132
      %p280 = pneg %p167
      %p281 = pneg %p164
      %s282 = smul.u32 %s20, 2
      %s283 = sadd.s32 %s282, %s22
      %p284 = scmp.lt.s32.totalorder %s283, 3
      %s285 = scalar_select %p284, %s283, 3
      %p286 = scmp.lt.s32.totalorder %s21, 3
      %s287 = scalar_select %p286, %s21, 3
      %s288 = smul.addr %s285, 4
      %s289 = sadd.s32 %s287, %s288
      %s290 = smul.addr %s289, 8
      %s291 = scalar_lea.vmem %s3, %s290
      %s292 = smul.u32 %s20, 2
      %s293 = sadd.s32 %s292, %s22
      %p294 = scmp.lt.s32.totalorder %s293, 3
      %s295 = scalar_select %p294, %s293, 3
      %p296 = scmp.lt.s32.totalorder %s21, 11
      %s297 = scalar_select %p296, %s21, 11
      %s298 = smul.addr %s295, 12
      %s299 = sadd.s32 %s297, %s298
      %s300 = smul.addr %s299, 8
      %s301 = scalar_lea.vmem %s0, %s300
      %s302 = smul.u32 %s20, 2
      %s303 = sadd.s32 %s302, %s22
      %s304 = smul.u32 %s20, 2
      %s305 = sadd.s32 %s304, %s23
      %s306 = sadd.s32 %s21, 4
      %p307 = scmp.lt.s32.totalorder %s305, 3
      %s308 = scalar_select %p307, %s305, 3
      %p309 = scmp.lt.s32.totalorder %s306, 11
      %s310 = scalar_select %p309, %s306, 11
      %s311 = smul.addr %s308, 12
      %s312 = sadd.s32 %s310, %s311
      %s313 = smul.addr %s312, 8
      %s314 = scalar_lea.vmem %s1, %s313
      %s315 = smul.u32 %s20, 2
      %s316 = sadd.s32 %s315, %s23
      %s317 = sadd.s32 %s21, 4
      %s318 = smul.u32 %s20, 2
      %s319 = sadd.s32 %s318, %s23
      %s320 = sadd.s32 %s21, 8
      %p321 = scmp.lt.s32.totalorder %s319, 3
      %s322 = scalar_select %p321, %s319, 3
      %p323 = scmp.lt.s32.totalorder %s320, 11
      %s324 = scalar_select %p323, %s320, 11
      %s325 = smul.addr %s322, 12
      %s326 = sadd.s32 %s324, %s325
      %s327 = smul.addr %s326, 8
      %s328 = scalar_lea.vmem %s2, %s327
      %s329 = smul.u32 %s20, 2
      %s330 = sadd.s32 %s329, %s23
      %s331 = sadd.s32 %s21, 8
      %s332 = smul.u32 %s20, 2
      %s333 = sadd.s32 %s332, %s22
      %p334 = scmp.lt.s32.totalorder %s333, 3
      %s335 = scalar_select %p334, %s333, 3
      %p336 = scmp.lt.s32.totalorder %s21, 3
      %s337 = scalar_select %p336, %s21, 3
      %s338 = smul.addr %s335, 4
      %s339 = sadd.s32 %s337, %s338
      %s340 = smul.addr %s339, 8
      %s341 = scalar_lea.vmem %s3, %s340
      %s342 = smul.u32 %s20, 2
      %s343 = sadd.s32 %s342, %s22
      %p344 = scmp.eq.s32.totalorder %s23, 0
      // Predicated region
      $region33: #{idefics2_encoder_forward.16} parent=31 // pred_check
        %p345 = pneg %p344
      $region34: #{idefics2_encoder_forward.16} parent=31 // pred_check_branch
        %347 = sbr.rel (%p345) target = $region36
      $region35: #{idefics2_encoder_forward.16} parent=31 // pred_region
        %vm348 = vcmask 7168
        %349 = vst.msk [vmem:[#allocation2] sm:$0xff] %vm348, -1e+30
        %350 = vst.msk [vmem:[#allocation3] sm:$0xff] %vm348, 0.0
        %351 = vst [vmem:[#allocation4] sm:$0xff] 0.0
      $region36: #{idefics2_encoder_forward.16} parent=31 // pred_fallthru
        _
      %v352 = vld [vmem:[%s301] sm:$0xff]
      %v353 = vmul.f32 %v352, 0.35355338
      %v354 = vld [vmem:[%s314] sm:$0xff]
      %355 = vmatprep.subr.mxu0 0.0
      %356 = vmatpush1.xpose.msra.mxu0 %v354
      %357 = vmatprep.subr.mxu0 0.0
      %358 = vmatpush1.xpose.msra.mxu0 0.0
      %359 = vmatprep.subr.mxu0 0.0
      %360 = vmatpush1.xpose.msra.mxu0 0.0
      %361 = vmatprep.subr.mxu0 0.0
      %362 = vmatpush1.xpose.msra.mxu0 0.0
      %363 = vmatprep.subr.mxu0 0.0
      %364 = vmatpush1.xpose.msra.mxu0 0.0
      %365 = vmatprep.subr.mxu0 0.0
      %366 = vmatpush1.xpose.msra.mxu0 0.0
      %367 = vmatprep.subr.mxu0 0.0
      %368 = vmatpush1.xpose.msra.mxu0 0.0
      %369 = vmatprep.subr.mxu0 0.0
      %370 = vmatpush1.xpose.msra.mxu0 0.0
      %371 = vmatprep.subr.mxu0 0.0
      %372 = vmatpush1.xpose.msra.mxu0 0.0
      %373 = vmatprep.subr.mxu0 0.0
      %374 = vmatpush1.xpose.msra.mxu0 0.0
      %375 = vmatprep.subr.mxu0 0.0
      %376 = vmatpush1.xpose.msra.mxu0 0.0
      %377 = vmatprep.subr.mxu0 0.0
      %378 = vmatpush1.xpose.msra.mxu0 0.0
      %379 = vmatprep.subr.mxu0 0.0
      %380 = vmatpush1.xpose.msra.mxu0 0.0
      %381 = vmatprep.subr.mxu0 0.0
      %382 = vmatpush1.xpose.msra.mxu0 0.0
      %383 = vmatprep.subr.mxu0 0.0
      %384 = vmatpush1.xpose.msra.mxu0 0.0
      %385 = vmatprep.subr.mxu0 0.0
      %386 = vmatpush1.xpose.msra.mxu0 0.0
      %387 = vmatprep.subr.mxu0 0.0
      %388 = vmatpush1.xpose.msra.mxu0 0.0
      %389 = vmatprep.subr.mxu0 0.0
      %390 = vmatpush1.xpose.msra.mxu0 0.0
      %391 = vmatprep.subr.mxu0 0.0
      %392 = vmatpush1.xpose.msra.mxu0 0.0
      %393 = vmatprep.subr.mxu0 0.0
      %394 = vmatpush1.xpose.msra.mxu0 0.0
      %395 = vmatprep.subr.mxu0 0.0
      %396 = vmatpush1.xpose.msra.mxu0 0.0
      %397 = vmatprep.subr.mxu0 0.0
      %398 = vmatpush1.xpose.msra.mxu0 0.0
      %399 = vmatprep.subr.mxu0 0.0
      %400 = vmatpush1.xpose.msra.mxu0 0.0
      %401 = vmatprep.subr.mxu0 0.0
      %402 = vmatpush1.xpose.msra.mxu0 0.0
      %403 = vmatprep.subr.mxu0 0.0
      %404 = vmatpush1.xpose.msra.mxu0 0.0
      %405 = vmatprep.subr.mxu0 0.0
      %406 = vmatpush1.xpose.msra.mxu0 0.0
      %407 = vmatprep.subr.mxu0 0.0
      %408 = vmatpush1.xpose.msra.mxu0 0.0
      %409 = vmatprep.subr.mxu0 0.0
      %410 = vmatpush1.xpose.msra.mxu0 0.0
      %411 = vmatprep.subr.mxu0 0.0
      %412 = vmatpush1.xpose.msra.mxu0 0.0
      %413 = vmatprep.subr.mxu0 0.0
      %414 = vmatpush1.xpose.msra.mxu0 0.0
      %415 = vmatprep.subr.mxu0 0.0
      %416 = vmatpush1.xpose.msra.mxu0 0.0
      %417 = vmatprep.subr.mxu0 0.0
      %418 = vmatpush1.xpose.msra.mxu0 0.0
      %419 = vmatprep.mubr.f32.mxu0 0.0
      %420 = vmatmul.mubr.f32.gmra.mrb[0].mxu0 %v353
      %v421 = vpop.f32.mrb[0].mxu0
      %v422 = vadd.f32 0.0, %v421
      %v423 = vpop.f32.mrb[0].mxu0
      %424 = vdwg.mxu0
      %v425 = vlaneseq
      %v426 = vand.u32 %v425, 127
      %s427 = smul.u32 %s23, 8
      %v428 = vstv %s427
      %v429 = vadd.s32 %v426, %v428
      %vm430 = vcmp.lt.s32.totalorder %v429, 12
      %v431 = vsel %vm430, %v422, -1e+30
      %v432 = vld [vmem:[#allocation2] sm:$0xff]
      %vm433 = vcmask 64512
      %v434 = vsel %vm433, %v431, -inf
      %435 = vmax.xlane.f32.xlu0 %v434
      %v436 = vpop.xlane.xlu0 %435
      %v437 = vmax.f32 %v432, %v436
      %v438 = vsub.f32 %v432, %v437
      %v439 = vmul.f32 %v438, 1.442695
      %v440 = vpow.pop %v439
      %442 = vset.pattern.permute.xlu0 0
      %443 = vperm.xlu0 %442, %v437
      %v444 = vpop.permute.xlu0 %443
      %v446 = vsub.f32 %v431, %v444
      %v447 = vmul.f32 %v446, 1.442695
      %v448 = vpow.pop %v447
      %v449 = vld [vmem:[#allocation3] sm:$0xff]
      %v450 = vmul.f32 %v440, %v449
      %v451 = vsel %vm433, %v448, 0.0
      %452 = vadd.xlane.f32.xlu0 %v451
      %v453 = vpop.xlane.xlu0 %452
      %v454 = vadd.f32 %v450, %v453
      %vm455 = vcmask 7168
      %456 = vst.msk [vmem:[#allocation3] sm:$0xff] %vm455, %v454
      %v457 = vld [vmem:[#allocation4] sm:$0xff]
      %459 = vset.pattern.permute.xlu0 0
      %460 = vperm.xlu0 %459, %v440
      %v461 = vpop.permute.xlu0 %460
      %v463 = vmul.f32 %v461, %v457
      %v464 = vld [vmem:[%s328] sm:$0xff]
      %v466 = vsel %vm433, %v448, 0
      %468 = vmatprep.subr.mxu0 0.0
      %469 = vmatpush1.msra.mxu0 %v464
      %470 = vmatprep.subr.mxu0 0.0
      %471 = vmatpush1.msra.mxu0 0.0
      %472 = vmatprep.subr.mxu0 0.0
      %473 = vmatpush1.msra.mxu0 0.0
      %474 = vmatprep.subr.mxu0 0.0
      %475 = vmatpush1.msra.mxu0 0.0
      %476 = vmatprep.subr.mxu0 0.0
      %477 = vmatpush1.msra.mxu0 0.0
      %478 = vmatprep.subr.mxu0 0.0
      %479 = vmatpush1.msra.mxu0 0.0
      %480 = vmatprep.subr.mxu0 0.0
      %481 = vmatpush1.msra.mxu0 0.0
      %482 = vmatprep.subr.mxu0 0.0
      %483 = vmatpush1.msra.mxu0 0.0
      %484 = vmatprep.subr.mxu0 0.0
      %485 = vmatpush1.msra.mxu0 0.0
      %486 = vmatprep.subr.mxu0 0.0
      %487 = vmatpush1.msra.mxu0 0.0
      %488 = vmatprep.subr.mxu0 0.0
      %489 = vmatpush1.msra.mxu0 0.0
      %490 = vmatprep.subr.mxu0 0.0
      %491 = vmatpush1.msra.mxu0 0.0
      %492 = vmatprep.subr.mxu0 0.0
      %493 = vmatpush1.msra.mxu0 0.0
      %494 = vmatprep.subr.mxu0 0.0
      %495 = vmatpush1.msra.mxu0 0.0
      %496 = vmatprep.subr.mxu0 0.0
      %497 = vmatpush1.msra.mxu0 0.0
      %498 = vmatprep.subr.mxu0 0.0
      %499 = vmatpush1.msra.mxu0 0.0
      %500 = vmatprep.subr.mxu0 0.0
      %501 = vmatpush1.msra.mxu0 0.0
      %502 = vmatprep.subr.mxu0 0.0
      %503 = vmatpush1.msra.mxu0 0.0
      %504 = vmatprep.subr.mxu0 0.0
      %505 = vmatpush1.msra.mxu0 0.0
      %506 = vmatprep.subr.mxu0 0.0
      %507 = vmatpush1.msra.mxu0 0.0
      %508 = vmatprep.subr.mxu0 0.0
      %509 = vmatpush1.msra.mxu0 0.0
      %510 = vmatprep.subr.mxu0 0.0
      %511 = vmatpush1.msra.mxu0 0.0
      %512 = vmatprep.subr.mxu0 0.0
      %513 = vmatpush1.msra.mxu0 0.0
      %514 = vmatprep.subr.mxu0 0.0
      %515 = vmatpush1.msra.mxu0 0.0
      %516 = vmatprep.subr.mxu0 0.0
      %517 = vmatpush1.msra.mxu0 0.0
      %518 = vmatprep.subr.mxu0 0.0
      %519 = vmatpush1.msra.mxu0 0.0
      %520 = vmatprep.subr.mxu0 0.0
      %521 = vmatpush1.msra.mxu0 0.0
      %522 = vmatprep.subr.mxu0 0.0
      %523 = vmatpush1.msra.mxu0 0.0
      %524 = vmatprep.subr.mxu0 0.0
      %525 = vmatpush1.msra.mxu0 0.0
      %526 = vmatprep.subr.mxu0 0.0
      %527 = vmatpush1.msra.mxu0 0.0
      %528 = vmatprep.subr.mxu0 0.0
      %529 = vmatpush1.msra.mxu0 0.0
      %530 = vmatprep.subr.mxu0 0.0
      %531 = vmatpush1.msra.mxu0 0.0
      %532 = vmatprep.mubr.f32.mxu0 0.0
      %533 = vmatmul.mubr.f32.gmra.mrb[0].mxu0 %v466
      %v534 = vpop.f32.mrb[0].mxu0
      %v535 = vadd.f32 0.0, %v534
      %v536 = vpop.f32.mrb[0].mxu0
      %537 = vdwg.mxu0
      %v538 = vadd.f32 %v463, %v535
      %539 = vst [vmem:[#allocation4] sm:$0xff] %v538
      %540 = vst.msk [vmem:[#allocation2] sm:$0xff] %vm455, %v437
      %p541 = scmp.eq.s32.totalorder %s23, 1
      // Predicated region
      $region37: #{idefics2_encoder_forward.16} parent=31 // pred_check
        %p542 = pneg %p541
      $region38: #{idefics2_encoder_forward.16} parent=31 // pred_check_branch
        %544 = sbr.rel (%p542) target = $region40
      $region39: #{idefics2_encoder_forward.16} parent=31 // pred_region
        %v545 = vld [vmem:[#allocation3] sm:$0xff]
        %v546 = vrcp.pop %v545
        %v547 = vld [vmem:[#allocation4] sm:$0xff]
        %549 = vset.pattern.permute.xlu0 0
        %550 = vperm.xlu0 %549, %v546
        %v551 = vpop.permute.xlu0 %550
        %v553 = vmul.f32 %v547, %v551
        %554 = vst [vmem:[%s341] sm:$0xff] %v553
      $region40: #{idefics2_encoder_forward.16} parent=31 // pred_fallthru
        _
      %s555 = smul.u32 %s20, 2
      %s556 = sadd.s32 %s555, %s22
      %p557 = scmp.lt.s32.totalorder %s556, 3
      %s558 = scalar_select %p557, %s556, 3
      %p559 = scmp.lt.s32.totalorder %s21, 3
      %s560 = scalar_select %p559, %s21, 3
      %s561 = smul.addr %s558, 4
      %s562 = sadd.s32 %s560, %s561
      %s563 = smul.addr %s562, 8
      %s564 = scalar_lea.vmem %s3, %s563
      // Predicated region
      $region41: #{idefics2_encoder_forward.16} parent=31 // pred_check
        %p565 = pneg %p164
      $region42: #{idefics2_encoder_forward.16} parent=31 // pred_check_branch
        %567 = sbr.rel (%p565) target = $region44
      $region43: #{idefics2_encoder_forward.16} parent=31 // pred_region
        %s568 = smul.u32 %s20, 2
        %s569 = sadd.s32 %s568, %s22
      $region44: #{idefics2_encoder_forward.16} parent=31 // pred_fallthru
        _
    $region32: #{idefics2_encoder_forward.16} parent=5 // pred_fallthru
      _
    %p570 = scmp.le.s32.totalorder 2, %s9
    // Predicated region
    $region45: #{idefics2_encoder_forward.16} parent=5 // pred_check
      %p571 = pneg %p570
    $region46: #{idefics2_encoder_forward.16} parent=5 // pred_check_branch
      %573 = sbr.rel (%p571) target = $region48
    $region47: #{idefics2_encoder_forward.16} parent=5 // pred_region
      %s574 = ssub.s32 %s9, 2
      // Predicated region
      $region49: #{idefics2_encoder_forward.16} parent=47 // pred_check
        %p575 = pneg %p170
      $region50: #{idefics2_encoder_forward.16} parent=47 // pred_check_branch
        %577 = sbr.rel (%p575) target = $region52
      $region51: #{idefics2_encoder_forward.16} parent=47 // pred_region
        %s578 = smul.u32 %s24, 2
        %s579 = sadd.s32 %s578, %s26
        %p580 = scmp.lt.s32.totalorder %s579, 3
        %s581 = scalar_select %p580, %s579, 3
        %p582 = scmp.lt.s32.totalorder %s25, 3
        %s583 = scalar_select %p582, %s25, 3
        %s584 = smul.addr %s581, 4
        %s585 = sadd.s32 %s583, %s584
        %s586 = smul.addr %s585, 8
        %s587 = scalar_lea.vmem %s3, %s586
      $region52: #{idefics2_encoder_forward.16} parent=47 // pred_fallthru
        _
    $region48: #{idefics2_encoder_forward.16} parent=5 // pred_fallthru
      _
  $region6: #{idefics2_encoder_forward.16} parent=0 // loop_footer
    %s13 = sadd.s32 1, %s9
  $region7: #{idefics2_encoder_forward.16} parent=0 // loop_footer_branch
    %8 = sbr.rel target = $region3
  $region8: #{idefics2_encoder_forward.16} parent=0 // loop_exit
    _

// kernel: idefics2_encoder_forward.20
$region0: #{idefics2_encoder_forward.20}
  #allocation0 [shape = 'u32[]', space=smem, size = 0x4, offset = 0x4, fixed_abs, tag = 'smem constant byte address 0x4 - core index']
  #allocation1 [shape = 'u32[144,128]{1,0:T(1,128)}', space=vmem, size = 0x12000, scoped, tag = 'internal scratch']
  #allocation2 [shape = 'f32[8,32]{1,0:T(8,128)}', space=vmem, size = 0x1000, scoped, tag = 'scratch operand']
  %s0 = inlined_call_operand.vmem [shape: f32[32,128], index: 0, kind: input, shape index: {}]
  %s1 = inlined_call_operand.vmem [shape: f32[128,32], index: 1, kind: input, shape index: {}]
  %s2 = inlined_call_operand.vmem [shape: f32[1,32], index: 2, kind: input, shape index: {}]
  %s3 = inlined_call_operand.vmem [shape: f32[32,32], index: 3, kind: input, shape index: {}]
  %s4 = inlined_call_operand.vmem [shape: f32[32,32], index: 4, kind: output, shape index: {}]
  %s5 = sld [smem:[#allocation0]]
  $region57: #{idefics2_encoder_forward.20} parent=0
    _
  %s7 = ssub.s32 1, %s5
  %s8 = scalar_select 0, %s7, %s5
  loop: start=0, step=1, limit=6
  $region2: #{idefics2_encoder_forward.20} parent=0 // loop_pre_header
    _
  $region3: #{idefics2_encoder_forward.20} parent=0 // loop_header
    %s10 = sphi 0, %s14
    %p11 = scmp.ge.s32.totalorder %s10, 6
    %s17 = sphi 0, %s36
    %s18 = sphi 0, %s32
    %s19 = sphi 0, %s28
    %s20 = sphi 0, %s17
    %s21 = sphi 0, %s18
    %s22 = sphi 0, %s19
    %s23 = sphi 0, %s20
    %s24 = sphi 0, %s21
    %s25 = sphi 0, %s22
    %s41 = sphi 0, %s43
    %s44 = sphi 0, %s41
    %s45 = sphi 0, %s44
    %s61 = sphi 0, %s45
    %s69 = sphi 0, %s71
    %s72 = sphi 0, %s69
    %s73 = sphi 0, %s72
    %s89 = sphi 0, %s73
    %s95 = sphi 0, %s97
    %s98 = sphi 0, %s95
    %s99 = sphi 0, %s98
    %s115 = sphi 0, %s99
    %s123 = sphi 0, %s125
    %s126 = sphi 0, %s123
    %s127 = sphi 0, %s126
    %s143 = sphi 0, %s127
    %s151 = sphi 0, %s153
    %s154 = sphi 0, %s151
    %s155 = sphi 0, %s154
    %s171 = sphi 0, %s155
  $region4: #{idefics2_encoder_forward.20} parent=0 // loop_header_branch
    %13 = sbr.rel (%p11) target = $region8
  $region5: #{idefics2_encoder_forward.20} parent=0 // loop_body
    %s15 = ssub.s32 %s10, 1
    %s16 = ssub.s32 %s10, 2
    %s26 = sadd.s32 1, %s19
    %p27 = scmp.ge.s32.totalorder %s26, 1
    %s28 = scalar_select %p27, 0, %s26
    %s29 = sadd.s32 1, %s18
    %s30 = scalar_select %p27, %s29, %s18
    %p31 = scmp.ge.s32.totalorder %s30, 1
    %s32 = scalar_select %p31, 0, %s30
    %s33 = sadd.s32 1, %s17
    %s34 = scalar_select %p31, %s33, %s17
    %p35 = scmp.ge.s32.totalorder %s34, 4
    %s36 = scalar_select %p35, 0, %s34
    %s37 = ssub.s32 %s17, %s36
    %s38 = ssub.s32 %s19, %s28
    %s39 = sor.u32 %s37, %s38
    %p40 = scmp.eq.s32.totalorder %s39, 0
    %s42 = sadd.s32 %s41, 1
    %s43 = scalar_select %p40, %s41, %s42
    %p46 = pneg %p40
    %p47 = scmp.eq.s32.totalorder %s10, 3
    %p48 = por %p46, %p47
    %p49 = scmp.ne.s32.totalorder %s41, %s44
    %p50 = scmp.eq.s32.totalorder %s10, 0
    %p51 = por %p49, %p50
    %p52 = scmp.ne.s32.totalorder %s41, %s44
    %p53 = scmp.eq.s32.totalorder %s15, 3
    %p54 = por %p52, %p53
    %p55 = scmp.ne.s32.totalorder %s44, %s45
    %p56 = scmp.eq.s32.totalorder %s15, 0
    %p57 = por %p55, %p56
    %p58 = scmp.ne.s32.totalorder %s44, %s45
    %p59 = scmp.eq.s32.totalorder %s16, 3
    %p60 = por %p58, %p59
    %p62 = scmp.ne.s32.totalorder %s45, %s61
    %p63 = scmp.eq.s32.totalorder %s16, 0
    %p64 = por %p62, %p63
    %s65 = ssub.s32 %s19, %s28
    %s66 = ssub.s32 %s18, %s32
    %s67 = sor.u32 %s65, %s66
    %p68 = scmp.eq.s32.totalorder %s67, 0
    %s70 = sadd.s32 %s69, 1
    %s71 = scalar_select %p68, %s69, %s70
    %p74 = pneg %p68
    %p75 = scmp.eq.s32.totalorder %s10, 3
    %p76 = por %p74, %p75
    %p77 = scmp.ne.s32.totalorder %s69, %s72
    %p78 = scmp.eq.s32.totalorder %s10, 0
    %p79 = por %p77, %p78
    %p80 = scmp.ne.s32.totalorder %s69, %s72
    %p81 = scmp.eq.s32.totalorder %s15, 3
    %p82 = por %p80, %p81
    %p83 = scmp.ne.s32.totalorder %s72, %s73
    %p84 = scmp.eq.s32.totalorder %s15, 0
    %p85 = por %p83, %p84
    %p86 = scmp.ne.s32.totalorder %s72, %s73
    %p87 = scmp.eq.s32.totalorder %s16, 3
    %p88 = por %p86, %p87
    %p90 = scmp.ne.s32.totalorder %s73, %s89
    %p91 = scmp.eq.s32.totalorder %s16, 0
    %p92 = por %p90, %p91
    %s93 = ssub.s32 %s18, %s32
    %p94 = scmp.eq.s32.totalorder %s93, 0
    %s96 = sadd.s32 %s95, 1
    %s97 = scalar_select %p94, %s95, %s96
    %p100 = pneg %p94
    %p101 = scmp.eq.s32.totalorder %s10, 3
    %p102 = por %p100, %p101
    %p103 = scmp.ne.s32.totalorder %s95, %s98
    %p104 = scmp.eq.s32.totalorder %s10, 0
    %p105 = por %p103, %p104
    %p106 = scmp.ne.s32.totalorder %s95, %s98
    %p107 = scmp.eq.s32.totalorder %s15, 3
    %p108 = por %p106, %p107
    %p109 = scmp.ne.s32.totalorder %s98, %s99
    %p110 = scmp.eq.s32.totalorder %s15, 0
    %p111 = por %p109, %p110
    %p112 = scmp.ne.s32.totalorder %s98, %s99
    %p113 = scmp.eq.s32.totalorder %s16, 3
    %p114 = por %p112, %p113
    %p116 = scmp.ne.s32.totalorder %s99, %s115
    %p117 = scmp.eq.s32.totalorder %s16, 0
    %p118 = por %p116, %p117
    %s119 = ssub.s32 %s17, %s36
    %s120 = ssub.s32 %s18, %s32
    %s121 = sor.u32 %s119, %s120
    %p122 = scmp.eq.s32.totalorder %s121, 0
    %s124 = sadd.s32 %s123, 1
    %s125 = scalar_select %p122, %s123, %s124
    %p128 = pneg %p122
    %p129 = scmp.eq.s32.totalorder %s10, 3
    %p130 = por %p128, %p129
    %p131 = scmp.ne.s32.totalorder %s123, %s126
    %p132 = scmp.eq.s32.totalorder %s10, 0
    %p133 = por %p131, %p132
    %p134 = scmp.ne.s32.totalorder %s123, %s126
    %p135 = scmp.eq.s32.totalorder %s15, 3
    %p136 = por %p134, %p135
    %p137 = scmp.ne.s32.totalorder %s126, %s127
    %p138 = scmp.eq.s32.totalorder %s15, 0
    %p139 = por %p137, %p138
    %p140 = scmp.ne.s32.totalorder %s126, %s127
    %p141 = scmp.eq.s32.totalorder %s16, 3
    %p142 = por %p140, %p141
    %p144 = scmp.ne.s32.totalorder %s127, %s143
    %p145 = scmp.eq.s32.totalorder %s16, 0
    %p146 = por %p144, %p145
    %s147 = ssub.s32 %s17, %s36
    %s148 = ssub.s32 %s18, %s32
    %s149 = sor.u32 %s147, %s148
    %p150 = scmp.eq.s32.totalorder %s149, 0
    %s152 = sadd.s32 %s151, 1
    %s153 = scalar_select %p150, %s151, %s152
    %p156 = pneg %p150
    %p157 = scmp.eq.s32.totalorder %s10, 3
    %p158 = por %p156, %p157
    %p159 = scmp.ne.s32.totalorder %s151, %s154
    %p160 = scmp.eq.s32.totalorder %s10, 0
    %p161 = por %p159, %p160
    %p162 = scmp.ne.s32.totalorder %s151, %s154
    %p163 = scmp.eq.s32.totalorder %s15, 3
    %p164 = por %p162, %p163
    %p165 = scmp.ne.s32.totalorder %s154, %s155
    %p166 = scmp.eq.s32.totalorder %s15, 0
    %p167 = por %p165, %p166
    %p168 = scmp.ne.s32.totalorder %s154, %s155
    %p169 = scmp.eq.s32.totalorder %s16, 3
    %p170 = por %p168, %p169
    %p172 = scmp.ne.s32.totalorder %s155, %s171
    %p173 = scmp.eq.s32.totalorder %s16, 0
    %p174 = por %p172, %p173
    %p175 = scmp.le.s32.totalorder 1, %s10
    %p176 = scmp.lt.s32.totalorder %s10, 5
    %p177 = pnand %p175, %p176
    %p178 = pneg %p177
    // Predicated region
    $region9: #{idefics2_encoder_forward.20} parent=5 // pred_check
      _
    $region10: #{idefics2_encoder_forward.20} parent=5 // pred_check_branch
      %180 = sbr.rel (%p177) target = $region12
    $region11: #{idefics2_encoder_forward.20} parent=5 // pred_region
      %s181 = ssub.s32 %s10, 1
      // Predicated region
      $region13: #{idefics2_encoder_forward.20} parent=11 // pred_check
        %p182 = pneg %p85
      $region14: #{idefics2_encoder_forward.20} parent=11 // pred_check_branch
        %184 = sbr.rel (%p182) target = $region16
      $region15: #{idefics2_encoder_forward.20} parent=11 // pred_region
        %s185 = smul.u32 16, %s22
        %p186 = scmp.lt.s32.totalorder %s185, 15
        %s187 = scalar_select %p186, %s185, 15
        %p188 = scmp.lt.s32.totalorder %s21, 0
        %s189 = scalar_select %p188, %s21, 0
        %s190 = sadd.s32 %s189, %s187
        %s191 = smul.addr %s190, 8
        %s192 = scalar_lea.vmem %s1, %s191
        %s193 = smul.u32 16, %s22
      $region16: #{idefics2_encoder_forward.20} parent=11 // pred_fallthru
        _
      // Predicated region
      $region17: #{idefics2_encoder_forward.20} parent=11 // pred_check
        %p194 = pneg %p111
      $region18: #{idefics2_encoder_forward.20} parent=11 // pred_check_branch
        %196 = sbr.rel (%p194) target = $region20
      $region19: #{idefics2_encoder_forward.20} parent=11 // pred_region
        %p197 = scmp.lt.s32.totalorder %s21, 0
        %s198 = scalar_select %p197, %s21, 0
        %s199 = scalar_lea.vmem %s2, %s198
      $region20: #{idefics2_encoder_forward.20} parent=11 // pred_fallthru
        _
    $region12: #{idefics2_encoder_forward.20} parent=5 // pred_fallthru
      _
    %p200 = scmp.lt.s32.totalorder %s10, 4
    // Predicated region
    $region21: #{idefics2_encoder_forward.20} parent=5 // pred_check
      %p201 = pneg %p200
    $region22: #{idefics2_encoder_forward.20} parent=5 // pred_check_branch
      %203 = sbr.rel (%p201) target = $region24
    $region23: #{idefics2_encoder_forward.20} parent=5 // pred_region
      // Predicated region
      $region25: #{idefics2_encoder_forward.20} parent=23 // pred_check
        %p204 = pneg %p51
      $region26: #{idefics2_encoder_forward.20} parent=23 // pred_check_branch
        %206 = sbr.rel (%p204) target = $region28
      $region27: #{idefics2_encoder_forward.20} parent=23 // pred_region
        %p207 = scmp.lt.s32.totalorder %s17, 3
        %s208 = scalar_select %p207, %s17, 3
        %p209 = scmp.lt.s32.totalorder %s19, 0
        %s210 = scalar_select %p209, %s19, 0
        %s211 = sadd.s32 %s210, %s208
        %s212 = smul.addr %s211, 8
        %s213 = scalar_lea.vmem %s0, %s212
      $region28: #{idefics2_encoder_forward.20} parent=23 // pred_fallthru
        _
      // Predicated region
      $region29: #{idefics2_encoder_forward.20} parent=23 // pred_check
        %p214 = pneg %p133
      $region30: #{idefics2_encoder_forward.20} parent=23 // pred_check_branch
        %216 = sbr.rel (%p214) target = $region32
      $region31: #{idefics2_encoder_forward.20} parent=23 // pred_region
        %p217 = scmp.lt.s32.totalorder %s17, 3
        %s218 = scalar_select %p217, %s17, 3
        %p219 = scmp.lt.s32.totalorder %s18, 0
        %s220 = scalar_select %p219, %s18, 0
        %s221 = sadd.s32 %s220, %s218
        %s222 = smul.addr %s221, 8
        %s223 = scalar_lea.vmem %s3, %s222
      $region32: #{idefics2_encoder_forward.20} parent=23 // pred_fallthru
        _
    $region24: #{idefics2_encoder_forward.20} parent=5 // pred_fallthru
      _
    %p224 = scmp.le.s32.totalorder 1, %s10
    %p225 = scmp.lt.s32.totalorder %s10, 5
    %p226 = pnand %p224, %p225
    %p227 = pneg %p226
    // Predicated region
    $region33: #{idefics2_encoder_forward.20} parent=5 // pred_check
      _
    $region34: #{idefics2_encoder_forward.20} parent=5 // pred_check_branch
      %229 = sbr.rel (%p226) target = $region36
    $region35: #{idefics2_encoder_forward.20} parent=5 // pred_region
      %s230 = ssub.s32 %s10, 1
      %p231 = scmp.lt.s32.totalorder %s20, 3
      %s232 = scalar_select %p231, %s20, 3
      %p233 = scmp.lt.s32.totalorder %s22, 0
      %s234 = scalar_select %p233, %s22, 0
      %s235 = sadd.s32 %s234, %s232
      %s236 = smul.addr %s235, 8
      %s237 = scalar_lea.vmem %s0, %s236
      %p238 = pneg %p57
      %p239 = pneg %p54
      %s240 = smul.u32 16, %s22
      %p241 = scmp.lt.s32.totalorder %s240, 15
      %s242 = scalar_select %p241, %s240, 15
      %p243 = scmp.lt.s32.totalorder %s21, 0
      %s244 = scalar_select %p243, %s21, 0
      %s245 = sadd.s32 %s244, %s242
      %s246 = smul.addr %s245, 8
      %s247 = scalar_lea.vmem %s1, %s246
      %p248 = pneg %p85
      %p249 = pneg %p82
      %p250 = scmp.lt.s32.totalorder %s21, 0
      %s251 = scalar_select %p250, %s21, 0
      %s252 = scalar_lea.vmem %s2, %s251
      %p253 = pneg %p111
      %p254 = pneg %p108
      %p255 = scmp.lt.s32.totalorder %s20, 3
      %s256 = scalar_select %p255, %s20, 3
      %p257 = scmp.lt.s32.totalorder %s21, 0
      %s258 = scalar_select %p257, %s21, 0
      %s259 = sadd.s32 %s258, %s256
      %s260 = smul.addr %s259, 8
      %s261 = scalar_lea.vmem %s3, %s260
      %p262 = pneg %p139
      %p263 = pneg %p136
      %p264 = pneg %p167
      %p265 = pneg %p164
      %p266 = scmp.lt.s32.totalorder %s20, 3
      %s267 = scalar_select %p266, %s20, 3
      %p268 = scmp.lt.s32.totalorder %s21, 0
      %s269 = scalar_select %p268, %s21, 0
      %s270 = sadd.s32 %s269, %s267
      %s271 = smul.addr %s270, 8
      %s272 = scalar_lea.vmem %s4, %s271
      %p273 = scmp.lt.s32.totalorder %s20, 3
      %s274 = scalar_select %p273, %s20, 3
      %p275 = scmp.lt.s32.totalorder %s22, 0
      %s276 = scalar_select %p275, %s22, 0
      %s277 = sadd.s32 %s276, %s274
      %s278 = smul.addr %s277, 8
      %s279 = scalar_lea.vmem %s0, %s278
      %s280 = smul.u32 16, %s22
      %p281 = scmp.lt.s32.totalorder %s280, 15
      %s282 = scalar_select %p281, %s280, 15
      %p283 = scmp.lt.s32.totalorder %s21, 0
      %s284 = scalar_select %p283, %s21, 0
      %s285 = sadd.s32 %s284, %s282
      %s286 = smul.addr %s285, 8
      %s287 = scalar_lea.vmem %s1, %s286
      %s288 = smul.u32 16, %s22
      %p289 = scmp.lt.s32.totalorder %s21, 0
      %s290 = scalar_select %p289, %s21, 0
      %s291 = scalar_lea.vmem %s2, %s290
      %p292 = scmp.lt.s32.totalorder %s20, 3
      %s293 = scalar_select %p292, %s20, 3
      %p294 = scmp.lt.s32.totalorder %s21, 0
      %s295 = scalar_select %p294, %s21, 0
      %s296 = sadd.s32 %s295, %s293
      %s297 = smul.addr %s296, 8
      %s298 = scalar_lea.vmem %s3, %s297
      %p299 = scmp.lt.s32.totalorder %s20, 3
      %s300 = scalar_select %p299, %s20, 3
      %p301 = scmp.lt.s32.totalorder %s21, 0
      %s302 = scalar_select %p301, %s21, 0
      %s303 = sadd.s32 %s302, %s300
      %s304 = smul.addr %s303, 8
      %s305 = scalar_lea.vmem %s4, %s304
      %p306 = scmp.eq.s32.totalorder %s22, 0
      // Predicated region
      $region37: #{idefics2_encoder_forward.20} parent=35 // pred_check
        %p307 = pneg %p306
      $region38: #{idefics2_encoder_forward.20} parent=35 // pred_check_branch
        %309 = sbr.rel (%p307) target = $region40
      $region39: #{idefics2_encoder_forward.20} parent=35 // pred_region
        %vm310 = vcmask 261120
        %311 = vst.msk [vmem:[#allocation2] sm:$0xff] %vm310, 0.0
      $region40: #{idefics2_encoder_forward.20} parent=35 // pred_fallthru
        _
      %v312 = vld [vmem:[#allocation2] sm:$0xff]
      %v313 = vld [vmem:[%s279] sm:$0xff]
      %v314 = vld [vmem:[%s287] sm:$0xff]
      %v315 = vld [vmem:[%s287 + $0x8] sm:$0xff]
      %v316 = vld [vmem:[%s287 + $0x10] sm:$0xff]
      %v317 = vld [vmem:[%s287 + $0x18] sm:$0xff]
      %v318 = vld [vmem:[%s287 + $0x20] sm:$0xff]
      %v319 = vld [vmem:[%s287 + $0x28] sm:$0xff]
      %v320 = vld [vmem:[%s287 + $0x30] sm:$0xff]
      %v321 = vld [vmem:[%s287 + $0x38] sm:$0xff]
      %v322 = vld [vmem:[%s287 + $0x40] sm:$0xff]
      %v323 = vld [vmem:[%s287 + $0x48] sm:$0xff]
      %v324 = vld [vmem:[%s287 + $0x50] sm:$0xff]
      %v325 = vld [vmem:[%s287 + $0x58] sm:$0xff]
      %v326 = vld [vmem:[%s287 + $0x60] sm:$0xff]
      %v327 = vld [vmem:[%s287 + $0x68] sm:$0xff]
      %v328 = vld [vmem:[%s287 + $0x70] sm:$0xff]
      %v329 = vld [vmem:[%s287 + $0x78] sm:$0xff]
      %330 = vmatprep.subr.mxu0 0.0
      %331 = vmatpush1.msra.mxu0 %v314
      %332 = vmatprep.subr.mxu0 0.0
      %333 = vmatpush1.msra.mxu0 %v315
      %334 = vmatprep.subr.mxu0 0.0
      %335 = vmatpush1.msra.mxu0 %v316
      %336 = vmatprep.subr.mxu0 0.0
      %337 = vmatpush1.msra.mxu0 %v317
      %338 = vmatprep.subr.mxu0 0.0
      %339 = vmatpush1.msra.mxu0 %v318
      %340 = vmatprep.subr.mxu0 0.0
      %341 = vmatpush1.msra.mxu0 %v319
      %342 = vmatprep.subr.mxu0 0.0
      %343 = vmatpush1.msra.mxu0 %v320
      %344 = vmatprep.subr.mxu0 0.0
      %345 = vmatpush1.msra.mxu0 %v321
      %346 = vmatprep.subr.mxu0 0.0
      %347 = vmatpush1.msra.mxu0 %v322
      %348 = vmatprep.subr.mxu0 0.0
      %349 = vmatpush1.msra.mxu0 %v323
      %350 = vmatprep.subr.mxu0 0.0
      %351 = vmatpush1.msra.mxu0 %v324
      %352 = vmatprep.subr.mxu0 0.0
      %353 = vmatpush1.msra.mxu0 %v325
      %354 = vmatprep.subr.mxu0 0.0
      %355 = vmatpush1.msra.mxu0 %v326
      %356 = vmatprep.subr.mxu0 0.0
      %357 = vmatpush1.msra.mxu0 %v327
      %358 = vmatprep.subr.mxu0 0.0
      %359 = vmatpush1.msra.mxu0 %v328
      %360 = vmatprep.subr.mxu0 0.0
      %361 = vmatpush1.msra.mxu0 %v329
      %362 = vmatprep.subr.mxu0 0.0
      %363 = vmatpush1.msra.mxu0 0.0
      %364 = vmatprep.subr.mxu0 0.0
      %365 = vmatpush1.msra.mxu0 0.0
      %366 = vmatprep.subr.mxu0 0.0
      %367 = vmatpush1.msra.mxu0 0.0
      %368 = vmatprep.subr.mxu0 0.0
      %369 = vmatpush1.msra.mxu0 0.0
      %370 = vmatprep.subr.mxu0 0.0
      %371 = vmatpush1.msra.mxu0 0.0
      %372 = vmatprep.subr.mxu0 0.0
      %373 = vmatpush1.msra.mxu0 0.0
      %374 = vmatprep.subr.mxu0 0.0
      %375 = vmatpush1.msra.mxu0 0.0
      %376 = vmatprep.subr.mxu0 0.0
      %377 = vmatpush1.msra.mxu0 0.0
      %378 = vmatprep.subr.mxu0 0.0
      %379 = vmatpush1.msra.mxu0 0.0
      %380 = vmatprep.subr.mxu0 0.0
      %381 = vmatpush1.msra.mxu0 0.0
      %382 = vmatprep.subr.mxu0 0.0
      %383 = vmatpush1.msra.mxu0 0.0
      %384 = vmatprep.subr.mxu0 0.0
      %385 = vmatpush1.msra.mxu0 0.0
      %386 = vmatprep.subr.mxu0 0.0
      %387 = vmatpush1.msra.mxu0 0.0
      %388 = vmatprep.subr.mxu0 0.0
      %389 = vmatpush1.msra.mxu0 0.0
      %390 = vmatprep.subr.mxu0 0.0
      %391 = vmatpush1.msra.mxu0 0.0
      %392 = vmatprep.subr.mxu0 0.0
      %393 = vmatpush1.msra.mxu0 0.0
      %394 = vmatprep.mubr.f32.mxu0 0.0
      %395 = vmatmul.mubr.f32.gmra.mrb[0].mxu0 %v313
      %v396 = vpop.f32.mrb[0].mxu0
      %v397 = vadd.f32 0.0, %v396
      %v398 = vpop.f32.mrb[0].mxu0
      %399 = vdwg.mxu0
      %v400 = vadd.f32 %v312, %v397
      %vm401 = vcmask 261120
      %402 = vst.msk [vmem:[#allocation2] sm:$0xff] %vm401, %v400
      // Predicated region
      $region41: #{idefics2_encoder_forward.20} parent=35 // pred_check
        %p403 = pneg %p306
      $region42: #{idefics2_encoder_forward.20} parent=35 // pred_check_branch
        %405 = sbr.rel (%p403) target = $region44
      $region43: #{idefics2_encoder_forward.20} parent=35 // pred_region
        %v406 = vld [vmem:[#allocation2] sm:$0xff]
        %v407 = vld [vmem:[%s291] sm:$0x1]
        %v409 = vlaneseq
        %v410 = vshrl.u32 %v409, 7
        %v411 = vsub.s32 0, %v410
        %v412 = vrot.slane %v407, %v411
        %v414 = vadd.f32 %v406, %v412
        %v415 = vld [vmem:[%s298] sm:$0xff]
        %v416 = vadd.f32 %v414, %v415
        %417 = vst.msk [vmem:[%s305] sm:$0xff] %vm401, %v416
      $region44: #{idefics2_encoder_forward.20} parent=35 // pred_fallthru
        _
      %p418 = scmp.lt.s32.totalorder %s20, 3
      %s419 = scalar_select %p418, %s20, 3
      %p420 = scmp.lt.s32.totalorder %s21, 0
      %s421 = scalar_select %p420, %s21, 0
      %s422 = sadd.s32 %s421, %s419
      %s423 = smul.addr %s422, 8
      %s424 = scalar_lea.vmem %s4, %s423
      // Predicated region
      $region45: #{idefics2_encoder_forward.20} parent=35 // pred_check
        %p425 = pneg %p164
      $region46: #{idefics2_encoder_forward.20} parent=35 // pred_check_branch
        %427 = sbr.rel (%p425) target = $region48
      $region47: #{idefics2_encoder_forward.20} parent=35 // pred_region
        _
      $region48: #{idefics2_encoder_forward.20} parent=35 // pred_fallthru
        _
    $region36: #{idefics2_encoder_forward.20} parent=5 // pred_fallthru
      _
    %p428 = scmp.le.s32.totalorder 2, %s10
    // Predicated region
    $region49: #{idefics2_encoder_forward.20} parent=5 // pred_check
      %p429 = pneg %p428
    $region50: #{idefics2_encoder_forward.20} parent=5 // pred_check_branch
      %431 = sbr.rel (%p429) target = $region52
    $region51: #{idefics2_encoder_forward.20} parent=5 // pred_region
      %s432 = ssub.s32 %s10, 2
      // Predicated region
      $region53: #{idefics2_encoder_forward.20} parent=51 // pred_check
        %p433 = pneg %p170
      $region54: #{idefics2_encoder_forward.20} parent=51 // pred_check_branch
        %435 = sbr.rel (%p433) target = $region56
      $region55: #{idefics2_encoder_forward.20} parent=51 // pred_region
        %p436 = scmp.lt.s32.totalorder %s23, 3
        %s437 = scalar_select %p436, %s23, 3
        %p438 = scmp.lt.s32.totalorder %s24, 0
        %s439 = scalar_select %p438, %s24, 0
        %s440 = sadd.s32 %s439, %s437
        %s441 = smul.addr %s440, 8
        %s442 = scalar_lea.vmem %s4, %s441
      $region56: #{idefics2_encoder_forward.20} parent=51 // pred_fallthru
        _
    $region52: #{idefics2_encoder_forward.20} parent=5 // pred_fallthru
      _
  $region6: #{idefics2_encoder_forward.20} parent=0 // loop_footer
    %s14 = sadd.s32 1, %s10
  $region7: #{idefics2_encoder_forward.20} parent=0 // loop_footer_branch
    %9 = sbr.rel target = $region3
  $region8: #{idefics2_encoder_forward.20} parent=0 // loop_exit
    _

// kernel: idefics2_encoder_forward.19
$region0: #{idefics2_encoder_forward.19}
  #allocation0 [shape = 'u32[]', space=smem, size = 0x4, offset = 0x4, fixed_abs, tag = 'smem constant byte address 0x4 - core index']
  #allocation1 [shape = 'u32[144,128]{1,0:T(1,128)}', space=vmem, size = 0x12000, scoped, tag = 'internal scratch']
  #allocation2 [shape = 'f32[8,128]{1,0:T(8,128)}', space=vmem, size = 0x1000, scoped, tag = 'scratch operand']
  %s0 = inlined_call_operand.vmem [shape: f32[32,32], index: 0, kind: input, shape index: {}]
  %s1 = inlined_call_operand.vmem [shape: f32[32,128], index: 1, kind: input, shape index: {}]
  %s2 = inlined_call_operand.vmem [shape: f32[1,128], index: 2, kind: input, shape index: {}]
  %s3 = inlined_call_operand.vmem [shape: f32[32,128], index: 3, kind: output, shape index: {}]
  %s4 = sld [smem:[#allocation0]]
  $region53: #{idefics2_encoder_forward.19} parent=0
    _
  %s6 = ssub.s32 1, %s4
  %s7 = scalar_select 0, %s6, %s4
  loop: start=0, step=1, limit=6
  $region2: #{idefics2_encoder_forward.19} parent=0 // loop_pre_header
    _
  $region3: #{idefics2_encoder_forward.19} parent=0 // loop_header
    %s9 = sphi 0, %s13
    %p10 = scmp.ge.s32.totalorder %s9, 6
    %s16 = sphi 0, %s35
    %s17 = sphi 0, %s31
    %s18 = sphi 0, %s27
    %s19 = sphi 0, %s16
    %s20 = sphi 0, %s17
    %s21 = sphi 0, %s18
    %s22 = sphi 0, %s19
    %s23 = sphi 0, %s20
    %s24 = sphi 0, %s21
    %s40 = sphi 0, %s42
    %s43 = sphi 0, %s40
    %s44 = sphi 0, %s43
    %s60 = sphi 0, %s44
    %s68 = sphi 0, %s70
    %s71 = sphi 0, %s68
    %s72 = sphi 0, %s71
    %s88 = sphi 0, %s72
    %s94 = sphi 0, %s96
    %s97 = sphi 0, %s94
    %s98 = sphi 0, %s97
    %s114 = sphi 0, %s98
    %s122 = sphi 0, %s124
    %s125 = sphi 0, %s122
    %s126 = sphi 0, %s125
    %s142 = sphi 0, %s126
  $region4: #{idefics2_encoder_forward.19} parent=0 // loop_header_branch
    %12 = sbr.rel (%p10) target = $region8
  $region5: #{idefics2_encoder_forward.19} parent=0 // loop_body
    %s14 = ssub.s32 %s9, 1
    %s15 = ssub.s32 %s9, 2
    %s25 = sadd.s32 1, %s18
    %p26 = scmp.ge.s32.totalorder %s25, 1
    %s27 = scalar_select %p26, 0, %s25
    %s28 = sadd.s32 1, %s17
    %s29 = scalar_select %p26, %s28, %s17
    %p30 = scmp.ge.s32.totalorder %s29, 1
    %s31 = scalar_select %p30, 0, %s29
    %s32 = sadd.s32 1, %s16
    %s33 = scalar_select %p30, %s32, %s16
    %p34 = scmp.ge.s32.totalorder %s33, 4
    %s35 = scalar_select %p34, 0, %s33
    %s36 = ssub.s32 %s16, %s35
    %s37 = ssub.s32 %s18, %s27
    %s38 = sor.u32 %s36, %s37
    %p39 = scmp.eq.s32.totalorder %s38, 0
    %s41 = sadd.s32 %s40, 1
    %s42 = scalar_select %p39, %s40, %s41
    %p45 = pneg %p39
    %p46 = scmp.eq.s32.totalorder %s9, 3
    %p47 = por %p45, %p46
    %p48 = scmp.ne.s32.totalorder %s40, %s43
    %p49 = scmp.eq.s32.totalorder %s9, 0
    %p50 = por %p48, %p49
    %p51 = scmp.ne.s32.totalorder %s40, %s43
    %p52 = scmp.eq.s32.totalorder %s14, 3
    %p53 = por %p51, %p52
    %p54 = scmp.ne.s32.totalorder %s43, %s44
    %p55 = scmp.eq.s32.totalorder %s14, 0
    %p56 = por %p54, %p55
    %p57 = scmp.ne.s32.totalorder %s43, %s44
    %p58 = scmp.eq.s32.totalorder %s15, 3
    %p59 = por %p57, %p58
    %p61 = scmp.ne.s32.totalorder %s44, %s60
    %p62 = scmp.eq.s32.totalorder %s15, 0
    %p63 = por %p61, %p62
    %s64 = ssub.s32 %s18, %s27
    %s65 = ssub.s32 %s17, %s31
    %s66 = sor.u32 %s64, %s65
    %p67 = scmp.eq.s32.totalorder %s66, 0
    %s69 = sadd.s32 %s68, 1
    %s70 = scalar_select %p67, %s68, %s69
    %p73 = pneg %p67
    %p74 = scmp.eq.s32.totalorder %s9, 3
    %p75 = por %p73, %p74
    %p76 = scmp.ne.s32.totalorder %s68, %s71
    %p77 = scmp.eq.s32.totalorder %s9, 0
    %p78 = por %p76, %p77
    %p79 = scmp.ne.s32.totalorder %s68, %s71
    %p80 = scmp.eq.s32.totalorder %s14, 3
    %p81 = por %p79, %p80
    %p82 = scmp.ne.s32.totalorder %s71, %s72
    %p83 = scmp.eq.s32.totalorder %s14, 0
    %p84 = por %p82, %p83
    %p85 = scmp.ne.s32.totalorder %s71, %s72
    %p86 = scmp.eq.s32.totalorder %s15, 3
    %p87 = por %p85, %p86
    %p89 = scmp.ne.s32.totalorder %s72, %s88
    %p90 = scmp.eq.s32.totalorder %s15, 0
    %p91 = por %p89, %p90
    %s92 = ssub.s32 %s17, %s31
    %p93 = scmp.eq.s32.totalorder %s92, 0
    %s95 = sadd.s32 %s94, 1
    %s96 = scalar_select %p93, %s94, %s95
    %p99 = pneg %p93
    %p100 = scmp.eq.s32.totalorder %s9, 3
    %p101 = por %p99, %p100
    %p102 = scmp.ne.s32.totalorder %s94, %s97
    %p103 = scmp.eq.s32.totalorder %s9, 0
    %p104 = por %p102, %p103
    %p105 = scmp.ne.s32.totalorder %s94, %s97
    %p106 = scmp.eq.s32.totalorder %s14, 3
    %p107 = por %p105, %p106
    %p108 = scmp.ne.s32.totalorder %s97, %s98
    %p109 = scmp.eq.s32.totalorder %s14, 0
    %p110 = por %p108, %p109
    %p111 = scmp.ne.s32.totalorder %s97, %s98
    %p112 = scmp.eq.s32.totalorder %s15, 3
    %p113 = por %p111, %p112
    %p115 = scmp.ne.s32.totalorder %s98, %s114
    %p116 = scmp.eq.s32.totalorder %s15, 0
    %p117 = por %p115, %p116
    %s118 = ssub.s32 %s16, %s35
    %s119 = ssub.s32 %s17, %s31
    %s120 = sor.u32 %s118, %s119
    %p121 = scmp.eq.s32.totalorder %s120, 0
    %s123 = sadd.s32 %s122, 1
    %s124 = scalar_select %p121, %s122, %s123
    %p127 = pneg %p121
    %p128 = scmp.eq.s32.totalorder %s9, 3
    %p129 = por %p127, %p128
    %p130 = scmp.ne.s32.totalorder %s122, %s125
    %p131 = scmp.eq.s32.totalorder %s9, 0
    %p132 = por %p130, %p131
    %p133 = scmp.ne.s32.totalorder %s122, %s125
    %p134 = scmp.eq.s32.totalorder %s14, 3
    %p135 = por %p133, %p134
    %p136 = scmp.ne.s32.totalorder %s125, %s126
    %p137 = scmp.eq.s32.totalorder %s14, 0
    %p138 = por %p136, %p137
    %p139 = scmp.ne.s32.totalorder %s125, %s126
    %p140 = scmp.eq.s32.totalorder %s15, 3
    %p141 = por %p139, %p140
    %p143 = scmp.ne.s32.totalorder %s126, %s142
    %p144 = scmp.eq.s32.totalorder %s15, 0
    %p145 = por %p143, %p144
    %p146 = scmp.le.s32.totalorder 1, %s9
    %p147 = scmp.lt.s32.totalorder %s9, 5
    %p148 = pnand %p146, %p147
    %p149 = pneg %p148
    // Predicated region
    $region9: #{idefics2_encoder_forward.19} parent=5 // pred_check
      _
    $region10: #{idefics2_encoder_forward.19} parent=5 // pred_check_branch
      %151 = sbr.rel (%p148) target = $region12
    $region11: #{idefics2_encoder_forward.19} parent=5 // pred_region
      %s152 = ssub.s32 %s9, 1
      // Predicated region
      $region13: #{idefics2_encoder_forward.19} parent=11 // pred_check
        %p153 = pneg %p84
      $region14: #{idefics2_encoder_forward.19} parent=11 // pred_check_branch
        %155 = sbr.rel (%p153) target = $region16
      $region15: #{idefics2_encoder_forward.19} parent=11 // pred_region
        %s156 = smul.u32 4, %s21
        %p157 = scmp.lt.s32.totalorder %s156, 3
        %s158 = scalar_select %p157, %s156, 3
        %p159 = scmp.lt.s32.totalorder %s20, 0
        %s160 = scalar_select %p159, %s20, 0
        %s161 = sadd.s32 %s160, %s158
        %s162 = smul.addr %s161, 8
        %s163 = scalar_lea.vmem %s1, %s162
        %s164 = smul.u32 4, %s21
      $region16: #{idefics2_encoder_forward.19} parent=11 // pred_fallthru
        _
      // Predicated region
      $region17: #{idefics2_encoder_forward.19} parent=11 // pred_check
        %p165 = pneg %p110
      $region18: #{idefics2_encoder_forward.19} parent=11 // pred_check_branch
        %167 = sbr.rel (%p165) target = $region20
      $region19: #{idefics2_encoder_forward.19} parent=11 // pred_region
        %p168 = scmp.lt.s32.totalorder %s20, 0
        %s169 = scalar_select %p168, %s20, 0
        %s170 = scalar_lea.vmem %s2, %s169
      $region20: #{idefics2_encoder_forward.19} parent=11 // pred_fallthru
        _
    $region12: #{idefics2_encoder_forward.19} parent=5 // pred_fallthru
      _
    %p171 = scmp.lt.s32.totalorder %s9, 4
    // Predicated region
    $region21: #{idefics2_encoder_forward.19} parent=5 // pred_check
      %p172 = pneg %p171
    $region22: #{idefics2_encoder_forward.19} parent=5 // pred_check_branch
      %174 = sbr.rel (%p172) target = $region24
    $region23: #{idefics2_encoder_forward.19} parent=5 // pred_region
      // Predicated region
      $region25: #{idefics2_encoder_forward.19} parent=23 // pred_check
        %p175 = pneg %p50
      $region26: #{idefics2_encoder_forward.19} parent=23 // pred_check_branch
        %177 = sbr.rel (%p175) target = $region28
      $region27: #{idefics2_encoder_forward.19} parent=23 // pred_region
        %p178 = scmp.lt.s32.totalorder %s16, 3
        %s179 = scalar_select %p178, %s16, 3
        %p180 = scmp.lt.s32.totalorder %s18, 0
        %s181 = scalar_select %p180, %s18, 0
        %s182 = sadd.s32 %s181, %s179
        %s183 = smul.addr %s182, 8
        %s184 = scalar_lea.vmem %s0, %s183
      $region28: #{idefics2_encoder_forward.19} parent=23 // pred_fallthru
        _
    $region24: #{idefics2_encoder_forward.19} parent=5 // pred_fallthru
      _
    %p185 = scmp.le.s32.totalorder 1, %s9
    %p186 = scmp.lt.s32.totalorder %s9, 5
    %p187 = pnand %p185, %p186
    %p188 = pneg %p187
    // Predicated region
    $region29: #{idefics2_encoder_forward.19} parent=5 // pred_check
      _
    $region30: #{idefics2_encoder_forward.19} parent=5 // pred_check_branch
      %190 = sbr.rel (%p187) target = $region32
    $region31: #{idefics2_encoder_forward.19} parent=5 // pred_region
      %s191 = ssub.s32 %s9, 1
      %p192 = scmp.lt.s32.totalorder %s19, 3
      %s193 = scalar_select %p192, %s19, 3
      %p194 = scmp.lt.s32.totalorder %s21, 0
      %s195 = scalar_select %p194, %s21, 0
      %s196 = sadd.s32 %s195, %s193
      %s197 = smul.addr %s196, 8
      %s198 = scalar_lea.vmem %s0, %s197
      %p199 = pneg %p56
      %p200 = pneg %p53
      %s201 = smul.u32 4, %s21
      %p202 = scmp.lt.s32.totalorder %s201, 3
      %s203 = scalar_select %p202, %s201, 3
      %p204 = scmp.lt.s32.totalorder %s20, 0
      %s205 = scalar_select %p204, %s20, 0
      %s206 = sadd.s32 %s205, %s203
      %s207 = smul.addr %s206, 8
      %s208 = scalar_lea.vmem %s1, %s207
      %p209 = pneg %p84
      %p210 = pneg %p81
      %p211 = scmp.lt.s32.totalorder %s20, 0
      %s212 = scalar_select %p211, %s20, 0
      %s213 = scalar_lea.vmem %s2, %s212
      %p214 = pneg %p110
      %p215 = pneg %p107
      %p216 = pneg %p138
      %p217 = pneg %p135
      %p218 = scmp.lt.s32.totalorder %s19, 3
      %s219 = scalar_select %p218, %s19, 3
      %p220 = scmp.lt.s32.totalorder %s20, 0
      %s221 = scalar_select %p220, %s20, 0
      %s222 = sadd.s32 %s221, %s219
      %s223 = smul.addr %s222, 8
      %s224 = scalar_lea.vmem %s3, %s223
      %p225 = scmp.lt.s32.totalorder %s19, 3
      %s226 = scalar_select %p225, %s19, 3
      %p227 = scmp.lt.s32.totalorder %s21, 0
      %s228 = scalar_select %p227, %s21, 0
      %s229 = sadd.s32 %s228, %s226
      %s230 = smul.addr %s229, 8
      %s231 = scalar_lea.vmem %s0, %s230
      %s232 = smul.u32 4, %s21
      %p233 = scmp.lt.s32.totalorder %s232, 3
      %s234 = scalar_select %p233, %s232, 3
      %p235 = scmp.lt.s32.totalorder %s20, 0
      %s236 = scalar_select %p235, %s20, 0
      %s237 = sadd.s32 %s236, %s234
      %s238 = smul.addr %s237, 8
      %s239 = scalar_lea.vmem %s1, %s238
      %s240 = smul.u32 4, %s21
      %p241 = scmp.lt.s32.totalorder %s20, 0
      %s242 = scalar_select %p241, %s20, 0
      %s243 = scalar_lea.vmem %s2, %s242
      %p244 = scmp.lt.s32.totalorder %s19, 3
      %s245 = scalar_select %p244, %s19, 3
      %p246 = scmp.lt.s32.totalorder %s20, 0
      %s247 = scalar_select %p246, %s20, 0
      %s248 = sadd.s32 %s247, %s245
      %s249 = smul.addr %s248, 8
      %s250 = scalar_lea.vmem %s3, %s249
      %p251 = scmp.eq.s32.totalorder %s21, 0
      // Predicated region
      $region33: #{idefics2_encoder_forward.19} parent=31 // pred_check
        %p252 = pneg %p251
      $region34: #{idefics2_encoder_forward.19} parent=31 // pred_check_branch
        %254 = sbr.rel (%p252) target = $region36
      $region35: #{idefics2_encoder_forward.19} parent=31 // pred_region
        %255 = vst [vmem:[#allocation2] sm:$0xff] 0.0
      $region36: #{idefics2_encoder_forward.19} parent=31 // pred_fallthru
        _
      %v256 = vld [vmem:[#allocation2] sm:$0xff]
      %v257 = vld [vmem:[%s231] sm:$0xff]
      %v258 = vld [vmem:[%s239] sm:$0xff]
      %v259 = vld [vmem:[%s239 + $0x8] sm:$0xff]
      %v260 = vld [vmem:[%s239 + $0x10] sm:$0xff]
      %v261 = vld [vmem:[%s239 + $0x18] sm:$0xff]
      %vm262 = vcmask 261120
      %v264 = vsel %vm262, %v257, 0
      %266 = vmatprep.subr.mxu0 0.0
      %267 = vmatpush1.msra.mxu0 %v258
      %268 = vmatprep.subr.mxu0 0.0
      %269 = vmatpush1.msra.mxu0 %v259
      %270 = vmatprep.subr.mxu0 0.0
      %271 = vmatpush1.msra.mxu0 %v260
      %272 = vmatprep.subr.mxu0 0.0
      %273 = vmatpush1.msra.mxu0 %v261
      %274 = vmatprep.subr.mxu0 0.0
      %275 = vmatpush1.msra.mxu0 0.0
      %276 = vmatprep.subr.mxu0 0.0
      %277 = vmatpush1.msra.mxu0 0.0
      %278 = vmatprep.subr.mxu0 0.0
      %279 = vmatpush1.msra.mxu0 0.0
      %280 = vmatprep.subr.mxu0 0.0
      %281 = vmatpush1.msra.mxu0 0.0
      %282 = vmatprep.subr.mxu0 0.0
      %283 = vmatpush1.msra.mxu0 0.0
      %284 = vmatprep.subr.mxu0 0.0
      %285 = vmatpush1.msra.mxu0 0.0
      %286 = vmatprep.subr.mxu0 0.0
      %287 = vmatpush1.msra.mxu0 0.0
      %288 = vmatprep.subr.mxu0 0.0
      %289 = vmatpush1.msra.mxu0 0.0
      %290 = vmatprep.subr.mxu0 0.0
      %291 = vmatpush1.msra.mxu0 0.0
      %292 = vmatprep.subr.mxu0 0.0
      %293 = vmatpush1.msra.mxu0 0.0
      %294 = vmatprep.subr.mxu0 0.0
      %295 = vmatpush1.msra.mxu0 0.0
      %296 = vmatprep.subr.mxu0 0.0
      %297 = vmatpush1.msra.mxu0 0.0
      %298 = vmatprep.subr.mxu0 0.0
      %299 = vmatpush1.msra.mxu0 0.0
      %300 = vmatprep.subr.mxu0 0.0
      %301 = vmatpush1.msra.mxu0 0.0
      %302 = vmatprep.subr.mxu0 0.0
      %303 = vmatpush1.msra.mxu0 0.0
      %304 = vmatprep.subr.mxu0 0.0
      %305 = vmatpush1.msra.mxu0 0.0
      %306 = vmatprep.subr.mxu0 0.0
      %307 = vmatpush1.msra.mxu0 0.0
      %308 = vmatprep.subr.mxu0 0.0
      %309 = vmatpush1.msra.mxu0 0.0
      %310 = vmatprep.subr.mxu0 0.0
      %311 = vmatpush1.msra.mxu0 0.0
      %312 = vmatprep.subr.mxu0 0.0
      %313 = vmatpush1.msra.mxu0 0.0
      %314 = vmatprep.subr.mxu0 0.0
      %315 = vmatpush1.msra.mxu0 0.0
      %316 = vmatprep.subr.mxu0 0.0
      %317 = vmatpush1.msra.mxu0 0.0
      %318 = vmatprep.subr.mxu0 0.0
      %319 = vmatpush1.msra.mxu0 0.0
      %320 = vmatprep.subr.mxu0 0.0
      %321 = vmatpush1.msra.mxu0 0.0
      %322 = vmatprep.subr.mxu0 0.0
      %323 = vmatpush1.msra.mxu0 0.0
      %324 = vmatprep.subr.mxu0 0.0
      %325 = vmatpush1.msra.mxu0 0.0
      %326 = vmatprep.subr.mxu0 0.0
      %327 = vmatpush1.msra.mxu0 0.0
      %328 = vmatprep.subr.mxu0 0.0
      %329 = vmatpush1.msra.mxu0 0.0
      %330 = vmatprep.mubr.f32.mxu0 0.0
      %331 = vmatmul.mubr.f32.gmra.mrb[0].mxu0 %v264
      %v332 = vpop.f32.mrb[0].mxu0
      %v333 = vadd.f32 0.0, %v332
      %v334 = vpop.f32.mrb[0].mxu0
      %335 = vdwg.mxu0
      %v336 = vadd.f32 %v256, %v333
      %337 = vst [vmem:[#allocation2] sm:$0xff] %v336
      // Predicated region
      $region37: #{idefics2_encoder_forward.19} parent=31 // pred_check
        %p338 = pneg %p251
      $region38: #{idefics2_encoder_forward.19} parent=31 // pred_check_branch
        %340 = sbr.rel (%p338) target = $region40
      $region39: #{idefics2_encoder_forward.19} parent=31 // pred_region
        %v341 = vld [vmem:[#allocation2] sm:$0xff]
        %v342 = vld [vmem:[%s243] sm:$0x1]
        %v344 = vlaneseq
        %v345 = vshrl.u32 %v344, 7
        %v346 = vsub.s32 0, %v345
        %v347 = vrot.slane %v342, %v346
        %v349 = vadd.f32 %v341, %v347
        %v350 = vmul.f32 %v349, 0.5
        %v351 = vmul.f32 %v349, 0.044715
        %v352 = vmul.f32 %v351, %v349
        %v353 = vmul.f32 %v352, %v349
        %v354 = vadd.f32 %v349, %v353
        %v355 = vmul.f32 %v354, 0.7978846
        %v356 = vtanh.pop %v355
        %v357 = vadd.f32 %v356, 1.0
        %v358 = vmul.f32 %v350, %v357
        %359 = vst [vmem:[%s250] sm:$0xff] %v358
      $region40: #{idefics2_encoder_forward.19} parent=31 // pred_fallthru
        _
      %p360 = scmp.lt.s32.totalorder %s19, 3
      %s361 = scalar_select %p360, %s19, 3
      %p362 = scmp.lt.s32.totalorder %s20, 0
      %s363 = scalar_select %p362, %s20, 0
      %s364 = sadd.s32 %s363, %s361
      %s365 = smul.addr %s364, 8
      %s366 = scalar_lea.vmem %s3, %s365
      // Predicated region
      $region41: #{idefics2_encoder_forward.19} parent=31 // pred_check
        %p367 = pneg %p135
      $region42: #{idefics2_encoder_forward.19} parent=31 // pred_check_branch
        %369 = sbr.rel (%p367) target = $region44
      $region43: #{idefics2_encoder_forward.19} parent=31 // pred_region
        _
      $region44: #{idefics2_encoder_forward.19} parent=31 // pred_fallthru
        _
    $region32: #{idefics2_encoder_forward.19} parent=5 // pred_fallthru
      _
    %p370 = scmp.le.s32.totalorder 2, %s9
    // Predicated region
    $region45: #{idefics2_encoder_forward.19} parent=5 // pred_check
      %p371 = pneg %p370
    $region46: #{idefics2_encoder_forward.19} parent=5 // pred_check_branch
      %373 = sbr.rel (%p371) target = $region48
    $region47: #{idefics2_encoder_forward.19} parent=5 // pred_region
      %s374 = ssub.s32 %s9, 2
      // Predicated region
      $region49: #{idefics2_encoder_forward.19} parent=47 // pred_check
        %p375 = pneg %p141
      $region50: #{idefics2_encoder_forward.19} parent=47 // pred_check_branch
        %377 = sbr.rel (%p375) target = $region52
      $region51: #{idefics2_encoder_forward.19} parent=47 // pred_region
        %p378 = scmp.lt.s32.totalorder %s22, 3
        %s379 = scalar_select %p378, %s22, 3
        %p380 = scmp.lt.s32.totalorder %s23, 0
        %s381 = scalar_select %p380, %s23, 0
        %s382 = sadd.s32 %s381, %s379
        %s383 = smul.addr %s382, 8
        %s384 = scalar_lea.vmem %s3, %s383
      $region52: #{idefics2_encoder_forward.19} parent=47 // pred_fallthru
        _
    $region48: #{idefics2_encoder_forward.19} parent=5 // pred_fallthru
      _
  $region6: #{idefics2_encoder_forward.19} parent=0 // loop_footer
    %s13 = sadd.s32 1, %s9
  $region7: #{idefics2_encoder_forward.19} parent=0 // loop_footer_branch
    %8 = sbr.rel target = $region3
  $region8: #{idefics2_encoder_forward.19} parent=0 // loop_exit
    _

</llo_original>
